<compile_context>
chip_gen: v7x
topology: tpu7x:2x2x1
jax: 0.10.0
libtpu: 0.0.40
codegen_flags: <defaults>
</compile_context>

<pallas_src>
import math

import jax
import jax.numpy as jnp
from jax.experimental import pallas as pl
from jax.experimental.pallas import tpu as pltpu

# ---- small config consistent with the module's forward -----------------------
BATCH = 2
MAX_WALK_LEN = 7           # walk steps; sequence length after prepending cls = 8
SEQ = MAX_WALK_LEN + 1
STEP_FEATURES = 4
EMSIZE = 32
NHEAD = 4
DH = EMSIZE // NHEAD
NHID = 64
NLAYERS = 2
NCLASSES = 5
LN_EPS = 1e-5              # PyTorch LayerNorm default
LANES = 128                # parameter-slab / output lane padding


# ------------------------- packed parameter layout -----------------------------
def _round8(n):
    return (n + 7) & ~7


def _param_layout():
    entries = [
        ("emb_w", STEP_FEATURES, EMSIZE),
        ("emb_b", 1, EMSIZE),
        ("cls", 1, EMSIZE),
        ("pe", SEQ, EMSIZE),
    ]
    for l in range(NLAYERS):
        entries += [
            (f"l{l}_wqkv", EMSIZE, 3 * EMSIZE),
            (f"l{l}_bqkv", 1, 3 * EMSIZE),
            (f"l{l}_wo", EMSIZE, EMSIZE),
            (f"l{l}_bo", 1, EMSIZE),
            (f"l{l}_w1", EMSIZE, NHID),
            (f"l{l}_b1", 1, NHID),
            (f"l{l}_w2", NHID, EMSIZE),
            (f"l{l}_b2", 1, EMSIZE),
            (f"l{l}_g1", 1, EMSIZE),
            (f"l{l}_beta1", 1, EMSIZE),
            (f"l{l}_g2", 1, EMSIZE),
            (f"l{l}_beta2", 1, EMSIZE),
        ]
    entries += [("cls_w", EMSIZE, NCLASSES), ("cls_b", 1, NCLASSES)]

    layout, off = {}, 0
    for name, rows, cols in entries:
        assert cols <= LANES
        layout[name] = (off, rows, cols)
        off += _round8(rows)            # every param starts sublane-aligned
    return layout, off


PARAM_LAYOUT, PARAM_ROWS = _param_layout()


def pack_params(p):
    """Pack the dict of parameter arrays into one [PARAM_ROWS, 128] f32 slab."""
    slab = jnp.zeros((PARAM_ROWS, LANES), jnp.float32)
    for name, arr in p.items():
        off, rows, cols = PARAM_LAYOUT[name]
        slab = slab.at[off:off + rows, :cols].set(arr.reshape(rows, cols))
    return slab


def _p(p_ref, name, full_lanes=False):
    """Load one parameter from the packed slab with static offsets."""
    off, rows, cols = PARAM_LAYOUT[name]
    if full_lanes:
        return p_ref[off:off + rows, :]          # zero-padded to 128 lanes
    return p_ref[off:off + rows, 0:cols]


def _layer_norm(x, g, b):
    mu = jnp.mean(x, axis=-1, keepdims=True)
    var = jnp.mean(jnp.square(x - mu), axis=-1, keepdims=True)
    return (x - mu) * jax.lax.rsqrt(var + LN_EPS) * g + b


# --------------------------------- kernel --------------------------------------
def fused_kernel(x_ref, p_ref, o_ref):
    """Single-invocation forward pass.

    x_ref : (B*S, F) walk features; row 0 of each sample is a zero pad row
            (placeholder for the cls position — corrected below).
    p_ref : (PARAM_ROWS, 128) packed parameter slab (see PARAM_LAYOUT).
    o_ref : (B*S, 128) lane-dense logits slab; cols [0, NCLASSES) are valid.
    """
    sqrt_e = math.sqrt(EMSIZE)
    scale = 1.0 / math.sqrt(DH)

    emb_w = _p(p_ref, "emb_w")            # [F, E]
    emb_b = _p(p_ref, "emb_b")            # [1, E]
    cls_tok = _p(p_ref, "cls")            # [1, E]
    pe = _p(p_ref, "pe")                  # [S, E]

    # ---- WalkEmbedding + learnable positional encoding -> h [B*S, E] ----------
    # One matmul over all rows (cls rows were zero-padded in the wrapper, so
    # they come out as emb_b * sqrt(E); subtract that and add the cls token via
    # a VPU select -> no sub-tile scratch stores).
    xp = x_ref[...]                                                   # [B*S, F]
    y = (jnp.dot(xp, emb_w, preferred_element_type=jnp.float32) + emb_b) * sqrt_e
    pe_all = jnp.concatenate([pe] * BATCH, axis=0)                    # [B*S, E]
    row = jax.lax.broadcasted_iota(jnp.int32, (BATCH * SEQ, EMSIZE), 0)
    is_cls = (row % SEQ) == 0
    cls_fix = jnp.broadcast_to(cls_tok - emb_b * sqrt_e, (BATCH * SEQ, EMSIZE))
    h = y + pe_all + jnp.where(is_cls, cls_fix, 0.0)                  # [B*S, E]

    # ---- NLAYERS x post-LN TransformerEncoderLayer (statically unrolled) ------
    for l in range(NLAYERS):
        wqkv = _p(p_ref, f"l{l}_wqkv"); bqkv = _p(p_ref, f"l{l}_bqkv")
        wo = _p(p_ref, f"l{l}_wo");     bo = _p(p_ref, f"l{l}_bo")
        w1 = _p(p_ref, f"l{l}_w1");     b1 = _p(p_ref, f"l{l}_b1")
        w2 = _p(p_ref, f"l{l}_w2");     b2 = _p(p_ref, f"l{l}_b2")
        g1 = _p(p_ref, f"l{l}_g1");     beta1 = _p(p_ref, f"l{l}_beta1")
        g2 = _p(p_ref, f"l{l}_g2");     beta2 = _p(p_ref, f"l{l}_beta2")

        qkv = jnp.dot(h, wqkv, preferred_element_type=jnp.float32) + bqkv
        q = qkv[:, 0:EMSIZE]
        k = qkv[:, EMSIZE:2 * EMSIZE]
        v = qkv[:, 2 * EMSIZE:3 * EMSIZE]

        # Self-attention: heads statically unrolled, all values (no scratch).
        # Single-batch-dim einsums only (robust Mosaic lowering); head outputs
        # are concatenated along lanes.
        head_outs = []
        for hd in range(NHEAD):
            sl = slice(hd * DH, (hd + 1) * DH)
            qh = q[:, sl].reshape(BATCH, SEQ, DH)
            kh = k[:, sl].reshape(BATCH, SEQ, DH)
            vh = v[:, sl].reshape(BATCH, SEQ, DH)
            s = jnp.einsum('bqd,bkd->bqk', qh, kh,
                           preferred_element_type=jnp.float32) * scale
            s = s - jnp.max(s, axis=-1, keepdims=True)
            p = jnp.exp(s)
            # EUP reciprocal: tiny deviation from exact softmax (inference OK).
            p = p * pl.reciprocal(jnp.sum(p, axis=-1, keepdims=True), approx=True)
            oh = jnp.einsum('bqk,bkd->bqd', p, vh,
                            preferred_element_type=jnp.float32)
            head_outs.append(oh.reshape(BATCH * SEQ, DH))
        attn = jnp.concatenate(head_outs, axis=-1)                    # [B*S, E]
        attn = jnp.dot(attn, wo, preferred_element_type=jnp.float32) + bo

        # post-norm: h1 = norm1(h + attn); h = norm2(h1 + ffn(h1))
        h1 = _layer_norm(h + attn, g1, beta1)
        ff = jnp.dot(h1, w1, preferred_element_type=jnp.float32) + b1
        ff = jnp.maximum(ff, 0.0)                                     # relu
        ff = jnp.dot(ff, w2, preferred_element_type=jnp.float32) + b2
        h = _layer_norm(h1 + ff, g2, beta2)

    # ---- classifier: lane-dense [B*S, 128] slab (cls_w/b zero-padded) ---------
    clsw = _p(p_ref, "cls_w", full_lanes=True)                        # [E, 128]
    clsb = _p(p_ref, "cls_b", full_lanes=True)                        # [1, 128]
    o_ref[...] = jnp.dot(h, clsw, preferred_element_type=jnp.float32) + clsb


# --------------------------------- forward -------------------------------------
@jax.jit
def forward(x, param_slab):
    # Prepend a zero "step" per sample (cls position flows through the same
    # embedding matmul; corrected exactly inside the kernel). Pure layout
    # plumbing on a [2,7,4] array.
    x_pad = jnp.pad(x, ((0, 0), (1, 0), (0, 0))).reshape(BATCH * SEQ, STEP_FEATURES)

    vmem = pltpu.MemorySpace.VMEM
    out = pl.pallas_call(
        fused_kernel,
        out_shape=jax.ShapeDtypeStruct((BATCH * SEQ, LANES), jnp.float32),
        in_specs=[pl.BlockSpec(memory_space=vmem),
                  pl.BlockSpec(memory_space=vmem)],
        out_specs=pl.BlockSpec(memory_space=vmem),
    )(x_pad, param_slab)
    # TODO(synk): on v7x (2 TensorCores) a grid=(BATCH,) "parallel" split of the
    # batch could give up to ~2x; omitted since it only adds overhead on v5e/v6e.
    return out[:, :NCLASSES].reshape(BATCH, SEQ, NCLASSES)


# ------------------------------ parameter init ----------------------------------
def _xavier(key, fan_in, fan_out):
    # stored pre-transposed as [in_features, out_features]
    bound = math.sqrt(6.0 / (fan_in + fan_out))
    return jax.random.uniform(key, (fan_in, fan_out), jnp.float32, -bound, bound)


def init_params(key):
    n_keys = 6 + NLAYERS * 6
    keys = iter(jax.random.split(key, n_keys))
    p = {
        "emb_w": _xavier(next(keys), STEP_FEATURES, EMSIZE),
        "emb_b": jax.random.uniform(next(keys), (1, EMSIZE), jnp.float32, -0.05, 0.05),
        "cls":   jax.random.normal(next(keys), (1, EMSIZE), jnp.float32),
        "pe":    jax.random.uniform(next(keys), (SEQ, EMSIZE), jnp.float32, -0.02, 0.02),
        "cls_w": _xavier(next(keys), EMSIZE, NCLASSES),
        "cls_b": jax.random.uniform(next(keys), (1, NCLASSES), jnp.float32, -0.05, 0.05),
    }
    for l in range(NLAYERS):
        p[f"l{l}_wqkv"] = _xavier(next(keys), EMSIZE, 3 * EMSIZE)        # in_proj W^T
        p[f"l{l}_bqkv"] = jnp.zeros((1, 3 * EMSIZE), jnp.float32)
        p[f"l{l}_wo"] = _xavier(next(keys), EMSIZE, EMSIZE)              # out_proj W^T
        p[f"l{l}_bo"] = jnp.zeros((1, EMSIZE), jnp.float32)
        p[f"l{l}_w1"] = _xavier(next(keys), EMSIZE, NHID)                # linear1 W^T
        p[f"l{l}_b1"] = jax.random.uniform(next(keys), (1, NHID), jnp.float32, -0.05, 0.05)
        p[f"l{l}_w2"] = _xavier(next(keys), NHID, EMSIZE)                # linear2 W^T
        p[f"l{l}_b2"] = jax.random.uniform(next(keys), (1, EMSIZE), jnp.float32, -0.05, 0.05)
        p[f"l{l}_g1"] = jnp.ones((1, EMSIZE), jnp.float32)               # norm1.weight
        p[f"l{l}_beta1"] = jnp.zeros((1, EMSIZE), jnp.float32)           # norm1.bias
        p[f"l{l}_g2"] = jnp.ones((1, EMSIZE), jnp.float32)               # norm2.weight
        p[f"l{l}_beta2"] = jnp.zeros((1, EMSIZE), jnp.float32)           # norm2.bias
    return pack_params(p)


if __name__ == "__main__":
    key = jax.random.PRNGKey(0)
    k_x, k_p = jax.random.split(key)
    x = jax.random.normal(k_x, (BATCH, MAX_WALK_LEN, STEP_FEATURES), jnp.float32)
    param_slab = init_params(k_p)

    out = forward(x, param_slab)
    out = jax.block_until_ready(out)

    assert out.shape == (BATCH, SEQ, NCLASSES), out.shape
    assert bool(jnp.all(jnp.isfinite(out)))
    print("KERNEL_OK")
</pallas_src>

<mosaic_0001>
module attributes {stable_mosaic.version = 11 : i64} {
  func.func @fused_kernel(%arg0: memref<16x4xf32, #tpu.memory_space<vmem>>, %arg1: memref<520x128xf32, #tpu.memory_space<vmem>>, %arg2: memref<16x128xf32, #tpu.memory_space<vmem>>) attributes {dimension_semantics = [], scalar_prefetch = 0 : i64, scratch_operands = 0 : i64, tpu.core_type = #tpu.core_type<tc>} {
    %c0 = arith.constant 0 : index
    %c0_0 = arith.constant 0 : index
    %0 = vector.load %arg1[%c0, %c0_0] : memref<520x128xf32, #tpu.memory_space<vmem>>, vector<4x32xf32>
    %c8 = arith.constant 8 : index
    %c0_1 = arith.constant 0 : index
    %1 = vector.load %arg1[%c8, %c0_1] : memref<520x128xf32, #tpu.memory_space<vmem>>, vector<1x32xf32>
    %c16 = arith.constant 16 : index
    %c0_2 = arith.constant 0 : index
    %2 = vector.load %arg1[%c16, %c0_2] : memref<520x128xf32, #tpu.memory_space<vmem>>, vector<1x32xf32>
    %c24 = arith.constant 24 : index
    %c0_3 = arith.constant 0 : index
    %3 = vector.load %arg1[%c24, %c0_3] : memref<520x128xf32, #tpu.memory_space<vmem>>, vector<8x32xf32>
    %c0_4 = arith.constant 0 : index
    %c0_5 = arith.constant 0 : index
    %4 = vector.load %arg0[%c0_4, %c0_5] : memref<16x4xf32, #tpu.memory_space<vmem>>, vector<16x4xf32>
    %cst = arith.constant dense<0.000000e+00> : vector<16x32xf32>
    %5 = tpu.matmul %4, %0, %cst {dimension_numbers = #tpu.dot_dimension_numbers<[1], [0], [0], [1], [0, 0, 1, 1], [], []>} : vector<16x4xf32>, vector<4x32xf32>, vector<16x32xf32> -> vector<16x32xf32>
    %6 = vector.broadcast %1 : vector<1x32xf32> to vector<16x32xf32>
    %7 = arith.addf %5, %6 : vector<16x32xf32>
    %cst_6 = arith.constant 5.65685415 : f32
    %8 = vector.broadcast %cst_6 : f32 to vector<16x32xf32>
    %9 = arith.mulf %7, %8 : vector<16x32xf32>
    %10 = tpu.concatenate %3, %3 in 0 : vector<8x32xf32>, vector<8x32xf32> -> vector<16x32xf32>
    %11 = tpu.iota {dimensions = array<i32: 0>} : vector<16x32xi32>
    %c8_i32 = arith.constant 8 : i32
    %c0_i32 = arith.constant 0 : i32
    %12 = arith.cmpi eq, %c8_i32, %c0_i32 : i32
    %c1_i32 = arith.constant 1 : i32
    %13 = arith.select %12, %c1_i32, %c8_i32 : i32
    %14 = vector.broadcast %13 : i32 to vector<16x32xi32>
    %15 = arith.remsi %11, %14 : vector<16x32xi32>
    %c0_i32_7 = arith.constant 0 : i32
    %16 = vector.broadcast %c0_i32_7 : i32 to vector<16x32xi32>
    %17 = arith.cmpi ne, %15, %16 : vector<16x32xi32>
    %c0_i32_8 = arith.constant 0 : i32
    %18 = vector.broadcast %c0_i32_8 : i32 to vector<16x32xi32>
    %19 = arith.cmpi slt, %15, %18 : vector<16x32xi32>
    %c0_i32_9 = arith.constant 0 : i32
    %20 = arith.cmpi slt, %13, %c0_i32_9 : i32
    %21 = vector.broadcast %20 : i1 to vector<16x32xi1>
    %22 = vector.broadcast %21 : vector<16x32xi1> to vector<16x32xi1>
    %23 = arith.xori %19, %22 : vector<16x32xi1>
    %24 = arith.andi %23, %17 : vector<16x32xi1>
    %25 = vector.broadcast %13 : i32 to vector<16x32xi32>
    %26 = arith.addi %15, %25 : vector<16x32xi32>
    %27 = arith.select %24, %26, %15 : vector<16x32xi1>, vector<16x32xi32>
    %c0_i32_10 = arith.constant 0 : i32
    %28 = vector.broadcast %c0_i32_10 : i32 to vector<16x32xi32>
    %29 = arith.cmpi eq, %27, %28 : vector<16x32xi32>
    %cst_11 = arith.constant 5.65685415 : f32
    %30 = vector.broadcast %cst_11 : f32 to vector<1x32xf32>
    %31 = arith.mulf %1, %30 : vector<1x32xf32>
    %32 = arith.subf %2, %31 : vector<1x32xf32>
    %33 = vector.shape_cast %32 : vector<1x32xf32> to vector<1x32xf32>
    %34 = vector.broadcast %33 : vector<1x32xf32> to vector<16x32xf32>
    %35 = arith.addf %9, %10 : vector<16x32xf32>
    %cst_12 = arith.constant 0.000000e+00 : f32
    %36 = vector.broadcast %cst_12 : f32 to vector<16x32xf32>
    %37 = arith.select %29, %34, %36 : vector<16x32xi1>, vector<16x32xf32>
    %38 = arith.addf %35, %37 : vector<16x32xf32>
    %c32 = arith.constant 32 : index
    %c0_13 = arith.constant 0 : index
    %39 = vector.load %arg1[%c32, %c0_13] : memref<520x128xf32, #tpu.memory_space<vmem>>, vector<32x96xf32>
    %c64 = arith.constant 64 : index
    %c0_14 = arith.constant 0 : index
    %40 = vector.load %arg1[%c64, %c0_14] : memref<520x128xf32, #tpu.memory_space<vmem>>, vector<1x96xf32>
    %c72 = arith.constant 72 : index
    %c0_15 = arith.constant 0 : index
    %41 = vector.load %arg1[%c72, %c0_15] : memref<520x128xf32, #tpu.memory_space<vmem>>, vector<32x32xf32>
    %c104 = arith.constant 104 : index
    %c0_16 = arith.constant 0 : index
    %42 = vector.load %arg1[%c104, %c0_16] : memref<520x128xf32, #tpu.memory_space<vmem>>, vector<1x32xf32>
    %c112 = arith.constant 112 : index
    %c0_17 = arith.constant 0 : index
    %43 = vector.load %arg1[%c112, %c0_17] : memref<520x128xf32, #tpu.memory_space<vmem>>, vector<32x64xf32>
    %c144 = arith.constant 144 : index
    %c0_18 = arith.constant 0 : index
    %44 = vector.load %arg1[%c144, %c0_18] : memref<520x128xf32, #tpu.memory_space<vmem>>, vector<1x64xf32>
    %c152 = arith.constant 152 : index
    %c0_19 = arith.constant 0 : index
    %45 = vector.load %arg1[%c152, %c0_19] : memref<520x128xf32, #tpu.memory_space<vmem>>, vector<64x32xf32>
    %c216 = arith.constant 216 : index
    %c0_20 = arith.constant 0 : index
    %46 = vector.load %arg1[%c216, %c0_20] : memref<520x128xf32, #tpu.memory_space<vmem>>, vector<1x32xf32>
    %c224 = arith.constant 224 : index
    %c0_21 = arith.constant 0 : index
    %47 = vector.load %arg1[%c224, %c0_21] : memref<520x128xf32, #tpu.memory_space<vmem>>, vector<1x32xf32>
    %c232 = arith.constant 232 : index
    %c0_22 = arith.constant 0 : index
    %48 = vector.load %arg1[%c232, %c0_22] : memref<520x128xf32, #tpu.memory_space<vmem>>, vector<1x32xf32>
    %c240 = arith.constant 240 : index
    %c0_23 = arith.constant 0 : index
    %49 = vector.load %arg1[%c240, %c0_23] : memref<520x128xf32, #tpu.memory_space<vmem>>, vector<1x32xf32>
    %c248 = arith.constant 248 : index
    %c0_24 = arith.constant 0 : index
    %50 = vector.load %arg1[%c248, %c0_24] : memref<520x128xf32, #tpu.memory_space<vmem>>, vector<1x32xf32>
    %cst_25 = arith.constant dense<0.000000e+00> : vector<16x96xf32>
    %51 = tpu.matmul %38, %39, %cst_25 {dimension_numbers = #tpu.dot_dimension_numbers<[1], [0], [0], [1], [0, 0, 1, 1], [], []>} : vector<16x32xf32>, vector<32x96xf32>, vector<16x96xf32> -> vector<16x96xf32>
    %52 = vector.broadcast %40 : vector<1x96xf32> to vector<16x96xf32>
    %53 = arith.addf %51, %52 : vector<16x96xf32>
    %54 = vector.extract_strided_slice %53 {offsets = [0, 0], sizes = [16, 32], strides = [1, 1]} : vector<16x96xf32> to vector<16x32xf32>
    %55 = vector.extract_strided_slice %53 {offsets = [0, 32], sizes = [16, 32], strides = [1, 1]} : vector<16x96xf32> to vector<16x32xf32>
    %56 = vector.extract_strided_slice %53 {offsets = [0, 64], sizes = [16, 32], strides = [1, 1]} : vector<16x96xf32> to vector<16x32xf32>
    %57 = vector.extract_strided_slice %54 {offsets = [0, 0], sizes = [16, 8], strides = [1, 1]} : vector<16x32xf32> to vector<16x8xf32>
    %58 = vector.shape_cast %57 : vector<16x8xf32> to vector<2x8x8xf32>
    %59 = vector.extract_strided_slice %55 {offsets = [0, 0], sizes = [16, 8], strides = [1, 1]} : vector<16x32xf32> to vector<16x8xf32>
    %60 = vector.shape_cast %59 : vector<16x8xf32> to vector<2x8x8xf32>
    %61 = vector.extract_strided_slice %56 {offsets = [0, 0], sizes = [16, 8], strides = [1, 1]} : vector<16x32xf32> to vector<16x8xf32>
    %62 = vector.shape_cast %61 : vector<16x8xf32> to vector<2x8x8xf32>
    "tpu.trace_start"() <{level = 10 : i32, message = "bqd,bkd->bqk"}> : () -> ()
    %cst_26 = arith.constant dense<0.000000e+00> : vector<2x8x8xf32>
    %63 = tpu.matmul %58, %60, %cst_26 {dimension_numbers = #tpu.dot_dimension_numbers<[2], [2], [1], [1], [0, 0, 0, 1, 1, 1], [0], [0]>} : vector<2x8x8xf32>, vector<2x8x8xf32>, vector<2x8x8xf32> -> vector<2x8x8xf32>
    "tpu.trace_stop"() : () -> ()
    %cst_27 = arith.constant 0.353553385 : f32
    %64 = vector.broadcast %cst_27 : f32 to vector<2x8x8xf32>
    %65 = arith.mulf %63, %64 : vector<2x8x8xf32>
    %cst_28 = arith.constant dense<0xFF800000> : vector<2x8xf32>
    %66 = vector.multi_reduction <maximumf>, %65, %cst_28 [2] : vector<2x8x8xf32> to vector<2x8xf32>
    %67 = vector.shape_cast %66 : vector<2x8xf32> to vector<2x8x1xf32>
    %68 = vector.broadcast %67 : vector<2x8x1xf32> to vector<2x8x8xf32>
    %69 = arith.subf %65, %68 : vector<2x8x8xf32>
    %70 = math.exp %69 : vector<2x8x8xf32>
    %cst_29 = arith.constant dense<0.000000e+00> : vector<2x8xf32>
    %71 = vector.multi_reduction <add>, %70, %cst_29 [2] : vector<2x8x8xf32> to vector<2x8xf32>
    %72 = vector.shape_cast %71 : vector<2x8xf32> to vector<2x8x1xf32>
    %73 = tpu.reciprocal %72 {approx = true} : vector<2x8x1xf32> -> vector<2x8x1xf32>
    %74 = vector.broadcast %73 : vector<2x8x1xf32> to vector<2x8x8xf32>
    %75 = arith.mulf %70, %74 : vector<2x8x8xf32>
    "tpu.trace_start"() <{level = 10 : i32, message = "bqk,bkd->bqd"}> : () -> ()
    %cst_30 = arith.constant dense<0.000000e+00> : vector<2x8x8xf32>
    %76 = tpu.matmul %75, %62, %cst_30 {dimension_numbers = #tpu.dot_dimension_numbers<[2], [1], [1], [2], [0, 0, 0, 1, 1, 2], [0], [0]>} : vector<2x8x8xf32>, vector<2x8x8xf32>, vector<2x8x8xf32> -> vector<2x8x8xf32>
    "tpu.trace_stop"() : () -> ()
    %77 = vector.shape_cast %76 : vector<2x8x8xf32> to vector<16x8xf32>
    %78 = vector.extract_strided_slice %54 {offsets = [0, 8], sizes = [16, 8], strides = [1, 1]} : vector<16x32xf32> to vector<16x8xf32>
    %79 = vector.shape_cast %78 : vector<16x8xf32> to vector<2x8x8xf32>
    %80 = vector.extract_strided_slice %55 {offsets = [0, 8], sizes = [16, 8], strides = [1, 1]} : vector<16x32xf32> to vector<16x8xf32>
    %81 = vector.shape_cast %80 : vector<16x8xf32> to vector<2x8x8xf32>
    %82 = vector.extract_strided_slice %56 {offsets = [0, 8], sizes = [16, 8], strides = [1, 1]} : vector<16x32xf32> to vector<16x8xf32>
    %83 = vector.shape_cast %82 : vector<16x8xf32> to vector<2x8x8xf32>
    "tpu.trace_start"() <{level = 10 : i32, message = "bqd,bkd->bqk"}> : () -> ()
    %cst_31 = arith.constant dense<0.000000e+00> : vector<2x8x8xf32>
    %84 = tpu.matmul %79, %81, %cst_31 {dimension_numbers = #tpu.dot_dimension_numbers<[2], [2], [1], [1], [0, 0, 0, 1, 1, 1], [0], [0]>} : vector<2x8x8xf32>, vector<2x8x8xf32>, vector<2x8x8xf32> -> vector<2x8x8xf32>
    "tpu.trace_stop"() : () -> ()
    %cst_32 = arith.constant 0.353553385 : f32
    %85 = vector.broadcast %cst_32 : f32 to vector<2x8x8xf32>
    %86 = arith.mulf %84, %85 : vector<2x8x8xf32>
    %cst_33 = arith.constant dense<0xFF800000> : vector<2x8xf32>
    %87 = vector.multi_reduction <maximumf>, %86, %cst_33 [2] : vector<2x8x8xf32> to vector<2x8xf32>
    %88 = vector.shape_cast %87 : vector<2x8xf32> to vector<2x8x1xf32>
    %89 = vector.broadcast %88 : vector<2x8x1xf32> to vector<2x8x8xf32>
    %90 = arith.subf %86, %89 : vector<2x8x8xf32>
    %91 = math.exp %90 : vector<2x8x8xf32>
    %cst_34 = arith.constant dense<0.000000e+00> : vector<2x8xf32>
    %92 = vector.multi_reduction <add>, %91, %cst_34 [2] : vector<2x8x8xf32> to vector<2x8xf32>
    %93 = vector.shape_cast %92 : vector<2x8xf32> to vector<2x8x1xf32>
    %94 = tpu.reciprocal %93 {approx = true} : vector<2x8x1xf32> -> vector<2x8x1xf32>
    %95 = vector.broadcast %94 : vector<2x8x1xf32> to vector<2x8x8xf32>
    %96 = arith.mulf %91, %95 : vector<2x8x8xf32>
    "tpu.trace_start"() <{level = 10 : i32, message = "bqk,bkd->bqd"}> : () -> ()
    %cst_35 = arith.constant dense<0.000000e+00> : vector<2x8x8xf32>
    %97 = tpu.matmul %96, %83, %cst_35 {dimension_numbers = #tpu.dot_dimension_numbers<[2], [1], [1], [2], [0, 0, 0, 1, 1, 2], [0], [0]>} : vector<2x8x8xf32>, vector<2x8x8xf32>, vector<2x8x8xf32> -> vector<2x8x8xf32>
    "tpu.trace_stop"() : () -> ()
    %98 = vector.shape_cast %97 : vector<2x8x8xf32> to vector<16x8xf32>
    %99 = vector.extract_strided_slice %54 {offsets = [0, 16], sizes = [16, 8], strides = [1, 1]} : vector<16x32xf32> to vector<16x8xf32>
    %100 = vector.shape_cast %99 : vector<16x8xf32> to vector<2x8x8xf32>
    %101 = vector.extract_strided_slice %55 {offsets = [0, 16], sizes = [16, 8], strides = [1, 1]} : vector<16x32xf32> to vector<16x8xf32>
    %102 = vector.shape_cast %101 : vector<16x8xf32> to vector<2x8x8xf32>
    %103 = vector.extract_strided_slice %56 {offsets = [0, 16], sizes = [16, 8], strides = [1, 1]} : vector<16x32xf32> to vector<16x8xf32>
    %104 = vector.shape_cast %103 : vector<16x8xf32> to vector<2x8x8xf32>
    "tpu.trace_start"() <{level = 10 : i32, message = "bqd,bkd->bqk"}> : () -> ()
    %cst_36 = arith.constant dense<0.000000e+00> : vector<2x8x8xf32>
    %105 = tpu.matmul %100, %102, %cst_36 {dimension_numbers = #tpu.dot_dimension_numbers<[2], [2], [1], [1], [0, 0, 0, 1, 1, 1], [0], [0]>} : vector<2x8x8xf32>, vector<2x8x8xf32>, vector<2x8x8xf32> -> vector<2x8x8xf32>
    "tpu.trace_stop"() : () -> ()
    %cst_37 = arith.constant 0.353553385 : f32
    %106 = vector.broadcast %cst_37 : f32 to vector<2x8x8xf32>
    %107 = arith.mulf %105, %106 : vector<2x8x8xf32>
    %cst_38 = arith.constant dense<0xFF800000> : vector<2x8xf32>
    %108 = vector.multi_reduction <maximumf>, %107, %cst_38 [2] : vector<2x8x8xf32> to vector<2x8xf32>
    %109 = vector.shape_cast %108 : vector<2x8xf32> to vector<2x8x1xf32>
    %110 = vector.broadcast %109 : vector<2x8x1xf32> to vector<2x8x8xf32>
    %111 = arith.subf %107, %110 : vector<2x8x8xf32>
    %112 = math.exp %111 : vector<2x8x8xf32>
    %cst_39 = arith.constant dense<0.000000e+00> : vector<2x8xf32>
    %113 = vector.multi_reduction <add>, %112, %cst_39 [2] : vector<2x8x8xf32> to vector<2x8xf32>
    %114 = vector.shape_cast %113 : vector<2x8xf32> to vector<2x8x1xf32>
    %115 = tpu.reciprocal %114 {approx = true} : vector<2x8x1xf32> -> vector<2x8x1xf32>
    %116 = vector.broadcast %115 : vector<2x8x1xf32> to vector<2x8x8xf32>
    %117 = arith.mulf %112, %116 : vector<2x8x8xf32>
    "tpu.trace_start"() <{level = 10 : i32, message = "bqk,bkd->bqd"}> : () -> ()
    %cst_40 = arith.constant dense<0.000000e+00> : vector<2x8x8xf32>
    %118 = tpu.matmul %117, %104, %cst_40 {dimension_numbers = #tpu.dot_dimension_numbers<[2], [1], [1], [2], [0, 0, 0, 1, 1, 2], [0], [0]>} : vector<2x8x8xf32>, vector<2x8x8xf32>, vector<2x8x8xf32> -> vector<2x8x8xf32>
    "tpu.trace_stop"() : () -> ()
    %119 = vector.shape_cast %118 : vector<2x8x8xf32> to vector<16x8xf32>
    %120 = vector.extract_strided_slice %54 {offsets = [0, 24], sizes = [16, 8], strides = [1, 1]} : vector<16x32xf32> to vector<16x8xf32>
    %121 = vector.shape_cast %120 : vector<16x8xf32> to vector<2x8x8xf32>
    %122 = vector.extract_strided_slice %55 {offsets = [0, 24], sizes = [16, 8], strides = [1, 1]} : vector<16x32xf32> to vector<16x8xf32>
    %123 = vector.shape_cast %122 : vector<16x8xf32> to vector<2x8x8xf32>
    %124 = vector.extract_strided_slice %56 {offsets = [0, 24], sizes = [16, 8], strides = [1, 1]} : vector<16x32xf32> to vector<16x8xf32>
    %125 = vector.shape_cast %124 : vector<16x8xf32> to vector<2x8x8xf32>
    "tpu.trace_start"() <{level = 10 : i32, message = "bqd,bkd->bqk"}> : () -> ()
    %cst_41 = arith.constant dense<0.000000e+00> : vector<2x8x8xf32>
    %126 = tpu.matmul %121, %123, %cst_41 {dimension_numbers = #tpu.dot_dimension_numbers<[2], [2], [1], [1], [0, 0, 0, 1, 1, 1], [0], [0]>} : vector<2x8x8xf32>, vector<2x8x8xf32>, vector<2x8x8xf32> -> vector<2x8x8xf32>
    "tpu.trace_stop"() : () -> ()
    %cst_42 = arith.constant 0.353553385 : f32
    %127 = vector.broadcast %cst_42 : f32 to vector<2x8x8xf32>
    %128 = arith.mulf %126, %127 : vector<2x8x8xf32>
    %cst_43 = arith.constant dense<0xFF800000> : vector<2x8xf32>
    %129 = vector.multi_reduction <maximumf>, %128, %cst_43 [2] : vector<2x8x8xf32> to vector<2x8xf32>
    %130 = vector.shape_cast %129 : vector<2x8xf32> to vector<2x8x1xf32>
    %131 = vector.broadcast %130 : vector<2x8x1xf32> to vector<2x8x8xf32>
    %132 = arith.subf %128, %131 : vector<2x8x8xf32>
    %133 = math.exp %132 : vector<2x8x8xf32>
    %cst_44 = arith.constant dense<0.000000e+00> : vector<2x8xf32>
    %134 = vector.multi_reduction <add>, %133, %cst_44 [2] : vector<2x8x8xf32> to vector<2x8xf32>
    %135 = vector.shape_cast %134 : vector<2x8xf32> to vector<2x8x1xf32>
    %136 = tpu.reciprocal %135 {approx = true} : vector<2x8x1xf32> -> vector<2x8x1xf32>
    %137 = vector.broadcast %136 : vector<2x8x1xf32> to vector<2x8x8xf32>
    %138 = arith.mulf %133, %137 : vector<2x8x8xf32>
    "tpu.trace_start"() <{level = 10 : i32, message = "bqk,bkd->bqd"}> : () -> ()
    %cst_45 = arith.constant dense<0.000000e+00> : vector<2x8x8xf32>
    %139 = tpu.matmul %138, %125, %cst_45 {dimension_numbers = #tpu.dot_dimension_numbers<[2], [1], [1], [2], [0, 0, 0, 1, 1, 2], [0], [0]>} : vector<2x8x8xf32>, vector<2x8x8xf32>, vector<2x8x8xf32> -> vector<2x8x8xf32>
    "tpu.trace_stop"() : () -> ()
    %140 = vector.shape_cast %139 : vector<2x8x8xf32> to vector<16x8xf32>
    %141 = tpu.concatenate %77, %98, %119, %140 in 1 : vector<16x8xf32>, vector<16x8xf32>, vector<16x8xf32>, vector<16x8xf32> -> vector<16x32xf32>
    %cst_46 = arith.constant dense<0.000000e+00> : vector<16x32xf32>
    %142 = tpu.matmul %141, %41, %cst_46 {dimension_numbers = #tpu.dot_dimension_numbers<[1], [0], [0], [1], [0, 0, 1, 1], [], []>} : vector<16x32xf32>, vector<32x32xf32>, vector<16x32xf32> -> vector<16x32xf32>
    %143 = vector.broadcast %42 : vector<1x32xf32> to vector<16x32xf32>
    %144 = arith.addf %142, %143 : vector<16x32xf32>
    %145 = arith.addf %38, %144 : vector<16x32xf32>
    %cst_47 = arith.constant dense<0.000000e+00> : vector<16xf32>
    %146 = vector.multi_reduction <add>, %145, %cst_47 [1] : vector<16x32xf32> to vector<16xf32>
    %147 = vector.shape_cast %146 : vector<16xf32> to vector<16x1xf32>
    %cst_48 = arith.constant 3.200000e+01 : f32
    %148 = vector.broadcast %cst_48 : f32 to vector<16x1xf32>
    %149 = arith.divf %147, %148 : vector<16x1xf32>
    %150 = vector.broadcast %149 : vector<16x1xf32> to vector<16x32xf32>
    %151 = arith.subf %145, %150 : vector<16x32xf32>
    %152 = arith.mulf %151, %151 : vector<16x32xf32>
    %cst_49 = arith.constant dense<0.000000e+00> : vector<16xf32>
    %153 = vector.multi_reduction <add>, %152, %cst_49 [1] : vector<16x32xf32> to vector<16xf32>
    %154 = vector.shape_cast %153 : vector<16xf32> to vector<16x1xf32>
    %cst_50 = arith.constant 3.200000e+01 : f32
    %155 = vector.broadcast %cst_50 : f32 to vector<16x1xf32>
    %156 = arith.divf %154, %155 : vector<16x1xf32>
    %157 = vector.broadcast %149 : vector<16x1xf32> to vector<16x32xf32>
    %158 = arith.subf %145, %157 : vector<16x32xf32>
    %cst_51 = arith.constant 9.99999974E-6 : f32
    %159 = vector.broadcast %cst_51 : f32 to vector<16x1xf32>
    %160 = arith.addf %156, %159 : vector<16x1xf32>
    %161 = math.rsqrt %160 : vector<16x1xf32>
    %162 = vector.broadcast %161 : vector<16x1xf32> to vector<16x32xf32>
    %163 = arith.mulf %158, %162 : vector<16x32xf32>
    %164 = vector.broadcast %47 : vector<1x32xf32> to vector<16x32xf32>
    %165 = arith.mulf %163, %164 : vector<16x32xf32>
    %166 = vector.broadcast %48 : vector<1x32xf32> to vector<16x32xf32>
    %167 = arith.addf %165, %166 : vector<16x32xf32>
    %cst_52 = arith.constant dense<0.000000e+00> : vector<16x64xf32>
    %168 = tpu.matmul %167, %43, %cst_52 {dimension_numbers = #tpu.dot_dimension_numbers<[1], [0], [0], [1], [0, 0, 1, 1], [], []>} : vector<16x32xf32>, vector<32x64xf32>, vector<16x64xf32> -> vector<16x64xf32>
    %169 = vector.broadcast %44 : vector<1x64xf32> to vector<16x64xf32>
    %170 = arith.addf %168, %169 : vector<16x64xf32>
    %cst_53 = arith.constant 0.000000e+00 : f32
    %171 = vector.broadcast %cst_53 : f32 to vector<16x64xf32>
    %172 = arith.maximumf %170, %171 : vector<16x64xf32>
    %cst_54 = arith.constant dense<0.000000e+00> : vector<16x32xf32>
    %173 = tpu.matmul %172, %45, %cst_54 {dimension_numbers = #tpu.dot_dimension_numbers<[1], [0], [0], [1], [0, 0, 1, 1], [], []>} : vector<16x64xf32>, vector<64x32xf32>, vector<16x32xf32> -> vector<16x32xf32>
    %174 = vector.broadcast %46 : vector<1x32xf32> to vector<16x32xf32>
    %175 = arith.addf %173, %174 : vector<16x32xf32>
    %176 = arith.addf %167, %175 : vector<16x32xf32>
    %cst_55 = arith.constant dense<0.000000e+00> : vector<16xf32>
    %177 = vector.multi_reduction <add>, %176, %cst_55 [1] : vector<16x32xf32> to vector<16xf32>
    %178 = vector.shape_cast %177 : vector<16xf32> to vector<16x1xf32>
    %cst_56 = arith.constant 3.200000e+01 : f32
    %179 = vector.broadcast %cst_56 : f32 to vector<16x1xf32>
    %180 = arith.divf %178, %179 : vector<16x1xf32>
    %181 = vector.broadcast %180 : vector<16x1xf32> to vector<16x32xf32>
    %182 = arith.subf %176, %181 : vector<16x32xf32>
    %183 = arith.mulf %182, %182 : vector<16x32xf32>
    %cst_57 = arith.constant dense<0.000000e+00> : vector<16xf32>
    %184 = vector.multi_reduction <add>, %183, %cst_57 [1] : vector<16x32xf32> to vector<16xf32>
    %185 = vector.shape_cast %184 : vector<16xf32> to vector<16x1xf32>
    %cst_58 = arith.constant 3.200000e+01 : f32
    %186 = vector.broadcast %cst_58 : f32 to vector<16x1xf32>
    %187 = arith.divf %185, %186 : vector<16x1xf32>
    %188 = vector.broadcast %180 : vector<16x1xf32> to vector<16x32xf32>
    %189 = arith.subf %176, %188 : vector<16x32xf32>
    %cst_59 = arith.constant 9.99999974E-6 : f32
    %190 = vector.broadcast %cst_59 : f32 to vector<16x1xf32>
    %191 = arith.addf %187, %190 : vector<16x1xf32>
    %192 = math.rsqrt %191 : vector<16x1xf32>
    %193 = vector.broadcast %192 : vector<16x1xf32> to vector<16x32xf32>
    %194 = arith.mulf %189, %193 : vector<16x32xf32>
    %195 = vector.broadcast %49 : vector<1x32xf32> to vector<16x32xf32>
    %196 = arith.mulf %194, %195 : vector<16x32xf32>
    %197 = vector.broadcast %50 : vector<1x32xf32> to vector<16x32xf32>
    %198 = arith.addf %196, %197 : vector<16x32xf32>
    %c256 = arith.constant 256 : index
    %c0_60 = arith.constant 0 : index
    %199 = vector.load %arg1[%c256, %c0_60] : memref<520x128xf32, #tpu.memory_space<vmem>>, vector<32x96xf32>
    %c288 = arith.constant 288 : index
    %c0_61 = arith.constant 0 : index
    %200 = vector.load %arg1[%c288, %c0_61] : memref<520x128xf32, #tpu.memory_space<vmem>>, vector<1x96xf32>
    %c296 = arith.constant 296 : index
    %c0_62 = arith.constant 0 : index
    %201 = vector.load %arg1[%c296, %c0_62] : memref<520x128xf32, #tpu.memory_space<vmem>>, vector<32x32xf32>
    %c328 = arith.constant 328 : index
    %c0_63 = arith.constant 0 : index
    %202 = vector.load %arg1[%c328, %c0_63] : memref<520x128xf32, #tpu.memory_space<vmem>>, vector<1x32xf32>
    %c336 = arith.constant 336 : index
    %c0_64 = arith.constant 0 : index
    %203 = vector.load %arg1[%c336, %c0_64] : memref<520x128xf32, #tpu.memory_space<vmem>>, vector<32x64xf32>
    %c368 = arith.constant 368 : index
    %c0_65 = arith.constant 0 : index
    %204 = vector.load %arg1[%c368, %c0_65] : memref<520x128xf32, #tpu.memory_space<vmem>>, vector<1x64xf32>
    %c376 = arith.constant 376 : index
    %c0_66 = arith.constant 0 : index
    %205 = vector.load %arg1[%c376, %c0_66] : memref<520x128xf32, #tpu.memory_space<vmem>>, vector<64x32xf32>
    %c440 = arith.constant 440 : index
    %c0_67 = arith.constant 0 : index
    %206 = vector.load %arg1[%c440, %c0_67] : memref<520x128xf32, #tpu.memory_space<vmem>>, vector<1x32xf32>
    %c448 = arith.constant 448 : index
    %c0_68 = arith.constant 0 : index
    %207 = vector.load %arg1[%c448, %c0_68] : memref<520x128xf32, #tpu.memory_space<vmem>>, vector<1x32xf32>
    %c456 = arith.constant 456 : index
    %c0_69 = arith.constant 0 : index
    %208 = vector.load %arg1[%c456, %c0_69] : memref<520x128xf32, #tpu.memory_space<vmem>>, vector<1x32xf32>
    %c464 = arith.constant 464 : index
    %c0_70 = arith.constant 0 : index
    %209 = vector.load %arg1[%c464, %c0_70] : memref<520x128xf32, #tpu.memory_space<vmem>>, vector<1x32xf32>
    %c472 = arith.constant 472 : index
    %c0_71 = arith.constant 0 : index
    %210 = vector.load %arg1[%c472, %c0_71] : memref<520x128xf32, #tpu.memory_space<vmem>>, vector<1x32xf32>
    %cst_72 = arith.constant dense<0.000000e+00> : vector<16x96xf32>
    %211 = tpu.matmul %198, %199, %cst_72 {dimension_numbers = #tpu.dot_dimension_numbers<[1], [0], [0], [1], [0, 0, 1, 1], [], []>} : vector<16x32xf32>, vector<32x96xf32>, vector<16x96xf32> -> vector<16x96xf32>
    %212 = vector.broadcast %200 : vector<1x96xf32> to vector<16x96xf32>
    %213 = arith.addf %211, %212 : vector<16x96xf32>
    %214 = vector.extract_strided_slice %213 {offsets = [0, 0], sizes = [16, 32], strides = [1, 1]} : vector<16x96xf32> to vector<16x32xf32>
    %215 = vector.extract_strided_slice %213 {offsets = [0, 32], sizes = [16, 32], strides = [1, 1]} : vector<16x96xf32> to vector<16x32xf32>
    %216 = vector.extract_strided_slice %213 {offsets = [0, 64], sizes = [16, 32], strides = [1, 1]} : vector<16x96xf32> to vector<16x32xf32>
    %217 = vector.extract_strided_slice %214 {offsets = [0, 0], sizes = [16, 8], strides = [1, 1]} : vector<16x32xf32> to vector<16x8xf32>
    %218 = vector.shape_cast %217 : vector<16x8xf32> to vector<2x8x8xf32>
    %219 = vector.extract_strided_slice %215 {offsets = [0, 0], sizes = [16, 8], strides = [1, 1]} : vector<16x32xf32> to vector<16x8xf32>
    %220 = vector.shape_cast %219 : vector<16x8xf32> to vector<2x8x8xf32>
    %221 = vector.extract_strided_slice %216 {offsets = [0, 0], sizes = [16, 8], strides = [1, 1]} : vector<16x32xf32> to vector<16x8xf32>
    %222 = vector.shape_cast %221 : vector<16x8xf32> to vector<2x8x8xf32>
    "tpu.trace_start"() <{level = 10 : i32, message = "bqd,bkd->bqk"}> : () -> ()
    %cst_73 = arith.constant dense<0.000000e+00> : vector<2x8x8xf32>
    %223 = tpu.matmul %218, %220, %cst_73 {dimension_numbers = #tpu.dot_dimension_numbers<[2], [2], [1], [1], [0, 0, 0, 1, 1, 1], [0], [0]>} : vector<2x8x8xf32>, vector<2x8x8xf32>, vector<2x8x8xf32> -> vector<2x8x8xf32>
    "tpu.trace_stop"() : () -> ()
    %cst_74 = arith.constant 0.353553385 : f32
    %224 = vector.broadcast %cst_74 : f32 to vector<2x8x8xf32>
    %225 = arith.mulf %223, %224 : vector<2x8x8xf32>
    %cst_75 = arith.constant dense<0xFF800000> : vector<2x8xf32>
    %226 = vector.multi_reduction <maximumf>, %225, %cst_75 [2] : vector<2x8x8xf32> to vector<2x8xf32>
    %227 = vector.shape_cast %226 : vector<2x8xf32> to vector<2x8x1xf32>
    %228 = vector.broadcast %227 : vector<2x8x1xf32> to vector<2x8x8xf32>
    %229 = arith.subf %225, %228 : vector<2x8x8xf32>
    %230 = math.exp %229 : vector<2x8x8xf32>
    %cst_76 = arith.constant dense<0.000000e+00> : vector<2x8xf32>
    %231 = vector.multi_reduction <add>, %230, %cst_76 [2] : vector<2x8x8xf32> to vector<2x8xf32>
    %232 = vector.shape_cast %231 : vector<2x8xf32> to vector<2x8x1xf32>
    %233 = tpu.reciprocal %232 {approx = true} : vector<2x8x1xf32> -> vector<2x8x1xf32>
    %234 = vector.broadcast %233 : vector<2x8x1xf32> to vector<2x8x8xf32>
    %235 = arith.mulf %230, %234 : vector<2x8x8xf32>
    "tpu.trace_start"() <{level = 10 : i32, message = "bqk,bkd->bqd"}> : () -> ()
    %cst_77 = arith.constant dense<0.000000e+00> : vector<2x8x8xf32>
    %236 = tpu.matmul %235, %222, %cst_77 {dimension_numbers = #tpu.dot_dimension_numbers<[2], [1], [1], [2], [0, 0, 0, 1, 1, 2], [0], [0]>} : vector<2x8x8xf32>, vector<2x8x8xf32>, vector<2x8x8xf32> -> vector<2x8x8xf32>
    "tpu.trace_stop"() : () -> ()
    %237 = vector.shape_cast %236 : vector<2x8x8xf32> to vector<16x8xf32>
    %238 = vector.extract_strided_slice %214 {offsets = [0, 8], sizes = [16, 8], strides = [1, 1]} : vector<16x32xf32> to vector<16x8xf32>
    %239 = vector.shape_cast %238 : vector<16x8xf32> to vector<2x8x8xf32>
    %240 = vector.extract_strided_slice %215 {offsets = [0, 8], sizes = [16, 8], strides = [1, 1]} : vector<16x32xf32> to vector<16x8xf32>
    %241 = vector.shape_cast %240 : vector<16x8xf32> to vector<2x8x8xf32>
    %242 = vector.extract_strided_slice %216 {offsets = [0, 8], sizes = [16, 8], strides = [1, 1]} : vector<16x32xf32> to vector<16x8xf32>
    %243 = vector.shape_cast %242 : vector<16x8xf32> to vector<2x8x8xf32>
    "tpu.trace_start"() <{level = 10 : i32, message = "bqd,bkd->bqk"}> : () -> ()
    %cst_78 = arith.constant dense<0.000000e+00> : vector<2x8x8xf32>
    %244 = tpu.matmul %239, %241, %cst_78 {dimension_numbers = #tpu.dot_dimension_numbers<[2], [2], [1], [1], [0, 0, 0, 1, 1, 1], [0], [0]>} : vector<2x8x8xf32>, vector<2x8x8xf32>, vector<2x8x8xf32> -> vector<2x8x8xf32>
    "tpu.trace_stop"() : () -> ()
    %cst_79 = arith.constant 0.353553385 : f32
    %245 = vector.broadcast %cst_79 : f32 to vector<2x8x8xf32>
    %246 = arith.mulf %244, %245 : vector<2x8x8xf32>
    %cst_80 = arith.constant dense<0xFF800000> : vector<2x8xf32>
    %247 = vector.multi_reduction <maximumf>, %246, %cst_80 [2] : vector<2x8x8xf32> to vector<2x8xf32>
    %248 = vector.shape_cast %247 : vector<2x8xf32> to vector<2x8x1xf32>
    %249 = vector.broadcast %248 : vector<2x8x1xf32> to vector<2x8x8xf32>
    %250 = arith.subf %246, %249 : vector<2x8x8xf32>
    %251 = math.exp %250 : vector<2x8x8xf32>
    %cst_81 = arith.constant dense<0.000000e+00> : vector<2x8xf32>
    %252 = vector.multi_reduction <add>, %251, %cst_81 [2] : vector<2x8x8xf32> to vector<2x8xf32>
    %253 = vector.shape_cast %252 : vector<2x8xf32> to vector<2x8x1xf32>
    %254 = tpu.reciprocal %253 {approx = true} : vector<2x8x1xf32> -> vector<2x8x1xf32>
    %255 = vector.broadcast %254 : vector<2x8x1xf32> to vector<2x8x8xf32>
    %256 = arith.mulf %251, %255 : vector<2x8x8xf32>
    "tpu.trace_start"() <{level = 10 : i32, message = "bqk,bkd->bqd"}> : () -> ()
    %cst_82 = arith.constant dense<0.000000e+00> : vector<2x8x8xf32>
    %257 = tpu.matmul %256, %243, %cst_82 {dimension_numbers = #tpu.dot_dimension_numbers<[2], [1], [1], [2], [0, 0, 0, 1, 1, 2], [0], [0]>} : vector<2x8x8xf32>, vector<2x8x8xf32>, vector<2x8x8xf32> -> vector<2x8x8xf32>
    "tpu.trace_stop"() : () -> ()
    %258 = vector.shape_cast %257 : vector<2x8x8xf32> to vector<16x8xf32>
    %259 = vector.extract_strided_slice %214 {offsets = [0, 16], sizes = [16, 8], strides = [1, 1]} : vector<16x32xf32> to vector<16x8xf32>
    %260 = vector.shape_cast %259 : vector<16x8xf32> to vector<2x8x8xf32>
    %261 = vector.extract_strided_slice %215 {offsets = [0, 16], sizes = [16, 8], strides = [1, 1]} : vector<16x32xf32> to vector<16x8xf32>
    %262 = vector.shape_cast %261 : vector<16x8xf32> to vector<2x8x8xf32>
    %263 = vector.extract_strided_slice %216 {offsets = [0, 16], sizes = [16, 8], strides = [1, 1]} : vector<16x32xf32> to vector<16x8xf32>
    %264 = vector.shape_cast %263 : vector<16x8xf32> to vector<2x8x8xf32>
    "tpu.trace_start"() <{level = 10 : i32, message = "bqd,bkd->bqk"}> : () -> ()
    %cst_83 = arith.constant dense<0.000000e+00> : vector<2x8x8xf32>
    %265 = tpu.matmul %260, %262, %cst_83 {dimension_numbers = #tpu.dot_dimension_numbers<[2], [2], [1], [1], [0, 0, 0, 1, 1, 1], [0], [0]>} : vector<2x8x8xf32>, vector<2x8x8xf32>, vector<2x8x8xf32> -> vector<2x8x8xf32>
    "tpu.trace_stop"() : () -> ()
    %cst_84 = arith.constant 0.353553385 : f32
    %266 = vector.broadcast %cst_84 : f32 to vector<2x8x8xf32>
    %267 = arith.mulf %265, %266 : vector<2x8x8xf32>
    %cst_85 = arith.constant dense<0xFF800000> : vector<2x8xf32>
    %268 = vector.multi_reduction <maximumf>, %267, %cst_85 [2] : vector<2x8x8xf32> to vector<2x8xf32>
    %269 = vector.shape_cast %268 : vector<2x8xf32> to vector<2x8x1xf32>
    %270 = vector.broadcast %269 : vector<2x8x1xf32> to vector<2x8x8xf32>
    %271 = arith.subf %267, %270 : vector<2x8x8xf32>
    %272 = math.exp %271 : vector<2x8x8xf32>
    %cst_86 = arith.constant dense<0.000000e+00> : vector<2x8xf32>
    %273 = vector.multi_reduction <add>, %272, %cst_86 [2] : vector<2x8x8xf32> to vector<2x8xf32>
    %274 = vector.shape_cast %273 : vector<2x8xf32> to vector<2x8x1xf32>
    %275 = tpu.reciprocal %274 {approx = true} : vector<2x8x1xf32> -> vector<2x8x1xf32>
    %276 = vector.broadcast %275 : vector<2x8x1xf32> to vector<2x8x8xf32>
    %277 = arith.mulf %272, %276 : vector<2x8x8xf32>
    "tpu.trace_start"() <{level = 10 : i32, message = "bqk,bkd->bqd"}> : () -> ()
    %cst_87 = arith.constant dense<0.000000e+00> : vector<2x8x8xf32>
    %278 = tpu.matmul %277, %264, %cst_87 {dimension_numbers = #tpu.dot_dimension_numbers<[2], [1], [1], [2], [0, 0, 0, 1, 1, 2], [0], [0]>} : vector<2x8x8xf32>, vector<2x8x8xf32>, vector<2x8x8xf32> -> vector<2x8x8xf32>
    "tpu.trace_stop"() : () -> ()
    %279 = vector.shape_cast %278 : vector<2x8x8xf32> to vector<16x8xf32>
    %280 = vector.extract_strided_slice %214 {offsets = [0, 24], sizes = [16, 8], strides = [1, 1]} : vector<16x32xf32> to vector<16x8xf32>
    %281 = vector.shape_cast %280 : vector<16x8xf32> to vector<2x8x8xf32>
    %282 = vector.extract_strided_slice %215 {offsets = [0, 24], sizes = [16, 8], strides = [1, 1]} : vector<16x32xf32> to vector<16x8xf32>
    %283 = vector.shape_cast %282 : vector<16x8xf32> to vector<2x8x8xf32>
    %284 = vector.extract_strided_slice %216 {offsets = [0, 24], sizes = [16, 8], strides = [1, 1]} : vector<16x32xf32> to vector<16x8xf32>
    %285 = vector.shape_cast %284 : vector<16x8xf32> to vector<2x8x8xf32>
    "tpu.trace_start"() <{level = 10 : i32, message = "bqd,bkd->bqk"}> : () -> ()
    %cst_88 = arith.constant dense<0.000000e+00> : vector<2x8x8xf32>
    %286 = tpu.matmul %281, %283, %cst_88 {dimension_numbers = #tpu.dot_dimension_numbers<[2], [2], [1], [1], [0, 0, 0, 1, 1, 1], [0], [0]>} : vector<2x8x8xf32>, vector<2x8x8xf32>, vector<2x8x8xf32> -> vector<2x8x8xf32>
    "tpu.trace_stop"() : () -> ()
    %cst_89 = arith.constant 0.353553385 : f32
    %287 = vector.broadcast %cst_89 : f32 to vector<2x8x8xf32>
    %288 = arith.mulf %286, %287 : vector<2x8x8xf32>
    %cst_90 = arith.constant dense<0xFF800000> : vector<2x8xf32>
    %289 = vector.multi_reduction <maximumf>, %288, %cst_90 [2] : vector<2x8x8xf32> to vector<2x8xf32>
    %290 = vector.shape_cast %289 : vector<2x8xf32> to vector<2x8x1xf32>
    %291 = vector.broadcast %290 : vector<2x8x1xf32> to vector<2x8x8xf32>
    %292 = arith.subf %288, %291 : vector<2x8x8xf32>
    %293 = math.exp %292 : vector<2x8x8xf32>
    %cst_91 = arith.constant dense<0.000000e+00> : vector<2x8xf32>
    %294 = vector.multi_reduction <add>, %293, %cst_91 [2] : vector<2x8x8xf32> to vector<2x8xf32>
    %295 = vector.shape_cast %294 : vector<2x8xf32> to vector<2x8x1xf32>
    %296 = tpu.reciprocal %295 {approx = true} : vector<2x8x1xf32> -> vector<2x8x1xf32>
    %297 = vector.broadcast %296 : vector<2x8x1xf32> to vector<2x8x8xf32>
    %298 = arith.mulf %293, %297 : vector<2x8x8xf32>
    "tpu.trace_start"() <{level = 10 : i32, message = "bqk,bkd->bqd"}> : () -> ()
    %cst_92 = arith.constant dense<0.000000e+00> : vector<2x8x8xf32>
    %299 = tpu.matmul %298, %285, %cst_92 {dimension_numbers = #tpu.dot_dimension_numbers<[2], [1], [1], [2], [0, 0, 0, 1, 1, 2], [0], [0]>} : vector<2x8x8xf32>, vector<2x8x8xf32>, vector<2x8x8xf32> -> vector<2x8x8xf32>
    "tpu.trace_stop"() : () -> ()
    %300 = vector.shape_cast %299 : vector<2x8x8xf32> to vector<16x8xf32>
    %301 = tpu.concatenate %237, %258, %279, %300 in 1 : vector<16x8xf32>, vector<16x8xf32>, vector<16x8xf32>, vector<16x8xf32> -> vector<16x32xf32>
    %cst_93 = arith.constant dense<0.000000e+00> : vector<16x32xf32>
    %302 = tpu.matmul %301, %201, %cst_93 {dimension_numbers = #tpu.dot_dimension_numbers<[1], [0], [0], [1], [0, 0, 1, 1], [], []>} : vector<16x32xf32>, vector<32x32xf32>, vector<16x32xf32> -> vector<16x32xf32>
    %303 = vector.broadcast %202 : vector<1x32xf32> to vector<16x32xf32>
    %304 = arith.addf %302, %303 : vector<16x32xf32>
    %305 = arith.addf %198, %304 : vector<16x32xf32>
    %cst_94 = arith.constant dense<0.000000e+00> : vector<16xf32>
    %306 = vector.multi_reduction <add>, %305, %cst_94 [1] : vector<16x32xf32> to vector<16xf32>
    %307 = vector.shape_cast %306 : vector<16xf32> to vector<16x1xf32>
    %cst_95 = arith.constant 3.200000e+01 : f32
    %308 = vector.broadcast %cst_95 : f32 to vector<16x1xf32>
    %309 = arith.divf %307, %308 : vector<16x1xf32>
    %310 = vector.broadcast %309 : vector<16x1xf32> to vector<16x32xf32>
    %311 = arith.subf %305, %310 : vector<16x32xf32>
    %312 = arith.mulf %311, %311 : vector<16x32xf32>
    %cst_96 = arith.constant dense<0.000000e+00> : vector<16xf32>
    %313 = vector.multi_reduction <add>, %312, %cst_96 [1] : vector<16x32xf32> to vector<16xf32>
    %314 = vector.shape_cast %313 : vector<16xf32> to vector<16x1xf32>
    %cst_97 = arith.constant 3.200000e+01 : f32
    %315 = vector.broadcast %cst_97 : f32 to vector<16x1xf32>
    %316 = arith.divf %314, %315 : vector<16x1xf32>
    %317 = vector.broadcast %309 : vector<16x1xf32> to vector<16x32xf32>
    %318 = arith.subf %305, %317 : vector<16x32xf32>
    %cst_98 = arith.constant 9.99999974E-6 : f32
    %319 = vector.broadcast %cst_98 : f32 to vector<16x1xf32>
    %320 = arith.addf %316, %319 : vector<16x1xf32>
    %321 = math.rsqrt %320 : vector<16x1xf32>
    %322 = vector.broadcast %321 : vector<16x1xf32> to vector<16x32xf32>
    %323 = arith.mulf %318, %322 : vector<16x32xf32>
    %324 = vector.broadcast %207 : vector<1x32xf32> to vector<16x32xf32>
    %325 = arith.mulf %323, %324 : vector<16x32xf32>
    %326 = vector.broadcast %208 : vector<1x32xf32> to vector<16x32xf32>
    %327 = arith.addf %325, %326 : vector<16x32xf32>
    %cst_99 = arith.constant dense<0.000000e+00> : vector<16x64xf32>
    %328 = tpu.matmul %327, %203, %cst_99 {dimension_numbers = #tpu.dot_dimension_numbers<[1], [0], [0], [1], [0, 0, 1, 1], [], []>} : vector<16x32xf32>, vector<32x64xf32>, vector<16x64xf32> -> vector<16x64xf32>
    %329 = vector.broadcast %204 : vector<1x64xf32> to vector<16x64xf32>
    %330 = arith.addf %328, %329 : vector<16x64xf32>
    %cst_100 = arith.constant 0.000000e+00 : f32
    %331 = vector.broadcast %cst_100 : f32 to vector<16x64xf32>
    %332 = arith.maximumf %330, %331 : vector<16x64xf32>
    %cst_101 = arith.constant dense<0.000000e+00> : vector<16x32xf32>
    %333 = tpu.matmul %332, %205, %cst_101 {dimension_numbers = #tpu.dot_dimension_numbers<[1], [0], [0], [1], [0, 0, 1, 1], [], []>} : vector<16x64xf32>, vector<64x32xf32>, vector<16x32xf32> -> vector<16x32xf32>
    %334 = vector.broadcast %206 : vector<1x32xf32> to vector<16x32xf32>
    %335 = arith.addf %333, %334 : vector<16x32xf32>
    %336 = arith.addf %327, %335 : vector<16x32xf32>
    %cst_102 = arith.constant dense<0.000000e+00> : vector<16xf32>
    %337 = vector.multi_reduction <add>, %336, %cst_102 [1] : vector<16x32xf32> to vector<16xf32>
    %338 = vector.shape_cast %337 : vector<16xf32> to vector<16x1xf32>
    %cst_103 = arith.constant 3.200000e+01 : f32
    %339 = vector.broadcast %cst_103 : f32 to vector<16x1xf32>
    %340 = arith.divf %338, %339 : vector<16x1xf32>
    %341 = vector.broadcast %340 : vector<16x1xf32> to vector<16x32xf32>
    %342 = arith.subf %336, %341 : vector<16x32xf32>
    %343 = arith.mulf %342, %342 : vector<16x32xf32>
    %cst_104 = arith.constant dense<0.000000e+00> : vector<16xf32>
    %344 = vector.multi_reduction <add>, %343, %cst_104 [1] : vector<16x32xf32> to vector<16xf32>
    %345 = vector.shape_cast %344 : vector<16xf32> to vector<16x1xf32>
    %cst_105 = arith.constant 3.200000e+01 : f32
    %346 = vector.broadcast %cst_105 : f32 to vector<16x1xf32>
    %347 = arith.divf %345, %346 : vector<16x1xf32>
    %348 = vector.broadcast %340 : vector<16x1xf32> to vector<16x32xf32>
    %349 = arith.subf %336, %348 : vector<16x32xf32>
    %cst_106 = arith.constant 9.99999974E-6 : f32
    %350 = vector.broadcast %cst_106 : f32 to vector<16x1xf32>
    %351 = arith.addf %347, %350 : vector<16x1xf32>
    %352 = math.rsqrt %351 : vector<16x1xf32>
    %353 = vector.broadcast %352 : vector<16x1xf32> to vector<16x32xf32>
    %354 = arith.mulf %349, %353 : vector<16x32xf32>
    %355 = vector.broadcast %209 : vector<1x32xf32> to vector<16x32xf32>
    %356 = arith.mulf %354, %355 : vector<16x32xf32>
    %357 = vector.broadcast %210 : vector<1x32xf32> to vector<16x32xf32>
    %358 = arith.addf %356, %357 : vector<16x32xf32>
    %c480 = arith.constant 480 : index
    %c0_107 = arith.constant 0 : index
    %359 = vector.load %arg1[%c480, %c0_107] : memref<520x128xf32, #tpu.memory_space<vmem>>, vector<32x128xf32>
    %c512 = arith.constant 512 : index
    %c0_108 = arith.constant 0 : index
    %360 = vector.load %arg1[%c512, %c0_108] : memref<520x128xf32, #tpu.memory_space<vmem>>, vector<1x128xf32>
    %cst_109 = arith.constant dense<0.000000e+00> : vector<16x128xf32>
    %361 = tpu.matmul %358, %359, %cst_109 {dimension_numbers = #tpu.dot_dimension_numbers<[1], [0], [0], [1], [0, 0, 1, 1], [], []>} : vector<16x32xf32>, vector<32x128xf32>, vector<16x128xf32> -> vector<16x128xf32>
    %362 = vector.broadcast %360 : vector<1x128xf32> to vector<16x128xf32>
    %363 = arith.addf %361, %362 : vector<16x128xf32>
    %c0_110 = arith.constant 0 : index
    %c0_111 = arith.constant 0 : index
    %364 = vector.load %arg2[%c0_110, %c0_111] : memref<16x128xf32, #tpu.memory_space<vmem>>, vector<16x128xf32>
    tpu.vector_store %arg2[%c0_110, %c0_111], %363 {strides = array<i32>} : memref<16x128xf32, #tpu.memory_space<vmem>>, vector<16x128xf32>,
    return
  }
}

</mosaic_0001>

<llo_original>
// kernel: forward.1
$region0: #{forward.1}
  #allocation0 [shape = 'u32[]', space=smem, size = 0x4, offset = 0x4, fixed_abs, tag = 'smem constant byte address 0x4 - core index']
  #allocation1 [shape = 'u32[144,128]{1,0:T(1,128)}', space=vmem, size = 0x12000, scoped, tag = 'internal scratch']
  %s0 = inlined_call_operand.vmem [shape: f32[16,4], index: 0, kind: input, shape index: {}]
  %s1 = inlined_call_operand.hbm [shape: f32[520,128], index: 1, kind: input, shape index: {}]
  %s2 = inlined_call_operand.vmem [shape: f32[16,128], index: 2, kind: output, shape index: {}]
  %s3 = sld [smem:[#allocation0]]
  $region22: #{forward.1} parent=0
    _
  %s5 = ssub.s32 1, %s3
  %s6 = scalar_select 0, %s5, %s3
  $region1: #{forward.1} parent=0
    #allocation2 [shape = 'u8[266240]{0}', space=vmem, size = 0x41000, scoped, tag = 'input window, operand 1, single buffered']
    #allocation3 [shape = 's32[1]{0}', space=sflag, size = 0x4, scoped, tag = 'scoped memory for forward.1']
    %7 = vsyncpa [#allocation3], 0
    // Predicated region
    $region2: #{forward.1} parent=1 // pred_check
      _
    $region3: #{forward.1} parent=1 // pred_check_branch
      %9 = sbr.rel (0) target = $region5
    $region4: #{forward.1} parent=1 // pred_region
      _
    $region5: #{forward.1} parent=1 // pred_fallthru
      _
    // Predicated region
    $region6: #{forward.1} parent=1 // pred_check
      _
    $region7: #{forward.1} parent=1 // pred_check_branch
      %11 = sbr.rel (0) target = $region9
    $region8: #{forward.1} parent=1 // pred_region
      %s13 = ssub.s32 8320, 8320
      %14 = vsyncadd [#allocation3], %s13
      %s15 = sshll.u32 [#allocation2], 4
      %s16 = int_to_ptr.vmem [resolvable:$true] %s15
      %21 = dma.hbm_to_vmem [thread:$0]  %s1, 8320, %s16, [#allocation3], 128, 128, 8
    $region9: #{forward.1} parent=1 // pred_fallthru
      _
    // Predicated region
    $region10: #{forward.1} parent=1 // pred_check
      _
    $region11: #{forward.1} parent=1 // pred_check_branch
      %23 = sbr.rel (0) target = $region13
    $region12: #{forward.1} parent=1 // pred_region
      %24 = dma.done [#allocation3], 8320
    $region13: #{forward.1} parent=1 // pred_fallthru
      _
    %v25 = vld [vmem:[#allocation2] sm:$0xf]
    %v26 = vld [vmem:[#allocation2 + $0x8] sm:$0x1]
    %v27 = vld [vmem:[#allocation2 + $0x10] sm:$0x1]
    %v28 = vld [vmem:[#allocation2 + $0x18] sm:$0xff]
    %v29 = vld [vmem:[%s0] sm:$0xff]
    %v30 = vld [vmem:[%s0 + $0x8] sm:$0xff]
    %v31 = vlaneseq
    %v32 = vshrl.u32 %v31, 7
    %v33 = vsub.s32 0, %v32
    %v34 = vrot.slane %v26, %v33
    %vm35 = vcmask 31744
    %v37 = vsel %vm35, %v29, 0
    %v40 = vsel %vm35, %v30, 0
    %vm42 = vcmask 1043456
    %v44 = vsel %vm42, %v25, 0
    %46 = vmatprep.subr.mxu0 0.0
    %47 = vmatpush1.msra.mxu0 %v44
    %48 = vmatprep.subr.mxu0 0.0
    %49 = vmatpush1.msra.mxu0 0.0
    %50 = vmatprep.subr.mxu0 0.0
    %51 = vmatpush1.msra.mxu0 0.0
    %52 = vmatprep.subr.mxu0 0.0
    %53 = vmatpush1.msra.mxu0 0.0
    %54 = vmatprep.subr.mxu0 0.0
    %55 = vmatpush1.msra.mxu0 0.0
    %56 = vmatprep.subr.mxu0 0.0
    %57 = vmatpush1.msra.mxu0 0.0
    %58 = vmatprep.subr.mxu0 0.0
    %59 = vmatpush1.msra.mxu0 0.0
    %60 = vmatprep.subr.mxu0 0.0
    %61 = vmatpush1.msra.mxu0 0.0
    %62 = vmatprep.subr.mxu0 0.0
    %63 = vmatpush1.msra.mxu0 0.0
    %64 = vmatprep.subr.mxu0 0.0
    %65 = vmatpush1.msra.mxu0 0.0
    %66 = vmatprep.subr.mxu0 0.0
    %67 = vmatpush1.msra.mxu0 0.0
    %68 = vmatprep.subr.mxu0 0.0
    %69 = vmatpush1.msra.mxu0 0.0
    %70 = vmatprep.subr.mxu0 0.0
    %71 = vmatpush1.msra.mxu0 0.0
    %72 = vmatprep.subr.mxu0 0.0
    %73 = vmatpush1.msra.mxu0 0.0
    %74 = vmatprep.subr.mxu0 0.0
    %75 = vmatpush1.msra.mxu0 0.0
    %76 = vmatprep.subr.mxu0 0.0
    %77 = vmatpush1.msra.mxu0 0.0
    %78 = vmatprep.subr.mxu0 0.0
    %79 = vmatpush1.msra.mxu0 0.0
    %80 = vmatprep.subr.mxu0 0.0
    %81 = vmatpush1.msra.mxu0 0.0
    %82 = vmatprep.subr.mxu0 0.0
    %83 = vmatpush1.msra.mxu0 0.0
    %84 = vmatprep.subr.mxu0 0.0
    %85 = vmatpush1.msra.mxu0 0.0
    %86 = vmatprep.subr.mxu0 0.0
    %87 = vmatpush1.msra.mxu0 0.0
    %88 = vmatprep.subr.mxu0 0.0
    %89 = vmatpush1.msra.mxu0 0.0
    %90 = vmatprep.subr.mxu0 0.0
    %91 = vmatpush1.msra.mxu0 0.0
    %92 = vmatprep.subr.mxu0 0.0
    %93 = vmatpush1.msra.mxu0 0.0
    %94 = vmatprep.subr.mxu0 0.0
    %95 = vmatpush1.msra.mxu0 0.0
    %96 = vmatprep.subr.mxu0 0.0
    %97 = vmatpush1.msra.mxu0 0.0
    %98 = vmatprep.subr.mxu0 0.0
    %99 = vmatpush1.msra.mxu0 0.0
    %100 = vmatprep.subr.mxu0 0.0
    %101 = vmatpush1.msra.mxu0 0.0
    %102 = vmatprep.subr.mxu0 0.0
    %103 = vmatpush1.msra.mxu0 0.0
    %104 = vmatprep.subr.mxu0 0.0
    %105 = vmatpush1.msra.mxu0 0.0
    %106 = vmatprep.subr.mxu0 0.0
    %107 = vmatpush1.msra.mxu0 0.0
    %108 = vmatprep.subr.mxu0 0.0
    %109 = vmatpush1.msra.mxu0 0.0
    %110 = vmatprep.mubr.f32.mxu0 0.0
    %111 = vmatmul.mubr.f32.gmra.mrb[0].mxu0 %v37
    %v112 = vpop.f32.mrb[0].mxu0
    %v113 = vadd.f32 %v34, %v112
    %v114 = vpop.f32.mrb[0].mxu0
    %115 = vmatprep.mubr.f32.mxu0 0.0
    %116 = vmatmul.mubr.f32.gmra.mrb[0].mxu0 %v40
    %v117 = vpop.f32.mrb[0].mxu0
    %v118 = vadd.f32 %v34, %v117
    %v119 = vpop.f32.mrb[0].mxu0
    %120 = vdwg.mxu0
    %v121 = vmul.f32 %v113, 5.656854
    %v122 = vmul.f32 %v118, 5.656854
    %v123 = vlaneseq
    %v124 = vshrl.u32 %v123, 7
    %v125 = vadd.s32 %v124, 8
    %vm126 = vcmp.lt.s32.totalorder %v124, 0
    %v127 = vsub.s32 0, %v124
    %v128 = vsel %vm126, %v127, %v124
    %v129 = vshrl.u32 %v128, 3
    %v130 = vand.u32 %v128, 7
    %v131 = vsub.s32 0, %v130
    %v132 = vsel %vm126, %v131, %v130
    %vm133 = vcmp.lt.s32.totalorder %v125, 0
    %v134 = vsub.s32 0, %v125
    %v135 = vsel %vm133, %v134, %v125
    %v136 = vshrl.u32 %v135, 3
    %v137 = vand.u32 %v135, 7
    %v138 = vsub.s32 0, %v137
    %v139 = vsel %vm133, %v138, %v137
    %vm140 = vcmp.ne.s32.totalorder %v132, 0
    %vm141 = vcmp.ne.s32.totalorder %v139, 0
    %vm142 = vcmp.lt.s32.totalorder %v132, 0
    %vm143 = vcmp.lt.s32.totalorder %v139, 0
    %vm144 = vmand %vm142, %vm140
    %vm145 = vmand %vm143, %vm141
    %v146 = vadd.s32 %v132, 8
    %v147 = vadd.s32 %v139, 8
    %v148 = vsel %vm144, %v146, %v132
    %v149 = vsel %vm145, %v147, %v139
    %vm150 = vcmp.eq.s32.totalorder %v148, 0
    %vm151 = vcmp.eq.s32.totalorder %v149, 0
    %v152 = vmul.f32 %v26, 5.656854
    %v153 = vsub.f32 %v27, %v152
    %v154 = vlaneseq
    %v155 = vshrl.u32 %v154, 7
    %v156 = vsub.s32 0, %v155
    %v157 = vrot.slane %v153, %v156
    %v158 = vadd.f32 %v121, %v28
    %v159 = vadd.f32 %v122, %v28
    %v160 = vsel %vm150, %v157, 0.0
    %v161 = vsel %vm151, %v157, 0.0
    %v162 = vadd.f32 %v158, %v160
    %v163 = vadd.f32 %v159, %v161
    %v164 = vld [vmem:[#allocation2 + $0x20] sm:$0xff]
    %v165 = vld [vmem:[#allocation2 + $0x28] sm:$0xff]
    %v166 = vld [vmem:[#allocation2 + $0x30] sm:$0xff]
    %v167 = vld [vmem:[#allocation2 + $0x38] sm:$0xff]
    %v168 = vld [vmem:[#allocation2 + $0x40] sm:$0x1]
    %v169 = vld [vmem:[#allocation2 + $0x48] sm:$0xff]
    %v170 = vld [vmem:[#allocation2 + $0x50] sm:$0xff]
    %v171 = vld [vmem:[#allocation2 + $0x58] sm:$0xff]
    %v172 = vld [vmem:[#allocation2 + $0x60] sm:$0xff]
    %v173 = vld [vmem:[#allocation2 + $0x68] sm:$0x1]
    %v174 = vld [vmem:[#allocation2 + $0x70] sm:$0xff]
    %v175 = vld [vmem:[#allocation2 + $0x78] sm:$0xff]
    %v176 = vld [vmem:[#allocation2 + $0x80] sm:$0xff]
    %v177 = vld [vmem:[#allocation2 + $0x88] sm:$0xff]
    %v178 = vld [vmem:[#allocation2 + $0x90] sm:$0x1]
    %v179 = vld [vmem:[#allocation2 + $0x98] sm:$0xff]
    %v180 = vld [vmem:[#allocation2 + $0xa0] sm:$0xff]
    %v181 = vld [vmem:[#allocation2 + $0xa8] sm:$0xff]
    %v182 = vld [vmem:[#allocation2 + $0xb0] sm:$0xff]
    %v183 = vld [vmem:[#allocation2 + $0xb8] sm:$0xff]
    %v184 = vld [vmem:[#allocation2 + $0xc0] sm:$0xff]
    %v185 = vld [vmem:[#allocation2 + $0xc8] sm:$0xff]
    %v186 = vld [vmem:[#allocation2 + $0xd0] sm:$0xff]
    %v187 = vld [vmem:[#allocation2 + $0xd8] sm:$0x1]
    %v188 = vld [vmem:[#allocation2 + $0xe0] sm:$0x1]
    %v189 = vld [vmem:[#allocation2 + $0xe8] sm:$0x1]
    %v190 = vld [vmem:[#allocation2 + $0xf0] sm:$0x1]
    %v191 = vld [vmem:[#allocation2 + $0xf8] sm:$0x1]
    %v192 = vlaneseq
    %v193 = vshrl.u32 %v192, 7
    %v194 = vsub.s32 0, %v193
    %v195 = vrot.slane %v168, %v194
    %vm196 = vcmask 261120
    %v198 = vsel %vm196, %v162, 0
    %v201 = vsel %vm196, %v163, 0
    %203 = vmatprep.subr.mxu0 0.0
    %204 = vmatpush1.msra.mxu0 %v164
    %205 = vmatprep.subr.mxu0 0.0
    %206 = vmatpush1.msra.mxu0 %v165
    %207 = vmatprep.subr.mxu0 0.0
    %208 = vmatpush1.msra.mxu0 %v166
    %209 = vmatprep.subr.mxu0 0.0
    %210 = vmatpush1.msra.mxu0 %v167
    %211 = vmatprep.subr.mxu0 0.0
    %212 = vmatpush1.msra.mxu0 0.0
    %213 = vmatprep.subr.mxu0 0.0
    %214 = vmatpush1.msra.mxu0 0.0
    %215 = vmatprep.subr.mxu0 0.0
    %216 = vmatpush1.msra.mxu0 0.0
    %217 = vmatprep.subr.mxu0 0.0
    %218 = vmatpush1.msra.mxu0 0.0
    %219 = vmatprep.subr.mxu0 0.0
    %220 = vmatpush1.msra.mxu0 0.0
    %221 = vmatprep.subr.mxu0 0.0
    %222 = vmatpush1.msra.mxu0 0.0
    %223 = vmatprep.subr.mxu0 0.0
    %224 = vmatpush1.msra.mxu0 0.0
    %225 = vmatprep.subr.mxu0 0.0
    %226 = vmatpush1.msra.mxu0 0.0
    %227 = vmatprep.subr.mxu0 0.0
    %228 = vmatpush1.msra.mxu0 0.0
    %229 = vmatprep.subr.mxu0 0.0
    %230 = vmatpush1.msra.mxu0 0.0
    %231 = vmatprep.subr.mxu0 0.0
    %232 = vmatpush1.msra.mxu0 0.0
    %233 = vmatprep.subr.mxu0 0.0
    %234 = vmatpush1.msra.mxu0 0.0
    %235 = vmatprep.subr.mxu0 0.0
    %236 = vmatpush1.msra.mxu0 0.0
    %237 = vmatprep.subr.mxu0 0.0
    %238 = vmatpush1.msra.mxu0 0.0
    %239 = vmatprep.subr.mxu0 0.0
    %240 = vmatpush1.msra.mxu0 0.0
    %241 = vmatprep.subr.mxu0 0.0
    %242 = vmatpush1.msra.mxu0 0.0
    %243 = vmatprep.subr.mxu0 0.0
    %244 = vmatpush1.msra.mxu0 0.0
    %245 = vmatprep.subr.mxu0 0.0
    %246 = vmatpush1.msra.mxu0 0.0
    %247 = vmatprep.subr.mxu0 0.0
    %248 = vmatpush1.msra.mxu0 0.0
    %249 = vmatprep.subr.mxu0 0.0
    %250 = vmatpush1.msra.mxu0 0.0
    %251 = vmatprep.subr.mxu0 0.0
    %252 = vmatpush1.msra.mxu0 0.0
    %253 = vmatprep.subr.mxu0 0.0
    %254 = vmatpush1.msra.mxu0 0.0
    %255 = vmatprep.subr.mxu0 0.0
    %256 = vmatpush1.msra.mxu0 0.0
    %257 = vmatprep.subr.mxu0 0.0
    %258 = vmatpush1.msra.mxu0 0.0
    %259 = vmatprep.subr.mxu0 0.0
    %260 = vmatpush1.msra.mxu0 0.0
    %261 = vmatprep.subr.mxu0 0.0
    %262 = vmatpush1.msra.mxu0 0.0
    %263 = vmatprep.subr.mxu0 0.0
    %264 = vmatpush1.msra.mxu0 0.0
    %265 = vmatprep.subr.mxu0 0.0
    %266 = vmatpush1.msra.mxu0 0.0
    %267 = vmatprep.mubr.f32.mxu0 0.0
    %268 = vmatmul.mubr.f32.gmra.mrb[0].mxu0 %v198
    %v269 = vpop.f32.mrb[0].mxu0
    %v270 = vadd.f32 %v195, %v269
    %v271 = vpop.f32.mrb[0].mxu0
    %272 = vmatprep.mubr.f32.mxu0 0.0
    %273 = vmatmul.mubr.f32.gmra.mrb[0].mxu0 %v201
    %v274 = vpop.f32.mrb[0].mxu0
    %v275 = vadd.f32 %v195, %v274
    %v276 = vpop.f32.mrb[0].mxu0
    %277 = vdwg.mxu0
    %279 = vrot.lane.b32.xlu0 %v270, 96
    %v280 = vpop.permute.xlu0 %279
    %vm281 = vcmask 64512
    %v282 = vsel %vm281, %v270, 0
    %v284 = vsel %vm281, %v280, 0
    %286 = vmatprep.subr.mxu0 0.0
    %287 = vmatpush1.xpose.msra.mxu0 %v284
    %288 = vmatprep.subr.mxu0 0.0
    %289 = vmatpush1.xpose.msra.mxu0 0.0
    %290 = vmatprep.subr.mxu0 0.0
    %291 = vmatpush1.xpose.msra.mxu0 0.0
    %292 = vmatprep.subr.mxu0 0.0
    %293 = vmatpush1.xpose.msra.mxu0 0.0
    %294 = vmatprep.subr.mxu0 0.0
    %295 = vmatpush1.xpose.msra.mxu0 0.0
    %296 = vmatprep.subr.mxu0 0.0
    %297 = vmatpush1.xpose.msra.mxu0 0.0
    %298 = vmatprep.subr.mxu0 0.0
    %299 = vmatpush1.xpose.msra.mxu0 0.0
    %300 = vmatprep.subr.mxu0 0.0
    %301 = vmatpush1.xpose.msra.mxu0 0.0
    %302 = vmatprep.subr.mxu0 0.0
    %303 = vmatpush1.xpose.msra.mxu0 0.0
    %304 = vmatprep.subr.mxu0 0.0
    %305 = vmatpush1.xpose.msra.mxu0 0.0
    %306 = vmatprep.subr.mxu0 0.0
    %307 = vmatpush1.xpose.msra.mxu0 0.0
    %308 = vmatprep.subr.mxu0 0.0
    %309 = vmatpush1.xpose.msra.mxu0 0.0
    %310 = vmatprep.subr.mxu0 0.0
    %311 = vmatpush1.xpose.msra.mxu0 0.0
    %312 = vmatprep.subr.mxu0 0.0
    %313 = vmatpush1.xpose.msra.mxu0 0.0
    %314 = vmatprep.subr.mxu0 0.0
    %315 = vmatpush1.xpose.msra.mxu0 0.0
    %316 = vmatprep.subr.mxu0 0.0
    %317 = vmatpush1.xpose.msra.mxu0 0.0
    %318 = vmatprep.subr.mxu0 0.0
    %319 = vmatpush1.xpose.msra.mxu0 0.0
    %320 = vmatprep.subr.mxu0 0.0
    %321 = vmatpush1.xpose.msra.mxu0 0.0
    %322 = vmatprep.subr.mxu0 0.0
    %323 = vmatpush1.xpose.msra.mxu0 0.0
    %324 = vmatprep.subr.mxu0 0.0
    %325 = vmatpush1.xpose.msra.mxu0 0.0
    %326 = vmatprep.subr.mxu0 0.0
    %327 = vmatpush1.xpose.msra.mxu0 0.0
    %328 = vmatprep.subr.mxu0 0.0
    %329 = vmatpush1.xpose.msra.mxu0 0.0
    %330 = vmatprep.subr.mxu0 0.0
    %331 = vmatpush1.xpose.msra.mxu0 0.0
    %332 = vmatprep.subr.mxu0 0.0
    %333 = vmatpush1.xpose.msra.mxu0 0.0
    %334 = vmatprep.subr.mxu0 0.0
    %335 = vmatpush1.xpose.msra.mxu0 0.0
    %336 = vmatprep.subr.mxu0 0.0
    %337 = vmatpush1.xpose.msra.mxu0 0.0
    %338 = vmatprep.subr.mxu0 0.0
    %339 = vmatpush1.xpose.msra.mxu0 0.0
    %340 = vmatprep.subr.mxu0 0.0
    %341 = vmatpush1.xpose.msra.mxu0 0.0
    %342 = vmatprep.subr.mxu0 0.0
    %343 = vmatpush1.xpose.msra.mxu0 0.0
    %344 = vmatprep.subr.mxu0 0.0
    %345 = vmatpush1.xpose.msra.mxu0 0.0
    %346 = vmatprep.subr.mxu0 0.0
    %347 = vmatpush1.xpose.msra.mxu0 0.0
    %348 = vmatprep.subr.mxu0 0.0
    %349 = vmatpush1.xpose.msra.mxu0 0.0
    %350 = vmatprep.mubr.f32.mxu0 0.0
    %351 = vmatmul.mubr.f32.gmra.mrb[0].mxu0 %v282
    %v352 = vpop.f32.mrb[0].mxu0
    %v353 = vadd.f32 0.0, %v352
    %v354 = vpop.f32.mrb[0].mxu0
    %355 = vdwg.mxu0
    %357 = vrot.lane.b32.xlu0 %v275, 96
    %v358 = vpop.permute.xlu0 %357
    %v359 = vsel %vm281, %v275, 0
    %v361 = vsel %vm281, %v358, 0
    %363 = vmatprep.subr.mxu0 0.0
    %364 = vmatpush1.xpose.msra.mxu0 %v361
    %365 = vmatprep.subr.mxu0 0.0
    %366 = vmatpush1.xpose.msra.mxu0 0.0
    %367 = vmatprep.subr.mxu0 0.0
    %368 = vmatpush1.xpose.msra.mxu0 0.0
    %369 = vmatprep.subr.mxu0 0.0
    %370 = vmatpush1.xpose.msra.mxu0 0.0
    %371 = vmatprep.subr.mxu0 0.0
    %372 = vmatpush1.xpose.msra.mxu0 0.0
    %373 = vmatprep.subr.mxu0 0.0
    %374 = vmatpush1.xpose.msra.mxu0 0.0
    %375 = vmatprep.subr.mxu0 0.0
    %376 = vmatpush1.xpose.msra.mxu0 0.0
    %377 = vmatprep.subr.mxu0 0.0
    %378 = vmatpush1.xpose.msra.mxu0 0.0
    %379 = vmatprep.subr.mxu0 0.0
    %380 = vmatpush1.xpose.msra.mxu0 0.0
    %381 = vmatprep.subr.mxu0 0.0
    %382 = vmatpush1.xpose.msra.mxu0 0.0
    %383 = vmatprep.subr.mxu0 0.0
    %384 = vmatpush1.xpose.msra.mxu0 0.0
    %385 = vmatprep.subr.mxu0 0.0
    %386 = vmatpush1.xpose.msra.mxu0 0.0
    %387 = vmatprep.subr.mxu0 0.0
    %388 = vmatpush1.xpose.msra.mxu0 0.0
    %389 = vmatprep.subr.mxu0 0.0
    %390 = vmatpush1.xpose.msra.mxu0 0.0
    %391 = vmatprep.subr.mxu0 0.0
    %392 = vmatpush1.xpose.msra.mxu0 0.0
    %393 = vmatprep.subr.mxu0 0.0
    %394 = vmatpush1.xpose.msra.mxu0 0.0
    %395 = vmatprep.subr.mxu0 0.0
    %396 = vmatpush1.xpose.msra.mxu0 0.0
    %397 = vmatprep.subr.mxu0 0.0
    %398 = vmatpush1.xpose.msra.mxu0 0.0
    %399 = vmatprep.subr.mxu0 0.0
    %400 = vmatpush1.xpose.msra.mxu0 0.0
    %401 = vmatprep.subr.mxu0 0.0
    %402 = vmatpush1.xpose.msra.mxu0 0.0
    %403 = vmatprep.subr.mxu0 0.0
    %404 = vmatpush1.xpose.msra.mxu0 0.0
    %405 = vmatprep.subr.mxu0 0.0
    %406 = vmatpush1.xpose.msra.mxu0 0.0
    %407 = vmatprep.subr.mxu0 0.0
    %408 = vmatpush1.xpose.msra.mxu0 0.0
    %409 = vmatprep.subr.mxu0 0.0
    %410 = vmatpush1.xpose.msra.mxu0 0.0
    %411 = vmatprep.subr.mxu0 0.0
    %412 = vmatpush1.xpose.msra.mxu0 0.0
    %413 = vmatprep.subr.mxu0 0.0
    %414 = vmatpush1.xpose.msra.mxu0 0.0
    %415 = vmatprep.subr.mxu0 0.0
    %416 = vmatpush1.xpose.msra.mxu0 0.0
    %417 = vmatprep.subr.mxu0 0.0
    %418 = vmatpush1.xpose.msra.mxu0 0.0
    %419 = vmatprep.subr.mxu0 0.0
    %420 = vmatpush1.xpose.msra.mxu0 0.0
    %421 = vmatprep.subr.mxu0 0.0
    %422 = vmatpush1.xpose.msra.mxu0 0.0
    %423 = vmatprep.subr.mxu0 0.0
    %424 = vmatpush1.xpose.msra.mxu0 0.0
    %425 = vmatprep.subr.mxu0 0.0
    %426 = vmatpush1.xpose.msra.mxu0 0.0
    %427 = vmatprep.mubr.f32.mxu0 0.0
    %428 = vmatmul.mubr.f32.gmra.mrb[0].mxu0 %v359
    %v429 = vpop.f32.mrb[0].mxu0
    %v430 = vadd.f32 0.0, %v429
    %v431 = vpop.f32.mrb[0].mxu0
    %432 = vdwg.mxu0
    %v433 = vmul.f32 %v353, 0.35355338
    %v434 = vmul.f32 %v430, 0.35355338
    %v435 = vsel %vm281, %v433, -inf
    %436 = vmax.xlane.f32.xlu0 %v435
    %v437 = vpop.xlane.xlu0 %436
    %v438 = vsel %vm281, %v434, -inf
    %439 = vmax.xlane.f32.xlu0 %v438
    %v440 = vpop.xlane.xlu0 %439
    %v441 = vsub.f32 %v433, %v437
    %v442 = vsub.f32 %v434, %v440
    %v443 = vmul.f32 %v441, 1.442695
    %v444 = vpow.pop %v443
    %v445 = vmul.f32 %v442, 1.442695
    %v446 = vpow.pop %v445
    %v447 = vsel %vm281, %v444, 0.0
    %448 = vadd.xlane.f32.xlu0 %v447
    %v449 = vpop.xlane.xlu0 %448
    %v450 = vsel %vm281, %v446, 0.0
    %451 = vadd.xlane.f32.xlu0 %v450
    %v452 = vpop.xlane.xlu0 %451
    %v453 = vrcp.pop %v449
    %v454 = vrcp.pop %v452
    %v455 = vmul.f32 %v444, %v453
    %v456 = vmul.f32 %v446, %v454
    %457 = vrot.lane.b32.xlu0 %v270, 64
    %v458 = vpop.permute.xlu0 %457
    %v461 = vsel %vm281, %v455, 0
    %463 = vmatprep.subr.mxu0 0.0
    %464 = vmatpush1.msra.mxu0 %v458
    %465 = vmatprep.subr.mxu0 0.0
    %466 = vmatpush1.msra.mxu0 0.0
    %467 = vmatprep.subr.mxu0 0.0
    %468 = vmatpush1.msra.mxu0 0.0
    %469 = vmatprep.subr.mxu0 0.0
    %470 = vmatpush1.msra.mxu0 0.0
    %471 = vmatprep.subr.mxu0 0.0
    %472 = vmatpush1.msra.mxu0 0.0
    %473 = vmatprep.subr.mxu0 0.0
    %474 = vmatpush1.msra.mxu0 0.0
    %475 = vmatprep.subr.mxu0 0.0
    %476 = vmatpush1.msra.mxu0 0.0
    %477 = vmatprep.subr.mxu0 0.0
    %478 = vmatpush1.msra.mxu0 0.0
    %479 = vmatprep.subr.mxu0 0.0
    %480 = vmatpush1.msra.mxu0 0.0
    %481 = vmatprep.subr.mxu0 0.0
    %482 = vmatpush1.msra.mxu0 0.0
    %483 = vmatprep.subr.mxu0 0.0
    %484 = vmatpush1.msra.mxu0 0.0
    %485 = vmatprep.subr.mxu0 0.0
    %486 = vmatpush1.msra.mxu0 0.0
    %487 = vmatprep.subr.mxu0 0.0
    %488 = vmatpush1.msra.mxu0 0.0
    %489 = vmatprep.subr.mxu0 0.0
    %490 = vmatpush1.msra.mxu0 0.0
    %491 = vmatprep.subr.mxu0 0.0
    %492 = vmatpush1.msra.mxu0 0.0
    %493 = vmatprep.subr.mxu0 0.0
    %494 = vmatpush1.msra.mxu0 0.0
    %495 = vmatprep.subr.mxu0 0.0
    %496 = vmatpush1.msra.mxu0 0.0
    %497 = vmatprep.subr.mxu0 0.0
    %498 = vmatpush1.msra.mxu0 0.0
    %499 = vmatprep.subr.mxu0 0.0
    %500 = vmatpush1.msra.mxu0 0.0
    %501 = vmatprep.subr.mxu0 0.0
    %502 = vmatpush1.msra.mxu0 0.0
    %503 = vmatprep.subr.mxu0 0.0
    %504 = vmatpush1.msra.mxu0 0.0
    %505 = vmatprep.subr.mxu0 0.0
    %506 = vmatpush1.msra.mxu0 0.0
    %507 = vmatprep.subr.mxu0 0.0
    %508 = vmatpush1.msra.mxu0 0.0
    %509 = vmatprep.subr.mxu0 0.0
    %510 = vmatpush1.msra.mxu0 0.0
    %511 = vmatprep.subr.mxu0 0.0
    %512 = vmatpush1.msra.mxu0 0.0
    %513 = vmatprep.subr.mxu0 0.0
    %514 = vmatpush1.msra.mxu0 0.0
    %515 = vmatprep.subr.mxu0 0.0
    %516 = vmatpush1.msra.mxu0 0.0
    %517 = vmatprep.subr.mxu0 0.0
    %518 = vmatpush1.msra.mxu0 0.0
    %519 = vmatprep.subr.mxu0 0.0
    %520 = vmatpush1.msra.mxu0 0.0
    %521 = vmatprep.subr.mxu0 0.0
    %522 = vmatpush1.msra.mxu0 0.0
    %523 = vmatprep.subr.mxu0 0.0
    %524 = vmatpush1.msra.mxu0 0.0
    %525 = vmatprep.subr.mxu0 0.0
    %526 = vmatpush1.msra.mxu0 0.0
    %527 = vmatprep.mubr.f32.mxu0 0.0
    %528 = vmatmul.mubr.f32.gmra.mrb[0].mxu0 %v461
    %v529 = vpop.f32.mrb[0].mxu0
    %v530 = vadd.f32 0.0, %v529
    %v531 = vpop.f32.mrb[0].mxu0
    %532 = vdwg.mxu0
    %533 = vrot.lane.b32.xlu0 %v275, 64
    %v534 = vpop.permute.xlu0 %533
    %v537 = vsel %vm281, %v456, 0
    %539 = vmatprep.subr.mxu0 0.0
    %540 = vmatpush1.msra.mxu0 %v534
    %541 = vmatprep.subr.mxu0 0.0
    %542 = vmatpush1.msra.mxu0 0.0
    %543 = vmatprep.subr.mxu0 0.0
    %544 = vmatpush1.msra.mxu0 0.0
    %545 = vmatprep.subr.mxu0 0.0
    %546 = vmatpush1.msra.mxu0 0.0
    %547 = vmatprep.subr.mxu0 0.0
    %548 = vmatpush1.msra.mxu0 0.0
    %549 = vmatprep.subr.mxu0 0.0
    %550 = vmatpush1.msra.mxu0 0.0
    %551 = vmatprep.subr.mxu0 0.0
    %552 = vmatpush1.msra.mxu0 0.0
    %553 = vmatprep.subr.mxu0 0.0
    %554 = vmatpush1.msra.mxu0 0.0
    %555 = vmatprep.subr.mxu0 0.0
    %556 = vmatpush1.msra.mxu0 0.0
    %557 = vmatprep.subr.mxu0 0.0
    %558 = vmatpush1.msra.mxu0 0.0
    %559 = vmatprep.subr.mxu0 0.0
    %560 = vmatpush1.msra.mxu0 0.0
    %561 = vmatprep.subr.mxu0 0.0
    %562 = vmatpush1.msra.mxu0 0.0
    %563 = vmatprep.subr.mxu0 0.0
    %564 = vmatpush1.msra.mxu0 0.0
    %565 = vmatprep.subr.mxu0 0.0
    %566 = vmatpush1.msra.mxu0 0.0
    %567 = vmatprep.subr.mxu0 0.0
    %568 = vmatpush1.msra.mxu0 0.0
    %569 = vmatprep.subr.mxu0 0.0
    %570 = vmatpush1.msra.mxu0 0.0
    %571 = vmatprep.subr.mxu0 0.0
    %572 = vmatpush1.msra.mxu0 0.0
    %573 = vmatprep.subr.mxu0 0.0
    %574 = vmatpush1.msra.mxu0 0.0
    %575 = vmatprep.subr.mxu0 0.0
    %576 = vmatpush1.msra.mxu0 0.0
    %577 = vmatprep.subr.mxu0 0.0
    %578 = vmatpush1.msra.mxu0 0.0
    %579 = vmatprep.subr.mxu0 0.0
    %580 = vmatpush1.msra.mxu0 0.0
    %581 = vmatprep.subr.mxu0 0.0
    %582 = vmatpush1.msra.mxu0 0.0
    %583 = vmatprep.subr.mxu0 0.0
    %584 = vmatpush1.msra.mxu0 0.0
    %585 = vmatprep.subr.mxu0 0.0
    %586 = vmatpush1.msra.mxu0 0.0
    %587 = vmatprep.subr.mxu0 0.0
    %588 = vmatpush1.msra.mxu0 0.0
    %589 = vmatprep.subr.mxu0 0.0
    %590 = vmatpush1.msra.mxu0 0.0
    %591 = vmatprep.subr.mxu0 0.0
    %592 = vmatpush1.msra.mxu0 0.0
    %593 = vmatprep.subr.mxu0 0.0
    %594 = vmatpush1.msra.mxu0 0.0
    %595 = vmatprep.subr.mxu0 0.0
    %596 = vmatpush1.msra.mxu0 0.0
    %597 = vmatprep.subr.mxu0 0.0
    %598 = vmatpush1.msra.mxu0 0.0
    %599 = vmatprep.subr.mxu0 0.0
    %600 = vmatpush1.msra.mxu0 0.0
    %601 = vmatprep.subr.mxu0 0.0
    %602 = vmatpush1.msra.mxu0 0.0
    %603 = vmatprep.mubr.f32.mxu0 0.0
    %604 = vmatmul.mubr.f32.gmra.mrb[0].mxu0 %v537
    %v605 = vpop.f32.mrb[0].mxu0
    %v606 = vadd.f32 0.0, %v605
    %v607 = vpop.f32.mrb[0].mxu0
    %608 = vdwg.mxu0
    %609 = vrot.lane.b32.xlu0 %v270, 120
    %v610 = vpop.permute.xlu0 %609
    %611 = vrot.lane.b32.xlu0 %v270, 88
    %v612 = vpop.permute.xlu0 %611
    %v613 = vsel %vm281, %v610, 0
    %v615 = vsel %vm281, %v612, 0
    %617 = vmatprep.subr.mxu0 0.0
    %618 = vmatpush1.xpose.msra.mxu0 %v615
    %619 = vmatprep.subr.mxu0 0.0
    %620 = vmatpush1.xpose.msra.mxu0 0.0
    %621 = vmatprep.subr.mxu0 0.0
    %622 = vmatpush1.xpose.msra.mxu0 0.0
    %623 = vmatprep.subr.mxu0 0.0
    %624 = vmatpush1.xpose.msra.mxu0 0.0
    %625 = vmatprep.subr.mxu0 0.0
    %626 = vmatpush1.xpose.msra.mxu0 0.0
    %627 = vmatprep.subr.mxu0 0.0
    %628 = vmatpush1.xpose.msra.mxu0 0.0
    %629 = vmatprep.subr.mxu0 0.0
    %630 = vmatpush1.xpose.msra.mxu0 0.0
    %631 = vmatprep.subr.mxu0 0.0
    %632 = vmatpush1.xpose.msra.mxu0 0.0
    %633 = vmatprep.subr.mxu0 0.0
    %634 = vmatpush1.xpose.msra.mxu0 0.0
    %635 = vmatprep.subr.mxu0 0.0
    %636 = vmatpush1.xpose.msra.mxu0 0.0
    %637 = vmatprep.subr.mxu0 0.0
    %638 = vmatpush1.xpose.msra.mxu0 0.0
    %639 = vmatprep.subr.mxu0 0.0
    %640 = vmatpush1.xpose.msra.mxu0 0.0
    %641 = vmatprep.subr.mxu0 0.0
    %642 = vmatpush1.xpose.msra.mxu0 0.0
    %643 = vmatprep.subr.mxu0 0.0
    %644 = vmatpush1.xpose.msra.mxu0 0.0
    %645 = vmatprep.subr.mxu0 0.0
    %646 = vmatpush1.xpose.msra.mxu0 0.0
    %647 = vmatprep.subr.mxu0 0.0
    %648 = vmatpush1.xpose.msra.mxu0 0.0
    %649 = vmatprep.subr.mxu0 0.0
    %650 = vmatpush1.xpose.msra.mxu0 0.0
    %651 = vmatprep.subr.mxu0 0.0
    %652 = vmatpush1.xpose.msra.mxu0 0.0
    %653 = vmatprep.subr.mxu0 0.0
    %654 = vmatpush1.xpose.msra.mxu0 0.0
    %655 = vmatprep.subr.mxu0 0.0
    %656 = vmatpush1.xpose.msra.mxu0 0.0
    %657 = vmatprep.subr.mxu0 0.0
    %658 = vmatpush1.xpose.msra.mxu0 0.0
    %659 = vmatprep.subr.mxu0 0.0
    %660 = vmatpush1.xpose.msra.mxu0 0.0
    %661 = vmatprep.subr.mxu0 0.0
    %662 = vmatpush1.xpose.msra.mxu0 0.0
    %663 = vmatprep.subr.mxu0 0.0
    %664 = vmatpush1.xpose.msra.mxu0 0.0
    %665 = vmatprep.subr.mxu0 0.0
    %666 = vmatpush1.xpose.msra.mxu0 0.0
    %667 = vmatprep.subr.mxu0 0.0
    %668 = vmatpush1.xpose.msra.mxu0 0.0
    %669 = vmatprep.subr.mxu0 0.0
    %670 = vmatpush1.xpose.msra.mxu0 0.0
    %671 = vmatprep.subr.mxu0 0.0
    %672 = vmatpush1.xpose.msra.mxu0 0.0
    %673 = vmatprep.subr.mxu0 0.0
    %674 = vmatpush1.xpose.msra.mxu0 0.0
    %675 = vmatprep.subr.mxu0 0.0
    %676 = vmatpush1.xpose.msra.mxu0 0.0
    %677 = vmatprep.subr.mxu0 0.0
    %678 = vmatpush1.xpose.msra.mxu0 0.0
    %679 = vmatprep.subr.mxu0 0.0
    %680 = vmatpush1.xpose.msra.mxu0 0.0
    %681 = vmatprep.mubr.f32.mxu0 0.0
    %682 = vmatmul.mubr.f32.gmra.mrb[0].mxu0 %v613
    %v683 = vpop.f32.mrb[0].mxu0
    %v684 = vadd.f32 0.0, %v683
    %v685 = vpop.f32.mrb[0].mxu0
    %686 = vdwg.mxu0
    %687 = vrot.lane.b32.xlu0 %v275, 120
    %v688 = vpop.permute.xlu0 %687
    %689 = vrot.lane.b32.xlu0 %v275, 88
    %v690 = vpop.permute.xlu0 %689
    %v691 = vsel %vm281, %v688, 0
    %v693 = vsel %vm281, %v690, 0
    %695 = vmatprep.subr.mxu0 0.0
    %696 = vmatpush1.xpose.msra.mxu0 %v693
    %697 = vmatprep.subr.mxu0 0.0
    %698 = vmatpush1.xpose.msra.mxu0 0.0
    %699 = vmatprep.subr.mxu0 0.0
    %700 = vmatpush1.xpose.msra.mxu0 0.0
    %701 = vmatprep.subr.mxu0 0.0
    %702 = vmatpush1.xpose.msra.mxu0 0.0
    %703 = vmatprep.subr.mxu0 0.0
    %704 = vmatpush1.xpose.msra.mxu0 0.0
    %705 = vmatprep.subr.mxu0 0.0
    %706 = vmatpush1.xpose.msra.mxu0 0.0
    %707 = vmatprep.subr.mxu0 0.0
    %708 = vmatpush1.xpose.msra.mxu0 0.0
    %709 = vmatprep.subr.mxu0 0.0
    %710 = vmatpush1.xpose.msra.mxu0 0.0
    %711 = vmatprep.subr.mxu0 0.0
    %712 = vmatpush1.xpose.msra.mxu0 0.0
    %713 = vmatprep.subr.mxu0 0.0
    %714 = vmatpush1.xpose.msra.mxu0 0.0
    %715 = vmatprep.subr.mxu0 0.0
    %716 = vmatpush1.xpose.msra.mxu0 0.0
    %717 = vmatprep.subr.mxu0 0.0
    %718 = vmatpush1.xpose.msra.mxu0 0.0
    %719 = vmatprep.subr.mxu0 0.0
    %720 = vmatpush1.xpose.msra.mxu0 0.0
    %721 = vmatprep.subr.mxu0 0.0
    %722 = vmatpush1.xpose.msra.mxu0 0.0
    %723 = vmatprep.subr.mxu0 0.0
    %724 = vmatpush1.xpose.msra.mxu0 0.0
    %725 = vmatprep.subr.mxu0 0.0
    %726 = vmatpush1.xpose.msra.mxu0 0.0
    %727 = vmatprep.subr.mxu0 0.0
    %728 = vmatpush1.xpose.msra.mxu0 0.0
    %729 = vmatprep.subr.mxu0 0.0
    %730 = vmatpush1.xpose.msra.mxu0 0.0
    %731 = vmatprep.subr.mxu0 0.0
    %732 = vmatpush1.xpose.msra.mxu0 0.0
    %733 = vmatprep.subr.mxu0 0.0
    %734 = vmatpush1.xpose.msra.mxu0 0.0
    %735 = vmatprep.subr.mxu0 0.0
    %736 = vmatpush1.xpose.msra.mxu0 0.0
    %737 = vmatprep.subr.mxu0 0.0
    %738 = vmatpush1.xpose.msra.mxu0 0.0
    %739 = vmatprep.subr.mxu0 0.0
    %740 = vmatpush1.xpose.msra.mxu0 0.0
    %741 = vmatprep.subr.mxu0 0.0
    %742 = vmatpush1.xpose.msra.mxu0 0.0
    %743 = vmatprep.subr.mxu0 0.0
    %744 = vmatpush1.xpose.msra.mxu0 0.0
    %745 = vmatprep.subr.mxu0 0.0
    %746 = vmatpush1.xpose.msra.mxu0 0.0
    %747 = vmatprep.subr.mxu0 0.0
    %748 = vmatpush1.xpose.msra.mxu0 0.0
    %749 = vmatprep.subr.mxu0 0.0
    %750 = vmatpush1.xpose.msra.mxu0 0.0
    %751 = vmatprep.subr.mxu0 0.0
    %752 = vmatpush1.xpose.msra.mxu0 0.0
    %753 = vmatprep.subr.mxu0 0.0
    %754 = vmatpush1.xpose.msra.mxu0 0.0
    %755 = vmatprep.subr.mxu0 0.0
    %756 = vmatpush1.xpose.msra.mxu0 0.0
    %757 = vmatprep.subr.mxu0 0.0
    %758 = vmatpush1.xpose.msra.mxu0 0.0
    %759 = vmatprep.mubr.f32.mxu0 0.0
    %760 = vmatmul.mubr.f32.gmra.mrb[0].mxu0 %v691
    %v761 = vpop.f32.mrb[0].mxu0
    %v762 = vadd.f32 0.0, %v761
    %v763 = vpop.f32.mrb[0].mxu0
    %764 = vdwg.mxu0
    %v765 = vmul.f32 %v684, 0.35355338
    %v766 = vmul.f32 %v762, 0.35355338
    %v767 = vsel %vm281, %v765, -inf
    %768 = vmax.xlane.f32.xlu0 %v767
    %v769 = vpop.xlane.xlu0 %768
    %v770 = vsel %vm281, %v766, -inf
    %771 = vmax.xlane.f32.xlu0 %v770
    %v772 = vpop.xlane.xlu0 %771
    %v773 = vsub.f32 %v765, %v769
    %v774 = vsub.f32 %v766, %v772
    %v775 = vmul.f32 %v773, 1.442695
    %v776 = vpow.pop %v775
    %v777 = vmul.f32 %v774, 1.442695
    %v778 = vpow.pop %v777
    %v779 = vsel %vm281, %v776, 0.0
    %780 = vadd.xlane.f32.xlu0 %v779
    %v781 = vpop.xlane.xlu0 %780
    %v782 = vsel %vm281, %v778, 0.0
    %783 = vadd.xlane.f32.xlu0 %v782
    %v784 = vpop.xlane.xlu0 %783
    %v785 = vrcp.pop %v781
    %v786 = vrcp.pop %v784
    %v787 = vmul.f32 %v776, %v785
    %v788 = vmul.f32 %v778, %v786
    %789 = vrot.lane.b32.xlu0 %v270, 56
    %v790 = vpop.permute.xlu0 %789
    %v793 = vsel %vm281, %v787, 0
    %795 = vmatprep.subr.mxu0 0.0
    %796 = vmatpush1.msra.mxu0 %v790
    %797 = vmatprep.subr.mxu0 0.0
    %798 = vmatpush1.msra.mxu0 0.0
    %799 = vmatprep.subr.mxu0 0.0
    %800 = vmatpush1.msra.mxu0 0.0
    %801 = vmatprep.subr.mxu0 0.0
    %802 = vmatpush1.msra.mxu0 0.0
    %803 = vmatprep.subr.mxu0 0.0
    %804 = vmatpush1.msra.mxu0 0.0
    %805 = vmatprep.subr.mxu0 0.0
    %806 = vmatpush1.msra.mxu0 0.0
    %807 = vmatprep.subr.mxu0 0.0
    %808 = vmatpush1.msra.mxu0 0.0
    %809 = vmatprep.subr.mxu0 0.0
    %810 = vmatpush1.msra.mxu0 0.0
    %811 = vmatprep.subr.mxu0 0.0
    %812 = vmatpush1.msra.mxu0 0.0
    %813 = vmatprep.subr.mxu0 0.0
    %814 = vmatpush1.msra.mxu0 0.0
    %815 = vmatprep.subr.mxu0 0.0
    %816 = vmatpush1.msra.mxu0 0.0
    %817 = vmatprep.subr.mxu0 0.0
    %818 = vmatpush1.msra.mxu0 0.0
    %819 = vmatprep.subr.mxu0 0.0
    %820 = vmatpush1.msra.mxu0 0.0
    %821 = vmatprep.subr.mxu0 0.0
    %822 = vmatpush1.msra.mxu0 0.0
    %823 = vmatprep.subr.mxu0 0.0
    %824 = vmatpush1.msra.mxu0 0.0
    %825 = vmatprep.subr.mxu0 0.0
    %826 = vmatpush1.msra.mxu0 0.0
    %827 = vmatprep.subr.mxu0 0.0
    %828 = vmatpush1.msra.mxu0 0.0
    %829 = vmatprep.subr.mxu0 0.0
    %830 = vmatpush1.msra.mxu0 0.0
    %831 = vmatprep.subr.mxu0 0.0
    %832 = vmatpush1.msra.mxu0 0.0
    %833 = vmatprep.subr.mxu0 0.0
    %834 = vmatpush1.msra.mxu0 0.0
    %835 = vmatprep.subr.mxu0 0.0
    %836 = vmatpush1.msra.mxu0 0.0
    %837 = vmatprep.subr.mxu0 0.0
    %838 = vmatpush1.msra.mxu0 0.0
    %839 = vmatprep.subr.mxu0 0.0
    %840 = vmatpush1.msra.mxu0 0.0
    %841 = vmatprep.subr.mxu0 0.0
    %842 = vmatpush1.msra.mxu0 0.0
    %843 = vmatprep.subr.mxu0 0.0
    %844 = vmatpush1.msra.mxu0 0.0
    %845 = vmatprep.subr.mxu0 0.0
    %846 = vmatpush1.msra.mxu0 0.0
    %847 = vmatprep.subr.mxu0 0.0
    %848 = vmatpush1.msra.mxu0 0.0
    %849 = vmatprep.subr.mxu0 0.0
    %850 = vmatpush1.msra.mxu0 0.0
    %851 = vmatprep.subr.mxu0 0.0
    %852 = vmatpush1.msra.mxu0 0.0
    %853 = vmatprep.subr.mxu0 0.0
    %854 = vmatpush1.msra.mxu0 0.0
    %855 = vmatprep.subr.mxu0 0.0
    %856 = vmatpush1.msra.mxu0 0.0
    %857 = vmatprep.subr.mxu0 0.0
    %858 = vmatpush1.msra.mxu0 0.0
    %859 = vmatprep.mubr.f32.mxu0 0.0
    %860 = vmatmul.mubr.f32.gmra.mrb[0].mxu0 %v793
    %v861 = vpop.f32.mrb[0].mxu0
    %v862 = vadd.f32 0.0, %v861
    %v863 = vpop.f32.mrb[0].mxu0
    %864 = vdwg.mxu0
    %865 = vrot.lane.b32.xlu0 %v275, 56
    %v866 = vpop.permute.xlu0 %865
    %v869 = vsel %vm281, %v788, 0
    %871 = vmatprep.subr.mxu0 0.0
    %872 = vmatpush1.msra.mxu0 %v866
    %873 = vmatprep.subr.mxu0 0.0
    %874 = vmatpush1.msra.mxu0 0.0
    %875 = vmatprep.subr.mxu0 0.0
    %876 = vmatpush1.msra.mxu0 0.0
    %877 = vmatprep.subr.mxu0 0.0
    %878 = vmatpush1.msra.mxu0 0.0
    %879 = vmatprep.subr.mxu0 0.0
    %880 = vmatpush1.msra.mxu0 0.0
    %881 = vmatprep.subr.mxu0 0.0
    %882 = vmatpush1.msra.mxu0 0.0
    %883 = vmatprep.subr.mxu0 0.0
    %884 = vmatpush1.msra.mxu0 0.0
    %885 = vmatprep.subr.mxu0 0.0
    %886 = vmatpush1.msra.mxu0 0.0
    %887 = vmatprep.subr.mxu0 0.0
    %888 = vmatpush1.msra.mxu0 0.0
    %889 = vmatprep.subr.mxu0 0.0
    %890 = vmatpush1.msra.mxu0 0.0
    %891 = vmatprep.subr.mxu0 0.0
    %892 = vmatpush1.msra.mxu0 0.0
    %893 = vmatprep.subr.mxu0 0.0
    %894 = vmatpush1.msra.mxu0 0.0
    %895 = vmatprep.subr.mxu0 0.0
    %896 = vmatpush1.msra.mxu0 0.0
    %897 = vmatprep.subr.mxu0 0.0
    %898 = vmatpush1.msra.mxu0 0.0
    %899 = vmatprep.subr.mxu0 0.0
    %900 = vmatpush1.msra.mxu0 0.0
    %901 = vmatprep.subr.mxu0 0.0
    %902 = vmatpush1.msra.mxu0 0.0
    %903 = vmatprep.subr.mxu0 0.0
    %904 = vmatpush1.msra.mxu0 0.0
    %905 = vmatprep.subr.mxu0 0.0
    %906 = vmatpush1.msra.mxu0 0.0
    %907 = vmatprep.subr.mxu0 0.0
    %908 = vmatpush1.msra.mxu0 0.0
    %909 = vmatprep.subr.mxu0 0.0
    %910 = vmatpush1.msra.mxu0 0.0
    %911 = vmatprep.subr.mxu0 0.0
    %912 = vmatpush1.msra.mxu0 0.0
    %913 = vmatprep.subr.mxu0 0.0
    %914 = vmatpush1.msra.mxu0 0.0
    %915 = vmatprep.subr.mxu0 0.0
    %916 = vmatpush1.msra.mxu0 0.0
    %917 = vmatprep.subr.mxu0 0.0
    %918 = vmatpush1.msra.mxu0 0.0
    %919 = vmatprep.subr.mxu0 0.0
    %920 = vmatpush1.msra.mxu0 0.0
    %921 = vmatprep.subr.mxu0 0.0
    %922 = vmatpush1.msra.mxu0 0.0
    %923 = vmatprep.subr.mxu0 0.0
    %924 = vmatpush1.msra.mxu0 0.0
    %925 = vmatprep.subr.mxu0 0.0
    %926 = vmatpush1.msra.mxu0 0.0
    %927 = vmatprep.subr.mxu0 0.0
    %928 = vmatpush1.msra.mxu0 0.0
    %929 = vmatprep.subr.mxu0 0.0
    %930 = vmatpush1.msra.mxu0 0.0
    %931 = vmatprep.subr.mxu0 0.0
    %932 = vmatpush1.msra.mxu0 0.0
    %933 = vmatprep.subr.mxu0 0.0
    %934 = vmatpush1.msra.mxu0 0.0
    %935 = vmatprep.mubr.f32.mxu0 0.0
    %936 = vmatmul.mubr.f32.gmra.mrb[0].mxu0 %v869
    %v937 = vpop.f32.mrb[0].mxu0
    %v938 = vadd.f32 0.0, %v937
    %v939 = vpop.f32.mrb[0].mxu0
    %940 = vdwg.mxu0
    %941 = vrot.lane.b32.xlu0 %v270, 112
    %v942 = vpop.permute.xlu0 %941
    %943 = vrot.lane.b32.xlu0 %v270, 80
    %v944 = vpop.permute.xlu0 %943
    %v945 = vsel %vm281, %v942, 0
    %v947 = vsel %vm281, %v944, 0
    %949 = vmatprep.subr.mxu0 0.0
    %950 = vmatpush1.xpose.msra.mxu0 %v947
    %951 = vmatprep.subr.mxu0 0.0
    %952 = vmatpush1.xpose.msra.mxu0 0.0
    %953 = vmatprep.subr.mxu0 0.0
    %954 = vmatpush1.xpose.msra.mxu0 0.0
    %955 = vmatprep.subr.mxu0 0.0
    %956 = vmatpush1.xpose.msra.mxu0 0.0
    %957 = vmatprep.subr.mxu0 0.0
    %958 = vmatpush1.xpose.msra.mxu0 0.0
    %959 = vmatprep.subr.mxu0 0.0
    %960 = vmatpush1.xpose.msra.mxu0 0.0
    %961 = vmatprep.subr.mxu0 0.0
    %962 = vmatpush1.xpose.msra.mxu0 0.0
    %963 = vmatprep.subr.mxu0 0.0
    %964 = vmatpush1.xpose.msra.mxu0 0.0
    %965 = vmatprep.subr.mxu0 0.0
    %966 = vmatpush1.xpose.msra.mxu0 0.0
    %967 = vmatprep.subr.mxu0 0.0
    %968 = vmatpush1.xpose.msra.mxu0 0.0
    %969 = vmatprep.subr.mxu0 0.0
    %970 = vmatpush1.xpose.msra.mxu0 0.0
    %971 = vmatprep.subr.mxu0 0.0
    %972 = vmatpush1.xpose.msra.mxu0 0.0
    %973 = vmatprep.subr.mxu0 0.0
    %974 = vmatpush1.xpose.msra.mxu0 0.0
    %975 = vmatprep.subr.mxu0 0.0
    %976 = vmatpush1.xpose.msra.mxu0 0.0
    %977 = vmatprep.subr.mxu0 0.0
    %978 = vmatpush1.xpose.msra.mxu0 0.0
    %979 = vmatprep.subr.mxu0 0.0
    %980 = vmatpush1.xpose.msra.mxu0 0.0
    %981 = vmatprep.subr.mxu0 0.0
    %982 = vmatpush1.xpose.msra.mxu0 0.0
    %983 = vmatprep.subr.mxu0 0.0
    %984 = vmatpush1.xpose.msra.mxu0 0.0
    %985 = vmatprep.subr.mxu0 0.0
    %986 = vmatpush1.xpose.msra.mxu0 0.0
    %987 = vmatprep.subr.mxu0 0.0
    %988 = vmatpush1.xpose.msra.mxu0 0.0
    %989 = vmatprep.subr.mxu0 0.0
    %990 = vmatpush1.xpose.msra.mxu0 0.0
    %991 = vmatprep.subr.mxu0 0.0
    %992 = vmatpush1.xpose.msra.mxu0 0.0
    %993 = vmatprep.subr.mxu0 0.0
    %994 = vmatpush1.xpose.msra.mxu0 0.0
    %995 = vmatprep.subr.mxu0 0.0
    %996 = vmatpush1.xpose.msra.mxu0 0.0
    %997 = vmatprep.subr.mxu0 0.0
    %998 = vmatpush1.xpose.msra.mxu0 0.0
    %999 = vmatprep.subr.mxu0 0.0
    %1000 = vmatpush1.xpose.msra.mxu0 0.0
    %1001 = vmatprep.subr.mxu0 0.0
    %1002 = vmatpush1.xpose.msra.mxu0 0.0
    %1003 = vmatprep.subr.mxu0 0.0
    %1004 = vmatpush1.xpose.msra.mxu0 0.0
    %1005 = vmatprep.subr.mxu0 0.0
    %1006 = vmatpush1.xpose.msra.mxu0 0.0
    %1007 = vmatprep.subr.mxu0 0.0
    %1008 = vmatpush1.xpose.msra.mxu0 0.0
    %1009 = vmatprep.subr.mxu0 0.0
    %1010 = vmatpush1.xpose.msra.mxu0 0.0
    %1011 = vmatprep.subr.mxu0 0.0
    %1012 = vmatpush1.xpose.msra.mxu0 0.0
    %1013 = vmatprep.mubr.f32.mxu0 0.0
    %1014 = vmatmul.mubr.f32.gmra.mrb[0].mxu0 %v945
    %v1015 = vpop.f32.mrb[0].mxu0
    %v1016 = vadd.f32 0.0, %v1015
    %v1017 = vpop.f32.mrb[0].mxu0
    %1018 = vdwg.mxu0
    %1019 = vrot.lane.b32.xlu0 %v275, 112
    %v1020 = vpop.permute.xlu0 %1019
    %1021 = vrot.lane.b32.xlu0 %v275, 80
    %v1022 = vpop.permute.xlu0 %1021
    %v1023 = vsel %vm281, %v1020, 0
    %v1025 = vsel %vm281, %v1022, 0
    %1027 = vmatprep.subr.mxu0 0.0
    %1028 = vmatpush1.xpose.msra.mxu0 %v1025
    %1029 = vmatprep.subr.mxu0 0.0
    %1030 = vmatpush1.xpose.msra.mxu0 0.0
    %1031 = vmatprep.subr.mxu0 0.0
    %1032 = vmatpush1.xpose.msra.mxu0 0.0
    %1033 = vmatprep.subr.mxu0 0.0
    %1034 = vmatpush1.xpose.msra.mxu0 0.0
    %1035 = vmatprep.subr.mxu0 0.0
    %1036 = vmatpush1.xpose.msra.mxu0 0.0
    %1037 = vmatprep.subr.mxu0 0.0
    %1038 = vmatpush1.xpose.msra.mxu0 0.0
    %1039 = vmatprep.subr.mxu0 0.0
    %1040 = vmatpush1.xpose.msra.mxu0 0.0
    %1041 = vmatprep.subr.mxu0 0.0
    %1042 = vmatpush1.xpose.msra.mxu0 0.0
    %1043 = vmatprep.subr.mxu0 0.0
    %1044 = vmatpush1.xpose.msra.mxu0 0.0
    %1045 = vmatprep.subr.mxu0 0.0
    %1046 = vmatpush1.xpose.msra.mxu0 0.0
    %1047 = vmatprep.subr.mxu0 0.0
    %1048 = vmatpush1.xpose.msra.mxu0 0.0
    %1049 = vmatprep.subr.mxu0 0.0
    %1050 = vmatpush1.xpose.msra.mxu0 0.0
    %1051 = vmatprep.subr.mxu0 0.0
    %1052 = vmatpush1.xpose.msra.mxu0 0.0
    %1053 = vmatprep.subr.mxu0 0.0
    %1054 = vmatpush1.xpose.msra.mxu0 0.0
    %1055 = vmatprep.subr.mxu0 0.0
    %1056 = vmatpush1.xpose.msra.mxu0 0.0
    %1057 = vmatprep.subr.mxu0 0.0
    %1058 = vmatpush1.xpose.msra.mxu0 0.0
    %1059 = vmatprep.subr.mxu0 0.0
    %1060 = vmatpush1.xpose.msra.mxu0 0.0
    %1061 = vmatprep.subr.mxu0 0.0
    %1062 = vmatpush1.xpose.msra.mxu0 0.0
    %1063 = vmatprep.subr.mxu0 0.0
    %1064 = vmatpush1.xpose.msra.mxu0 0.0
    %1065 = vmatprep.subr.mxu0 0.0
    %1066 = vmatpush1.xpose.msra.mxu0 0.0
    %1067 = vmatprep.subr.mxu0 0.0
    %1068 = vmatpush1.xpose.msra.mxu0 0.0
    %1069 = vmatprep.subr.mxu0 0.0
    %1070 = vmatpush1.xpose.msra.mxu0 0.0
    %1071 = vmatprep.subr.mxu0 0.0
    %1072 = vmatpush1.xpose.msra.mxu0 0.0
    %1073 = vmatprep.subr.mxu0 0.0
    %1074 = vmatpush1.xpose.msra.mxu0 0.0
    %1075 = vmatprep.subr.mxu0 0.0
    %1076 = vmatpush1.xpose.msra.mxu0 0.0
    %1077 = vmatprep.subr.mxu0 0.0
    %1078 = vmatpush1.xpose.msra.mxu0 0.0
    %1079 = vmatprep.subr.mxu0 0.0
    %1080 = vmatpush1.xpose.msra.mxu0 0.0
    %1081 = vmatprep.subr.mxu0 0.0
    %1082 = vmatpush1.xpose.msra.mxu0 0.0
    %1083 = vmatprep.subr.mxu0 0.0
    %1084 = vmatpush1.xpose.msra.mxu0 0.0
    %1085 = vmatprep.subr.mxu0 0.0
    %1086 = vmatpush1.xpose.msra.mxu0 0.0
    %1087 = vmatprep.subr.mxu0 0.0
    %1088 = vmatpush1.xpose.msra.mxu0 0.0
    %1089 = vmatprep.subr.mxu0 0.0
    %1090 = vmatpush1.xpose.msra.mxu0 0.0
    %1091 = vmatprep.mubr.f32.mxu0 0.0
    %1092 = vmatmul.mubr.f32.gmra.mrb[0].mxu0 %v1023
    %v1093 = vpop.f32.mrb[0].mxu0
    %v1094 = vadd.f32 0.0, %v1093
    %v1095 = vpop.f32.mrb[0].mxu0
    %1096 = vdwg.mxu0
    %v1097 = vmul.f32 %v1016, 0.35355338
    %v1098 = vmul.f32 %v1094, 0.35355338
    %v1099 = vsel %vm281, %v1097, -inf
    %1100 = vmax.xlane.f32.xlu0 %v1099
    %v1101 = vpop.xlane.xlu0 %1100
    %v1102 = vsel %vm281, %v1098, -inf
    %1103 = vmax.xlane.f32.xlu0 %v1102
    %v1104 = vpop.xlane.xlu0 %1103
    %v1105 = vsub.f32 %v1097, %v1101
    %v1106 = vsub.f32 %v1098, %v1104
    %v1107 = vmul.f32 %v1105, 1.442695
    %v1108 = vpow.pop %v1107
    %v1109 = vmul.f32 %v1106, 1.442695
    %v1110 = vpow.pop %v1109
    %v1111 = vsel %vm281, %v1108, 0.0
    %1112 = vadd.xlane.f32.xlu0 %v1111
    %v1113 = vpop.xlane.xlu0 %1112
    %v1114 = vsel %vm281, %v1110, 0.0
    %1115 = vadd.xlane.f32.xlu0 %v1114
    %v1116 = vpop.xlane.xlu0 %1115
    %v1117 = vrcp.pop %v1113
    %v1118 = vrcp.pop %v1116
    %v1119 = vmul.f32 %v1108, %v1117
    %v1120 = vmul.f32 %v1110, %v1118
    %1121 = vrot.lane.b32.xlu0 %v270, 48
    %v1122 = vpop.permute.xlu0 %1121
    %v1125 = vsel %vm281, %v1119, 0
    %1127 = vmatprep.subr.mxu0 0.0
    %1128 = vmatpush1.msra.mxu0 %v1122
    %1129 = vmatprep.subr.mxu0 0.0
    %1130 = vmatpush1.msra.mxu0 0.0
    %1131 = vmatprep.subr.mxu0 0.0
    %1132 = vmatpush1.msra.mxu0 0.0
    %1133 = vmatprep.subr.mxu0 0.0
    %1134 = vmatpush1.msra.mxu0 0.0
    %1135 = vmatprep.subr.mxu0 0.0
    %1136 = vmatpush1.msra.mxu0 0.0
    %1137 = vmatprep.subr.mxu0 0.0
    %1138 = vmatpush1.msra.mxu0 0.0
    %1139 = vmatprep.subr.mxu0 0.0
    %1140 = vmatpush1.msra.mxu0 0.0
    %1141 = vmatprep.subr.mxu0 0.0
    %1142 = vmatpush1.msra.mxu0 0.0
    %1143 = vmatprep.subr.mxu0 0.0
    %1144 = vmatpush1.msra.mxu0 0.0
    %1145 = vmatprep.subr.mxu0 0.0
    %1146 = vmatpush1.msra.mxu0 0.0
    %1147 = vmatprep.subr.mxu0 0.0
    %1148 = vmatpush1.msra.mxu0 0.0
    %1149 = vmatprep.subr.mxu0 0.0
    %1150 = vmatpush1.msra.mxu0 0.0
    %1151 = vmatprep.subr.mxu0 0.0
    %1152 = vmatpush1.msra.mxu0 0.0
    %1153 = vmatprep.subr.mxu0 0.0
    %1154 = vmatpush1.msra.mxu0 0.0
    %1155 = vmatprep.subr.mxu0 0.0
    %1156 = vmatpush1.msra.mxu0 0.0
    %1157 = vmatprep.subr.mxu0 0.0
    %1158 = vmatpush1.msra.mxu0 0.0
    %1159 = vmatprep.subr.mxu0 0.0
    %1160 = vmatpush1.msra.mxu0 0.0
    %1161 = vmatprep.subr.mxu0 0.0
    %1162 = vmatpush1.msra.mxu0 0.0
    %1163 = vmatprep.subr.mxu0 0.0
    %1164 = vmatpush1.msra.mxu0 0.0
    %1165 = vmatprep.subr.mxu0 0.0
    %1166 = vmatpush1.msra.mxu0 0.0
    %1167 = vmatprep.subr.mxu0 0.0
    %1168 = vmatpush1.msra.mxu0 0.0
    %1169 = vmatprep.subr.mxu0 0.0
    %1170 = vmatpush1.msra.mxu0 0.0
    %1171 = vmatprep.subr.mxu0 0.0
    %1172 = vmatpush1.msra.mxu0 0.0
    %1173 = vmatprep.subr.mxu0 0.0
    %1174 = vmatpush1.msra.mxu0 0.0
    %1175 = vmatprep.subr.mxu0 0.0
    %1176 = vmatpush1.msra.mxu0 0.0
    %1177 = vmatprep.subr.mxu0 0.0
    %1178 = vmatpush1.msra.mxu0 0.0
    %1179 = vmatprep.subr.mxu0 0.0
    %1180 = vmatpush1.msra.mxu0 0.0
    %1181 = vmatprep.subr.mxu0 0.0
    %1182 = vmatpush1.msra.mxu0 0.0
    %1183 = vmatprep.subr.mxu0 0.0
    %1184 = vmatpush1.msra.mxu0 0.0
    %1185 = vmatprep.subr.mxu0 0.0
    %1186 = vmatpush1.msra.mxu0 0.0
    %1187 = vmatprep.subr.mxu0 0.0
    %1188 = vmatpush1.msra.mxu0 0.0
    %1189 = vmatprep.subr.mxu0 0.0
    %1190 = vmatpush1.msra.mxu0 0.0
    %1191 = vmatprep.mubr.f32.mxu0 0.0
    %1192 = vmatmul.mubr.f32.gmra.mrb[0].mxu0 %v1125
    %v1193 = vpop.f32.mrb[0].mxu0
    %v1194 = vadd.f32 0.0, %v1193
    %v1195 = vpop.f32.mrb[0].mxu0
    %1196 = vdwg.mxu0
    %1197 = vrot.lane.b32.xlu0 %v275, 48
    %v1198 = vpop.permute.xlu0 %1197
    %v1201 = vsel %vm281, %v1120, 0
    %1203 = vmatprep.subr.mxu0 0.0
    %1204 = vmatpush1.msra.mxu0 %v1198
    %1205 = vmatprep.subr.mxu0 0.0
    %1206 = vmatpush1.msra.mxu0 0.0
    %1207 = vmatprep.subr.mxu0 0.0
    %1208 = vmatpush1.msra.mxu0 0.0
    %1209 = vmatprep.subr.mxu0 0.0
    %1210 = vmatpush1.msra.mxu0 0.0
    %1211 = vmatprep.subr.mxu0 0.0
    %1212 = vmatpush1.msra.mxu0 0.0
    %1213 = vmatprep.subr.mxu0 0.0
    %1214 = vmatpush1.msra.mxu0 0.0
    %1215 = vmatprep.subr.mxu0 0.0
    %1216 = vmatpush1.msra.mxu0 0.0
    %1217 = vmatprep.subr.mxu0 0.0
    %1218 = vmatpush1.msra.mxu0 0.0
    %1219 = vmatprep.subr.mxu0 0.0
    %1220 = vmatpush1.msra.mxu0 0.0
    %1221 = vmatprep.subr.mxu0 0.0
    %1222 = vmatpush1.msra.mxu0 0.0
    %1223 = vmatprep.subr.mxu0 0.0
    %1224 = vmatpush1.msra.mxu0 0.0
    %1225 = vmatprep.subr.mxu0 0.0
    %1226 = vmatpush1.msra.mxu0 0.0
    %1227 = vmatprep.subr.mxu0 0.0
    %1228 = vmatpush1.msra.mxu0 0.0
    %1229 = vmatprep.subr.mxu0 0.0
    %1230 = vmatpush1.msra.mxu0 0.0
    %1231 = vmatprep.subr.mxu0 0.0
    %1232 = vmatpush1.msra.mxu0 0.0
    %1233 = vmatprep.subr.mxu0 0.0
    %1234 = vmatpush1.msra.mxu0 0.0
    %1235 = vmatprep.subr.mxu0 0.0
    %1236 = vmatpush1.msra.mxu0 0.0
    %1237 = vmatprep.subr.mxu0 0.0
    %1238 = vmatpush1.msra.mxu0 0.0
    %1239 = vmatprep.subr.mxu0 0.0
    %1240 = vmatpush1.msra.mxu0 0.0
    %1241 = vmatprep.subr.mxu0 0.0
    %1242 = vmatpush1.msra.mxu0 0.0
    %1243 = vmatprep.subr.mxu0 0.0
    %1244 = vmatpush1.msra.mxu0 0.0
    %1245 = vmatprep.subr.mxu0 0.0
    %1246 = vmatpush1.msra.mxu0 0.0
    %1247 = vmatprep.subr.mxu0 0.0
    %1248 = vmatpush1.msra.mxu0 0.0
    %1249 = vmatprep.subr.mxu0 0.0
    %1250 = vmatpush1.msra.mxu0 0.0
    %1251 = vmatprep.subr.mxu0 0.0
    %1252 = vmatpush1.msra.mxu0 0.0
    %1253 = vmatprep.subr.mxu0 0.0
    %1254 = vmatpush1.msra.mxu0 0.0
    %1255 = vmatprep.subr.mxu0 0.0
    %1256 = vmatpush1.msra.mxu0 0.0
    %1257 = vmatprep.subr.mxu0 0.0
    %1258 = vmatpush1.msra.mxu0 0.0
    %1259 = vmatprep.subr.mxu0 0.0
    %1260 = vmatpush1.msra.mxu0 0.0
    %1261 = vmatprep.subr.mxu0 0.0
    %1262 = vmatpush1.msra.mxu0 0.0
    %1263 = vmatprep.subr.mxu0 0.0
    %1264 = vmatpush1.msra.mxu0 0.0
    %1265 = vmatprep.subr.mxu0 0.0
    %1266 = vmatpush1.msra.mxu0 0.0
    %1267 = vmatprep.mubr.f32.mxu0 0.0
    %1268 = vmatmul.mubr.f32.gmra.mrb[0].mxu0 %v1201
    %v1269 = vpop.f32.mrb[0].mxu0
    %v1270 = vadd.f32 0.0, %v1269
    %v1271 = vpop.f32.mrb[0].mxu0
    %1272 = vdwg.mxu0
    %1273 = vrot.lane.b32.xlu0 %v270, 104
    %v1274 = vpop.permute.xlu0 %1273
    %1275 = vrot.lane.b32.xlu0 %v270, 72
    %v1276 = vpop.permute.xlu0 %1275
    %v1277 = vsel %vm281, %v1274, 0
    %v1279 = vsel %vm281, %v1276, 0
    %1281 = vmatprep.subr.mxu0 0.0
    %1282 = vmatpush1.xpose.msra.mxu0 %v1279
    %1283 = vmatprep.subr.mxu0 0.0
    %1284 = vmatpush1.xpose.msra.mxu0 0.0
    %1285 = vmatprep.subr.mxu0 0.0
    %1286 = vmatpush1.xpose.msra.mxu0 0.0
    %1287 = vmatprep.subr.mxu0 0.0
    %1288 = vmatpush1.xpose.msra.mxu0 0.0
    %1289 = vmatprep.subr.mxu0 0.0
    %1290 = vmatpush1.xpose.msra.mxu0 0.0
    %1291 = vmatprep.subr.mxu0 0.0
    %1292 = vmatpush1.xpose.msra.mxu0 0.0
    %1293 = vmatprep.subr.mxu0 0.0
    %1294 = vmatpush1.xpose.msra.mxu0 0.0
    %1295 = vmatprep.subr.mxu0 0.0
    %1296 = vmatpush1.xpose.msra.mxu0 0.0
    %1297 = vmatprep.subr.mxu0 0.0
    %1298 = vmatpush1.xpose.msra.mxu0 0.0
    %1299 = vmatprep.subr.mxu0 0.0
    %1300 = vmatpush1.xpose.msra.mxu0 0.0
    %1301 = vmatprep.subr.mxu0 0.0
    %1302 = vmatpush1.xpose.msra.mxu0 0.0
    %1303 = vmatprep.subr.mxu0 0.0
    %1304 = vmatpush1.xpose.msra.mxu0 0.0
    %1305 = vmatprep.subr.mxu0 0.0
    %1306 = vmatpush1.xpose.msra.mxu0 0.0
    %1307 = vmatprep.subr.mxu0 0.0
    %1308 = vmatpush1.xpose.msra.mxu0 0.0
    %1309 = vmatprep.subr.mxu0 0.0
    %1310 = vmatpush1.xpose.msra.mxu0 0.0
    %1311 = vmatprep.subr.mxu0 0.0
    %1312 = vmatpush1.xpose.msra.mxu0 0.0
    %1313 = vmatprep.subr.mxu0 0.0
    %1314 = vmatpush1.xpose.msra.mxu0 0.0
    %1315 = vmatprep.subr.mxu0 0.0
    %1316 = vmatpush1.xpose.msra.mxu0 0.0
    %1317 = vmatprep.subr.mxu0 0.0
    %1318 = vmatpush1.xpose.msra.mxu0 0.0
    %1319 = vmatprep.subr.mxu0 0.0
    %1320 = vmatpush1.xpose.msra.mxu0 0.0
    %1321 = vmatprep.subr.mxu0 0.0
    %1322 = vmatpush1.xpose.msra.mxu0 0.0
    %1323 = vmatprep.subr.mxu0 0.0
    %1324 = vmatpush1.xpose.msra.mxu0 0.0
    %1325 = vmatprep.subr.mxu0 0.0
    %1326 = vmatpush1.xpose.msra.mxu0 0.0
    %1327 = vmatprep.subr.mxu0 0.0
    %1328 = vmatpush1.xpose.msra.mxu0 0.0
    %1329 = vmatprep.subr.mxu0 0.0
    %1330 = vmatpush1.xpose.msra.mxu0 0.0
    %1331 = vmatprep.subr.mxu0 0.0
    %1332 = vmatpush1.xpose.msra.mxu0 0.0
    %1333 = vmatprep.subr.mxu0 0.0
    %1334 = vmatpush1.xpose.msra.mxu0 0.0
    %1335 = vmatprep.subr.mxu0 0.0
    %1336 = vmatpush1.xpose.msra.mxu0 0.0
    %1337 = vmatprep.subr.mxu0 0.0
    %1338 = vmatpush1.xpose.msra.mxu0 0.0
    %1339 = vmatprep.subr.mxu0 0.0
    %1340 = vmatpush1.xpose.msra.mxu0 0.0
    %1341 = vmatprep.subr.mxu0 0.0
    %1342 = vmatpush1.xpose.msra.mxu0 0.0
    %1343 = vmatprep.subr.mxu0 0.0
    %1344 = vmatpush1.xpose.msra.mxu0 0.0
    %1345 = vmatprep.mubr.f32.mxu0 0.0
    %1346 = vmatmul.mubr.f32.gmra.mrb[0].mxu0 %v1277
    %v1347 = vpop.f32.mrb[0].mxu0
    %v1348 = vadd.f32 0.0, %v1347
    %v1349 = vpop.f32.mrb[0].mxu0
    %1350 = vdwg.mxu0
    %1351 = vrot.lane.b32.xlu0 %v275, 104
    %v1352 = vpop.permute.xlu0 %1351
    %1353 = vrot.lane.b32.xlu0 %v275, 72
    %v1354 = vpop.permute.xlu0 %1353
    %v1355 = vsel %vm281, %v1352, 0
    %v1357 = vsel %vm281, %v1354, 0
    %1359 = vmatprep.subr.mxu0 0.0
    %1360 = vmatpush1.xpose.msra.mxu0 %v1357
    %1361 = vmatprep.subr.mxu0 0.0
    %1362 = vmatpush1.xpose.msra.mxu0 0.0
    %1363 = vmatprep.subr.mxu0 0.0
    %1364 = vmatpush1.xpose.msra.mxu0 0.0
    %1365 = vmatprep.subr.mxu0 0.0
    %1366 = vmatpush1.xpose.msra.mxu0 0.0
    %1367 = vmatprep.subr.mxu0 0.0
    %1368 = vmatpush1.xpose.msra.mxu0 0.0
    %1369 = vmatprep.subr.mxu0 0.0
    %1370 = vmatpush1.xpose.msra.mxu0 0.0
    %1371 = vmatprep.subr.mxu0 0.0
    %1372 = vmatpush1.xpose.msra.mxu0 0.0
    %1373 = vmatprep.subr.mxu0 0.0
    %1374 = vmatpush1.xpose.msra.mxu0 0.0
    %1375 = vmatprep.subr.mxu0 0.0
    %1376 = vmatpush1.xpose.msra.mxu0 0.0
    %1377 = vmatprep.subr.mxu0 0.0
    %1378 = vmatpush1.xpose.msra.mxu0 0.0
    %1379 = vmatprep.subr.mxu0 0.0
    %1380 = vmatpush1.xpose.msra.mxu0 0.0
    %1381 = vmatprep.subr.mxu0 0.0
    %1382 = vmatpush1.xpose.msra.mxu0 0.0
    %1383 = vmatprep.subr.mxu0 0.0
    %1384 = vmatpush1.xpose.msra.mxu0 0.0
    %1385 = vmatprep.subr.mxu0 0.0
    %1386 = vmatpush1.xpose.msra.mxu0 0.0
    %1387 = vmatprep.subr.mxu0 0.0
    %1388 = vmatpush1.xpose.msra.mxu0 0.0
    %1389 = vmatprep.subr.mxu0 0.0
    %1390 = vmatpush1.xpose.msra.mxu0 0.0
    %1391 = vmatprep.subr.mxu0 0.0
    %1392 = vmatpush1.xpose.msra.mxu0 0.0
    %1393 = vmatprep.subr.mxu0 0.0
    %1394 = vmatpush1.xpose.msra.mxu0 0.0
    %1395 = vmatprep.subr.mxu0 0.0
    %1396 = vmatpush1.xpose.msra.mxu0 0.0
    %1397 = vmatprep.subr.mxu0 0.0
    %1398 = vmatpush1.xpose.msra.mxu0 0.0
    %1399 = vmatprep.subr.mxu0 0.0
    %1400 = vmatpush1.xpose.msra.mxu0 0.0
    %1401 = vmatprep.subr.mxu0 0.0
    %1402 = vmatpush1.xpose.msra.mxu0 0.0
    %1403 = vmatprep.subr.mxu0 0.0
    %1404 = vmatpush1.xpose.msra.mxu0 0.0
    %1405 = vmatprep.subr.mxu0 0.0
    %1406 = vmatpush1.xpose.msra.mxu0 0.0
    %1407 = vmatprep.subr.mxu0 0.0
    %1408 = vmatpush1.xpose.msra.mxu0 0.0
    %1409 = vmatprep.subr.mxu0 0.0
    %1410 = vmatpush1.xpose.msra.mxu0 0.0
    %1411 = vmatprep.subr.mxu0 0.0
    %1412 = vmatpush1.xpose.msra.mxu0 0.0
    %1413 = vmatprep.subr.mxu0 0.0
    %1414 = vmatpush1.xpose.msra.mxu0 0.0
    %1415 = vmatprep.subr.mxu0 0.0
    %1416 = vmatpush1.xpose.msra.mxu0 0.0
    %1417 = vmatprep.subr.mxu0 0.0
    %1418 = vmatpush1.xpose.msra.mxu0 0.0
    %1419 = vmatprep.subr.mxu0 0.0
    %1420 = vmatpush1.xpose.msra.mxu0 0.0
    %1421 = vmatprep.subr.mxu0 0.0
    %1422 = vmatpush1.xpose.msra.mxu0 0.0
    %1423 = vmatprep.mubr.f32.mxu0 0.0
    %1424 = vmatmul.mubr.f32.gmra.mrb[0].mxu0 %v1355
    %v1425 = vpop.f32.mrb[0].mxu0
    %v1426 = vadd.f32 0.0, %v1425
    %v1427 = vpop.f32.mrb[0].mxu0
    %1428 = vdwg.mxu0
    %v1429 = vmul.f32 %v1348, 0.35355338
    %v1430 = vmul.f32 %v1426, 0.35355338
    %v1431 = vsel %vm281, %v1429, -inf
    %1432 = vmax.xlane.f32.xlu0 %v1431
    %v1433 = vpop.xlane.xlu0 %1432
    %v1434 = vsel %vm281, %v1430, -inf
    %1435 = vmax.xlane.f32.xlu0 %v1434
    %v1436 = vpop.xlane.xlu0 %1435
    %v1437 = vsub.f32 %v1429, %v1433
    %v1438 = vsub.f32 %v1430, %v1436
    %v1439 = vmul.f32 %v1437, 1.442695
    %v1440 = vpow.pop %v1439
    %v1441 = vmul.f32 %v1438, 1.442695
    %v1442 = vpow.pop %v1441
    %v1443 = vsel %vm281, %v1440, 0.0
    %1444 = vadd.xlane.f32.xlu0 %v1443
    %v1445 = vpop.xlane.xlu0 %1444
    %v1446 = vsel %vm281, %v1442, 0.0
    %1447 = vadd.xlane.f32.xlu0 %v1446
    %v1448 = vpop.xlane.xlu0 %1447
    %v1449 = vrcp.pop %v1445
    %v1450 = vrcp.pop %v1448
    %v1451 = vmul.f32 %v1440, %v1449
    %v1452 = vmul.f32 %v1442, %v1450
    %1453 = vrot.lane.b32.xlu0 %v270, 40
    %v1454 = vpop.permute.xlu0 %1453
    %v1457 = vsel %vm281, %v1451, 0
    %1459 = vmatprep.subr.mxu0 0.0
    %1460 = vmatpush1.msra.mxu0 %v1454
    %1461 = vmatprep.subr.mxu0 0.0
    %1462 = vmatpush1.msra.mxu0 0.0
    %1463 = vmatprep.subr.mxu0 0.0
    %1464 = vmatpush1.msra.mxu0 0.0
    %1465 = vmatprep.subr.mxu0 0.0
    %1466 = vmatpush1.msra.mxu0 0.0
    %1467 = vmatprep.subr.mxu0 0.0
    %1468 = vmatpush1.msra.mxu0 0.0
    %1469 = vmatprep.subr.mxu0 0.0
    %1470 = vmatpush1.msra.mxu0 0.0
    %1471 = vmatprep.subr.mxu0 0.0
    %1472 = vmatpush1.msra.mxu0 0.0
    %1473 = vmatprep.subr.mxu0 0.0
    %1474 = vmatpush1.msra.mxu0 0.0
    %1475 = vmatprep.subr.mxu0 0.0
    %1476 = vmatpush1.msra.mxu0 0.0
    %1477 = vmatprep.subr.mxu0 0.0
    %1478 = vmatpush1.msra.mxu0 0.0
    %1479 = vmatprep.subr.mxu0 0.0
    %1480 = vmatpush1.msra.mxu0 0.0
    %1481 = vmatprep.subr.mxu0 0.0
    %1482 = vmatpush1.msra.mxu0 0.0
    %1483 = vmatprep.subr.mxu0 0.0
    %1484 = vmatpush1.msra.mxu0 0.0
    %1485 = vmatprep.subr.mxu0 0.0
    %1486 = vmatpush1.msra.mxu0 0.0
    %1487 = vmatprep.subr.mxu0 0.0
    %1488 = vmatpush1.msra.mxu0 0.0
    %1489 = vmatprep.subr.mxu0 0.0
    %1490 = vmatpush1.msra.mxu0 0.0
    %1491 = vmatprep.subr.mxu0 0.0
    %1492 = vmatpush1.msra.mxu0 0.0
    %1493 = vmatprep.subr.mxu0 0.0
    %1494 = vmatpush1.msra.mxu0 0.0
    %1495 = vmatprep.subr.mxu0 0.0
    %1496 = vmatpush1.msra.mxu0 0.0
    %1497 = vmatprep.subr.mxu0 0.0
    %1498 = vmatpush1.msra.mxu0 0.0
    %1499 = vmatprep.subr.mxu0 0.0
    %1500 = vmatpush1.msra.mxu0 0.0
    %1501 = vmatprep.subr.mxu0 0.0
    %1502 = vmatpush1.msra.mxu0 0.0
    %1503 = vmatprep.subr.mxu0 0.0
    %1504 = vmatpush1.msra.mxu0 0.0
    %1505 = vmatprep.subr.mxu0 0.0
    %1506 = vmatpush1.msra.mxu0 0.0
    %1507 = vmatprep.subr.mxu0 0.0
    %1508 = vmatpush1.msra.mxu0 0.0
    %1509 = vmatprep.subr.mxu0 0.0
    %1510 = vmatpush1.msra.mxu0 0.0
    %1511 = vmatprep.subr.mxu0 0.0
    %1512 = vmatpush1.msra.mxu0 0.0
    %1513 = vmatprep.subr.mxu0 0.0
    %1514 = vmatpush1.msra.mxu0 0.0
    %1515 = vmatprep.subr.mxu0 0.0
    %1516 = vmatpush1.msra.mxu0 0.0
    %1517 = vmatprep.subr.mxu0 0.0
    %1518 = vmatpush1.msra.mxu0 0.0
    %1519 = vmatprep.subr.mxu0 0.0
    %1520 = vmatpush1.msra.mxu0 0.0
    %1521 = vmatprep.subr.mxu0 0.0
    %1522 = vmatpush1.msra.mxu0 0.0
    %1523 = vmatprep.mubr.f32.mxu0 0.0
    %1524 = vmatmul.mubr.f32.gmra.mrb[0].mxu0 %v1457
    %v1525 = vpop.f32.mrb[0].mxu0
    %v1526 = vadd.f32 0.0, %v1525
    %v1527 = vpop.f32.mrb[0].mxu0
    %1528 = vdwg.mxu0
    %1529 = vrot.lane.b32.xlu0 %v275, 40
    %v1530 = vpop.permute.xlu0 %1529
    %v1533 = vsel %vm281, %v1452, 0
    %1535 = vmatprep.subr.mxu0 0.0
    %1536 = vmatpush1.msra.mxu0 %v1530
    %1537 = vmatprep.subr.mxu0 0.0
    %1538 = vmatpush1.msra.mxu0 0.0
    %1539 = vmatprep.subr.mxu0 0.0
    %1540 = vmatpush1.msra.mxu0 0.0
    %1541 = vmatprep.subr.mxu0 0.0
    %1542 = vmatpush1.msra.mxu0 0.0
    %1543 = vmatprep.subr.mxu0 0.0
    %1544 = vmatpush1.msra.mxu0 0.0
    %1545 = vmatprep.subr.mxu0 0.0
    %1546 = vmatpush1.msra.mxu0 0.0
    %1547 = vmatprep.subr.mxu0 0.0
    %1548 = vmatpush1.msra.mxu0 0.0
    %1549 = vmatprep.subr.mxu0 0.0
    %1550 = vmatpush1.msra.mxu0 0.0
    %1551 = vmatprep.subr.mxu0 0.0
    %1552 = vmatpush1.msra.mxu0 0.0
    %1553 = vmatprep.subr.mxu0 0.0
    %1554 = vmatpush1.msra.mxu0 0.0
    %1555 = vmatprep.subr.mxu0 0.0
    %1556 = vmatpush1.msra.mxu0 0.0
    %1557 = vmatprep.subr.mxu0 0.0
    %1558 = vmatpush1.msra.mxu0 0.0
    %1559 = vmatprep.subr.mxu0 0.0
    %1560 = vmatpush1.msra.mxu0 0.0
    %1561 = vmatprep.subr.mxu0 0.0
    %1562 = vmatpush1.msra.mxu0 0.0
    %1563 = vmatprep.subr.mxu0 0.0
    %1564 = vmatpush1.msra.mxu0 0.0
    %1565 = vmatprep.subr.mxu0 0.0
    %1566 = vmatpush1.msra.mxu0 0.0
    %1567 = vmatprep.subr.mxu0 0.0
    %1568 = vmatpush1.msra.mxu0 0.0
    %1569 = vmatprep.subr.mxu0 0.0
    %1570 = vmatpush1.msra.mxu0 0.0
    %1571 = vmatprep.subr.mxu0 0.0
    %1572 = vmatpush1.msra.mxu0 0.0
    %1573 = vmatprep.subr.mxu0 0.0
    %1574 = vmatpush1.msra.mxu0 0.0
    %1575 = vmatprep.subr.mxu0 0.0
    %1576 = vmatpush1.msra.mxu0 0.0
    %1577 = vmatprep.subr.mxu0 0.0
    %1578 = vmatpush1.msra.mxu0 0.0
    %1579 = vmatprep.subr.mxu0 0.0
    %1580 = vmatpush1.msra.mxu0 0.0
    %1581 = vmatprep.subr.mxu0 0.0
    %1582 = vmatpush1.msra.mxu0 0.0
    %1583 = vmatprep.subr.mxu0 0.0
    %1584 = vmatpush1.msra.mxu0 0.0
    %1585 = vmatprep.subr.mxu0 0.0
    %1586 = vmatpush1.msra.mxu0 0.0
    %1587 = vmatprep.subr.mxu0 0.0
    %1588 = vmatpush1.msra.mxu0 0.0
    %1589 = vmatprep.subr.mxu0 0.0
    %1590 = vmatpush1.msra.mxu0 0.0
    %1591 = vmatprep.subr.mxu0 0.0
    %1592 = vmatpush1.msra.mxu0 0.0
    %1593 = vmatprep.subr.mxu0 0.0
    %1594 = vmatpush1.msra.mxu0 0.0
    %1595 = vmatprep.subr.mxu0 0.0
    %1596 = vmatpush1.msra.mxu0 0.0
    %1597 = vmatprep.subr.mxu0 0.0
    %1598 = vmatpush1.msra.mxu0 0.0
    %1599 = vmatprep.mubr.f32.mxu0 0.0
    %1600 = vmatmul.mubr.f32.gmra.mrb[0].mxu0 %v1533
    %v1601 = vpop.f32.mrb[0].mxu0
    %v1602 = vadd.f32 0.0, %v1601
    %v1603 = vpop.f32.mrb[0].mxu0
    %1604 = vdwg.mxu0
    %1607 = vrot.lane.b32.xlu0 %v862, 8
    %v1608 = vpop.permute.xlu0 %1607
    %1609 = vrot.lane.b32.xlu0 %v938, 8
    %v1610 = vpop.permute.xlu0 %1609
    %1615 = vrot.lane.b32.xlu0 %v1194, 16
    %v1616 = vpop.permute.xlu0 %1615
    %1617 = vrot.lane.b32.xlu0 %v1270, 16
    %v1618 = vpop.permute.xlu0 %1617
    %1623 = vrot.lane.b32.xlu0 %v1526, 24
    %v1624 = vpop.permute.xlu0 %1623
    %1625 = vrot.lane.b32.xlu0 %v1602, 24
    %v1626 = vpop.permute.xlu0 %1625
    %v1629 = vsel %vm281, %v530, %v1608
    %v1630 = vsel %vm281, %v606, %v1610
    %vm1631 = vcmask 130048
    %v1632 = vsel %vm1631, %v1629, %v1616
    %v1633 = vsel %vm1631, %v1630, %v1618
    %vm1634 = vcmask 195584
    %v1635 = vsel %vm1634, %v1632, %v1624
    %v1636 = vsel %vm1634, %v1633, %v1626
    %v1637 = vlaneseq
    %v1638 = vshrl.u32 %v1637, 7
    %v1639 = vsub.s32 0, %v1638
    %v1640 = vrot.slane %v173, %v1639
    %v1642 = vsel %vm196, %v1635, 0
    %v1645 = vsel %vm196, %v1636, 0
    %1647 = vmatprep.subr.mxu0 0.0
    %1648 = vmatpush1.msra.mxu0 %v169
    %1649 = vmatprep.subr.mxu0 0.0
    %1650 = vmatpush1.msra.mxu0 %v170
    %1651 = vmatprep.subr.mxu0 0.0
    %1652 = vmatpush1.msra.mxu0 %v171
    %1653 = vmatprep.subr.mxu0 0.0
    %1654 = vmatpush1.msra.mxu0 %v172
    %1655 = vmatprep.subr.mxu0 0.0
    %1656 = vmatpush1.msra.mxu0 0.0
    %1657 = vmatprep.subr.mxu0 0.0
    %1658 = vmatpush1.msra.mxu0 0.0
    %1659 = vmatprep.subr.mxu0 0.0
    %1660 = vmatpush1.msra.mxu0 0.0
    %1661 = vmatprep.subr.mxu0 0.0
    %1662 = vmatpush1.msra.mxu0 0.0
    %1663 = vmatprep.subr.mxu0 0.0
    %1664 = vmatpush1.msra.mxu0 0.0
    %1665 = vmatprep.subr.mxu0 0.0
    %1666 = vmatpush1.msra.mxu0 0.0
    %1667 = vmatprep.subr.mxu0 0.0
    %1668 = vmatpush1.msra.mxu0 0.0
    %1669 = vmatprep.subr.mxu0 0.0
    %1670 = vmatpush1.msra.mxu0 0.0
    %1671 = vmatprep.subr.mxu0 0.0
    %1672 = vmatpush1.msra.mxu0 0.0
    %1673 = vmatprep.subr.mxu0 0.0
    %1674 = vmatpush1.msra.mxu0 0.0
    %1675 = vmatprep.subr.mxu0 0.0
    %1676 = vmatpush1.msra.mxu0 0.0
    %1677 = vmatprep.subr.mxu0 0.0
    %1678 = vmatpush1.msra.mxu0 0.0
    %1679 = vmatprep.subr.mxu0 0.0
    %1680 = vmatpush1.msra.mxu0 0.0
    %1681 = vmatprep.subr.mxu0 0.0
    %1682 = vmatpush1.msra.mxu0 0.0
    %1683 = vmatprep.subr.mxu0 0.0
    %1684 = vmatpush1.msra.mxu0 0.0
    %1685 = vmatprep.subr.mxu0 0.0
    %1686 = vmatpush1.msra.mxu0 0.0
    %1687 = vmatprep.subr.mxu0 0.0
    %1688 = vmatpush1.msra.mxu0 0.0
    %1689 = vmatprep.subr.mxu0 0.0
    %1690 = vmatpush1.msra.mxu0 0.0
    %1691 = vmatprep.subr.mxu0 0.0
    %1692 = vmatpush1.msra.mxu0 0.0
    %1693 = vmatprep.subr.mxu0 0.0
    %1694 = vmatpush1.msra.mxu0 0.0
    %1695 = vmatprep.subr.mxu0 0.0
    %1696 = vmatpush1.msra.mxu0 0.0
    %1697 = vmatprep.subr.mxu0 0.0
    %1698 = vmatpush1.msra.mxu0 0.0
    %1699 = vmatprep.subr.mxu0 0.0
    %1700 = vmatpush1.msra.mxu0 0.0
    %1701 = vmatprep.subr.mxu0 0.0
    %1702 = vmatpush1.msra.mxu0 0.0
    %1703 = vmatprep.subr.mxu0 0.0
    %1704 = vmatpush1.msra.mxu0 0.0
    %1705 = vmatprep.subr.mxu0 0.0
    %1706 = vmatpush1.msra.mxu0 0.0
    %1707 = vmatprep.subr.mxu0 0.0
    %1708 = vmatpush1.msra.mxu0 0.0
    %1709 = vmatprep.subr.mxu0 0.0
    %1710 = vmatpush1.msra.mxu0 0.0
    %1711 = vmatprep.mubr.f32.mxu0 0.0
    %1712 = vmatmul.mubr.f32.gmra.mrb[0].mxu0 %v1642
    %v1713 = vpop.f32.mrb[0].mxu0
    %v1714 = vadd.f32 %v1640, %v1713
    %v1715 = vpop.f32.mrb[0].mxu0
    %1716 = vmatprep.mubr.f32.mxu0 0.0
    %1717 = vmatmul.mubr.f32.gmra.mrb[0].mxu0 %v1645
    %v1718 = vpop.f32.mrb[0].mxu0
    %v1719 = vadd.f32 %v1640, %v1718
    %v1720 = vpop.f32.mrb[0].mxu0
    %1721 = vdwg.mxu0
    %v1722 = vadd.f32 %v162, %v1714
    %v1723 = vadd.f32 %v163, %v1719
    %v1724 = vsel %vm196, %v1722, 0.0
    %1725 = vadd.xlane.f32.xlu0 %v1724
    %v1726 = vpop.xlane.xlu0 %1725
    %v1727 = vsel %vm196, %v1723, 0.0
    %1728 = vadd.xlane.f32.xlu0 %v1727
    %v1729 = vpop.xlane.xlu0 %1728
    %v1730 = vrcp.pop 32.0
    %v1731 = vmul.f32 %v1726, %v1730
    %v1732 = vmul.f32 %v1729, %v1730
    %v1733 = vsub.f32 %v1722, %v1731
    %v1734 = vsub.f32 %v1723, %v1732
    %v1735 = vmul.f32 %v1733, %v1733
    %v1736 = vmul.f32 %v1734, %v1734
    %v1737 = vsel %vm196, %v1735, 0.0
    %1738 = vadd.xlane.f32.xlu0 %v1737
    %v1739 = vpop.xlane.xlu0 %1738
    %v1740 = vsel %vm196, %v1736, 0.0
    %1741 = vadd.xlane.f32.xlu0 %v1740
    %v1742 = vpop.xlane.xlu0 %1741
    %v1743 = vmul.f32 %v1739, %v1730
    %v1744 = vmul.f32 %v1742, %v1730
    %v1745 = vadd.f32 %v1743, 1e-05
    %v1746 = vadd.f32 %v1744, 1e-05
    %v1747 = vrsqrt.pop %v1745
    %v1748 = vrsqrt.pop %v1746
    %v1749 = vmul.f32 %v1733, %v1747
    %v1750 = vmul.f32 %v1734, %v1748
    %v1751 = vlaneseq
    %v1752 = vshrl.u32 %v1751, 7
    %v1753 = vsub.s32 0, %v1752
    %v1754 = vrot.slane %v188, %v1753
    %v1755 = vmul.f32 %v1749, %v1754
    %v1756 = vmul.f32 %v1750, %v1754
    %v1757 = vlaneseq
    %v1758 = vshrl.u32 %v1757, 7
    %v1759 = vsub.s32 0, %v1758
    %v1760 = vrot.slane %v189, %v1759
    %v1761 = vadd.f32 %v1755, %v1760
    %v1762 = vadd.f32 %v1756, %v1760
    %v1763 = vlaneseq
    %v1764 = vshrl.u32 %v1763, 7
    %v1765 = vsub.s32 0, %v1764
    %v1766 = vrot.slane %v178, %v1765
    %v1768 = vsel %vm196, %v1761, 0
    %v1771 = vsel %vm196, %v1762, 0
    %1773 = vmatprep.subr.mxu0 0.0
    %1774 = vmatpush1.msra.mxu0 %v174
    %1775 = vmatprep.subr.mxu0 0.0
    %1776 = vmatpush1.msra.mxu0 %v175
    %1777 = vmatprep.subr.mxu0 0.0
    %1778 = vmatpush1.msra.mxu0 %v176
    %1779 = vmatprep.subr.mxu0 0.0
    %1780 = vmatpush1.msra.mxu0 %v177
    %1781 = vmatprep.subr.mxu0 0.0
    %1782 = vmatpush1.msra.mxu0 0.0
    %1783 = vmatprep.subr.mxu0 0.0
    %1784 = vmatpush1.msra.mxu0 0.0
    %1785 = vmatprep.subr.mxu0 0.0
    %1786 = vmatpush1.msra.mxu0 0.0
    %1787 = vmatprep.subr.mxu0 0.0
    %1788 = vmatpush1.msra.mxu0 0.0
    %1789 = vmatprep.subr.mxu0 0.0
    %1790 = vmatpush1.msra.mxu0 0.0
    %1791 = vmatprep.subr.mxu0 0.0
    %1792 = vmatpush1.msra.mxu0 0.0
    %1793 = vmatprep.subr.mxu0 0.0
    %1794 = vmatpush1.msra.mxu0 0.0
    %1795 = vmatprep.subr.mxu0 0.0
    %1796 = vmatpush1.msra.mxu0 0.0
    %1797 = vmatprep.subr.mxu0 0.0
    %1798 = vmatpush1.msra.mxu0 0.0
    %1799 = vmatprep.subr.mxu0 0.0
    %1800 = vmatpush1.msra.mxu0 0.0
    %1801 = vmatprep.subr.mxu0 0.0
    %1802 = vmatpush1.msra.mxu0 0.0
    %1803 = vmatprep.subr.mxu0 0.0
    %1804 = vmatpush1.msra.mxu0 0.0
    %1805 = vmatprep.subr.mxu0 0.0
    %1806 = vmatpush1.msra.mxu0 0.0
    %1807 = vmatprep.subr.mxu0 0.0
    %1808 = vmatpush1.msra.mxu0 0.0
    %1809 = vmatprep.subr.mxu0 0.0
    %1810 = vmatpush1.msra.mxu0 0.0
    %1811 = vmatprep.subr.mxu0 0.0
    %1812 = vmatpush1.msra.mxu0 0.0
    %1813 = vmatprep.subr.mxu0 0.0
    %1814 = vmatpush1.msra.mxu0 0.0
    %1815 = vmatprep.subr.mxu0 0.0
    %1816 = vmatpush1.msra.mxu0 0.0
    %1817 = vmatprep.subr.mxu0 0.0
    %1818 = vmatpush1.msra.mxu0 0.0
    %1819 = vmatprep.subr.mxu0 0.0
    %1820 = vmatpush1.msra.mxu0 0.0
    %1821 = vmatprep.subr.mxu0 0.0
    %1822 = vmatpush1.msra.mxu0 0.0
    %1823 = vmatprep.subr.mxu0 0.0
    %1824 = vmatpush1.msra.mxu0 0.0
    %1825 = vmatprep.subr.mxu0 0.0
    %1826 = vmatpush1.msra.mxu0 0.0
    %1827 = vmatprep.subr.mxu0 0.0
    %1828 = vmatpush1.msra.mxu0 0.0
    %1829 = vmatprep.subr.mxu0 0.0
    %1830 = vmatpush1.msra.mxu0 0.0
    %1831 = vmatprep.subr.mxu0 0.0
    %1832 = vmatpush1.msra.mxu0 0.0
    %1833 = vmatprep.subr.mxu0 0.0
    %1834 = vmatpush1.msra.mxu0 0.0
    %1835 = vmatprep.subr.mxu0 0.0
    %1836 = vmatpush1.msra.mxu0 0.0
    %1837 = vmatprep.mubr.f32.mxu0 0.0
    %1838 = vmatmul.mubr.f32.gmra.mrb[0].mxu0 %v1768
    %v1839 = vpop.f32.mrb[0].mxu0
    %v1840 = vadd.f32 %v1766, %v1839
    %v1841 = vpop.f32.mrb[0].mxu0
    %1842 = vmatprep.mubr.f32.mxu0 0.0
    %1843 = vmatmul.mubr.f32.gmra.mrb[0].mxu0 %v1771
    %v1844 = vpop.f32.mrb[0].mxu0
    %v1845 = vadd.f32 %v1766, %v1844
    %v1846 = vpop.f32.mrb[0].mxu0
    %1847 = vdwg.mxu0
    %v1848 = vmax.f32 %v1840, 0.0
    %v1849 = vmax.f32 %v1845, 0.0
    %v1850 = vlaneseq
    %v1851 = vshrl.u32 %v1850, 7
    %v1852 = vsub.s32 0, %v1851
    %v1853 = vrot.slane %v187, %v1852
    %vm1854 = vcmask 523264
    %v1856 = vsel %vm1854, %v1848, 0
    %v1859 = vsel %vm1854, %v1849, 0
    %1861 = vmatprep.subr.mxu0 0.0
    %1862 = vmatpush1.msra.mxu0 %v179
    %1863 = vmatprep.subr.mxu0 0.0
    %1864 = vmatpush1.msra.mxu0 %v180
    %1865 = vmatprep.subr.mxu0 0.0
    %1866 = vmatpush1.msra.mxu0 %v181
    %1867 = vmatprep.subr.mxu0 0.0
    %1868 = vmatpush1.msra.mxu0 %v182
    %1869 = vmatprep.subr.mxu0 0.0
    %1870 = vmatpush1.msra.mxu0 %v183
    %1871 = vmatprep.subr.mxu0 0.0
    %1872 = vmatpush1.msra.mxu0 %v184
    %1873 = vmatprep.subr.mxu0 0.0
    %1874 = vmatpush1.msra.mxu0 %v185
    %1875 = vmatprep.subr.mxu0 0.0
    %1876 = vmatpush1.msra.mxu0 %v186
    %1877 = vmatprep.subr.mxu0 0.0
    %1878 = vmatpush1.msra.mxu0 0.0
    %1879 = vmatprep.subr.mxu0 0.0
    %1880 = vmatpush1.msra.mxu0 0.0
    %1881 = vmatprep.subr.mxu0 0.0
    %1882 = vmatpush1.msra.mxu0 0.0
    %1883 = vmatprep.subr.mxu0 0.0
    %1884 = vmatpush1.msra.mxu0 0.0
    %1885 = vmatprep.subr.mxu0 0.0
    %1886 = vmatpush1.msra.mxu0 0.0
    %1887 = vmatprep.subr.mxu0 0.0
    %1888 = vmatpush1.msra.mxu0 0.0
    %1889 = vmatprep.subr.mxu0 0.0
    %1890 = vmatpush1.msra.mxu0 0.0
    %1891 = vmatprep.subr.mxu0 0.0
    %1892 = vmatpush1.msra.mxu0 0.0
    %1893 = vmatprep.subr.mxu0 0.0
    %1894 = vmatpush1.msra.mxu0 0.0
    %1895 = vmatprep.subr.mxu0 0.0
    %1896 = vmatpush1.msra.mxu0 0.0
    %1897 = vmatprep.subr.mxu0 0.0
    %1898 = vmatpush1.msra.mxu0 0.0
    %1899 = vmatprep.subr.mxu0 0.0
    %1900 = vmatpush1.msra.mxu0 0.0
    %1901 = vmatprep.subr.mxu0 0.0
    %1902 = vmatpush1.msra.mxu0 0.0
    %1903 = vmatprep.subr.mxu0 0.0
    %1904 = vmatpush1.msra.mxu0 0.0
    %1905 = vmatprep.subr.mxu0 0.0
    %1906 = vmatpush1.msra.mxu0 0.0
    %1907 = vmatprep.subr.mxu0 0.0
    %1908 = vmatpush1.msra.mxu0 0.0
    %1909 = vmatprep.subr.mxu0 0.0
    %1910 = vmatpush1.msra.mxu0 0.0
    %1911 = vmatprep.subr.mxu0 0.0
    %1912 = vmatpush1.msra.mxu0 0.0
    %1913 = vmatprep.subr.mxu0 0.0
    %1914 = vmatpush1.msra.mxu0 0.0
    %1915 = vmatprep.subr.mxu0 0.0
    %1916 = vmatpush1.msra.mxu0 0.0
    %1917 = vmatprep.subr.mxu0 0.0
    %1918 = vmatpush1.msra.mxu0 0.0
    %1919 = vmatprep.subr.mxu0 0.0
    %1920 = vmatpush1.msra.mxu0 0.0
    %1921 = vmatprep.subr.mxu0 0.0
    %1922 = vmatpush1.msra.mxu0 0.0
    %1923 = vmatprep.subr.mxu0 0.0
    %1924 = vmatpush1.msra.mxu0 0.0
    %1925 = vmatprep.mubr.f32.mxu0 0.0
    %1926 = vmatmul.mubr.f32.gmra.mrb[0].mxu0 %v1856
    %v1927 = vpop.f32.mrb[0].mxu0
    %v1928 = vadd.f32 %v1853, %v1927
    %v1929 = vpop.f32.mrb[0].mxu0
    %1930 = vmatprep.mubr.f32.mxu0 0.0
    %1931 = vmatmul.mubr.f32.gmra.mrb[0].mxu0 %v1859
    %v1932 = vpop.f32.mrb[0].mxu0
    %v1933 = vadd.f32 %v1853, %v1932
    %v1934 = vpop.f32.mrb[0].mxu0
    %1935 = vdwg.mxu0
    %v1936 = vadd.f32 %v1761, %v1928
    %v1937 = vadd.f32 %v1762, %v1933
    %v1938 = vsel %vm196, %v1936, 0.0
    %1939 = vadd.xlane.f32.xlu0 %v1938
    %v1940 = vpop.xlane.xlu0 %1939
    %v1941 = vsel %vm196, %v1937, 0.0
    %1942 = vadd.xlane.f32.xlu0 %v1941
    %v1943 = vpop.xlane.xlu0 %1942
    %v1944 = vmul.f32 %v1940, %v1730
    %v1945 = vmul.f32 %v1943, %v1730
    %v1946 = vsub.f32 %v1936, %v1944
    %v1947 = vsub.f32 %v1937, %v1945
    %v1948 = vmul.f32 %v1946, %v1946
    %v1949 = vmul.f32 %v1947, %v1947
    %v1950 = vsel %vm196, %v1948, 0.0
    %1951 = vadd.xlane.f32.xlu0 %v1950
    %v1952 = vpop.xlane.xlu0 %1951
    %v1953 = vsel %vm196, %v1949, 0.0
    %1954 = vadd.xlane.f32.xlu0 %v1953
    %v1955 = vpop.xlane.xlu0 %1954
    %v1956 = vmul.f32 %v1952, %v1730
    %v1957 = vmul.f32 %v1955, %v1730
    %v1958 = vadd.f32 %v1956, 1e-05
    %v1959 = vadd.f32 %v1957, 1e-05
    %v1960 = vrsqrt.pop %v1958
    %v1961 = vrsqrt.pop %v1959
    %v1962 = vmul.f32 %v1946, %v1960
    %v1963 = vmul.f32 %v1947, %v1961
    %v1964 = vlaneseq
    %v1965 = vshrl.u32 %v1964, 7
    %v1966 = vsub.s32 0, %v1965
    %v1967 = vrot.slane %v190, %v1966
    %v1968 = vmul.f32 %v1962, %v1967
    %v1969 = vmul.f32 %v1963, %v1967
    %v1970 = vlaneseq
    %v1971 = vshrl.u32 %v1970, 7
    %v1972 = vsub.s32 0, %v1971
    %v1973 = vrot.slane %v191, %v1972
    %v1974 = vadd.f32 %v1968, %v1973
    %v1975 = vadd.f32 %v1969, %v1973
    %v1976 = vld [vmem:[#allocation2 + $0x100] sm:$0xff]
    %v1977 = vld [vmem:[#allocation2 + $0x108] sm:$0xff]
    %v1978 = vld [vmem:[#allocation2 + $0x110] sm:$0xff]
    %v1979 = vld [vmem:[#allocation2 + $0x118] sm:$0xff]
    %v1980 = vld [vmem:[#allocation2 + $0x120] sm:$0x1]
    %v1981 = vld [vmem:[#allocation2 + $0x128] sm:$0xff]
    %v1982 = vld [vmem:[#allocation2 + $0x130] sm:$0xff]
    %v1983 = vld [vmem:[#allocation2 + $0x138] sm:$0xff]
    %v1984 = vld [vmem:[#allocation2 + $0x140] sm:$0xff]
    %v1985 = vld [vmem:[#allocation2 + $0x148] sm:$0x1]
    %v1986 = vld [vmem:[#allocation2 + $0x150] sm:$0xff]
    %v1987 = vld [vmem:[#allocation2 + $0x158] sm:$0xff]
    %v1988 = vld [vmem:[#allocation2 + $0x160] sm:$0xff]
    %v1989 = vld [vmem:[#allocation2 + $0x168] sm:$0xff]
    %v1990 = vld [vmem:[#allocation2 + $0x170] sm:$0x1]
    %v1991 = vld [vmem:[#allocation2 + $0x178] sm:$0xff]
    %v1992 = vld [vmem:[#allocation2 + $0x180] sm:$0xff]
    %v1993 = vld [vmem:[#allocation2 + $0x188] sm:$0xff]
    %v1994 = vld [vmem:[#allocation2 + $0x190] sm:$0xff]
    %v1995 = vld [vmem:[#allocation2 + $0x198] sm:$0xff]
    %v1996 = vld [vmem:[#allocation2 + $0x1a0] sm:$0xff]
    %v1997 = vld [vmem:[#allocation2 + $0x1a8] sm:$0xff]
    %v1998 = vld [vmem:[#allocation2 + $0x1b0] sm:$0xff]
    %v1999 = vld [vmem:[#allocation2 + $0x1b8] sm:$0x1]
    %v2000 = vld [vmem:[#allocation2 + $0x1c0] sm:$0x1]
    %v2001 = vld [vmem:[#allocation2 + $0x1c8] sm:$0x1]
    %v2002 = vld [vmem:[#allocation2 + $0x1d0] sm:$0x1]
    %v2003 = vld [vmem:[#allocation2 + $0x1d8] sm:$0x1]
    %v2004 = vlaneseq
    %v2005 = vshrl.u32 %v2004, 7
    %v2006 = vsub.s32 0, %v2005
    %v2007 = vrot.slane %v1980, %v2006
    %v2009 = vsel %vm196, %v1974, 0
    %v2012 = vsel %vm196, %v1975, 0
    %2014 = vmatprep.subr.mxu0 0.0
    %2015 = vmatpush1.msra.mxu0 %v1976
    %2016 = vmatprep.subr.mxu0 0.0
    %2017 = vmatpush1.msra.mxu0 %v1977
    %2018 = vmatprep.subr.mxu0 0.0
    %2019 = vmatpush1.msra.mxu0 %v1978
    %2020 = vmatprep.subr.mxu0 0.0
    %2021 = vmatpush1.msra.mxu0 %v1979
    %2022 = vmatprep.subr.mxu0 0.0
    %2023 = vmatpush1.msra.mxu0 0.0
    %2024 = vmatprep.subr.mxu0 0.0
    %2025 = vmatpush1.msra.mxu0 0.0
    %2026 = vmatprep.subr.mxu0 0.0
    %2027 = vmatpush1.msra.mxu0 0.0
    %2028 = vmatprep.subr.mxu0 0.0
    %2029 = vmatpush1.msra.mxu0 0.0
    %2030 = vmatprep.subr.mxu0 0.0
    %2031 = vmatpush1.msra.mxu0 0.0
    %2032 = vmatprep.subr.mxu0 0.0
    %2033 = vmatpush1.msra.mxu0 0.0
    %2034 = vmatprep.subr.mxu0 0.0
    %2035 = vmatpush1.msra.mxu0 0.0
    %2036 = vmatprep.subr.mxu0 0.0
    %2037 = vmatpush1.msra.mxu0 0.0
    %2038 = vmatprep.subr.mxu0 0.0
    %2039 = vmatpush1.msra.mxu0 0.0
    %2040 = vmatprep.subr.mxu0 0.0
    %2041 = vmatpush1.msra.mxu0 0.0
    %2042 = vmatprep.subr.mxu0 0.0
    %2043 = vmatpush1.msra.mxu0 0.0
    %2044 = vmatprep.subr.mxu0 0.0
    %2045 = vmatpush1.msra.mxu0 0.0
    %2046 = vmatprep.subr.mxu0 0.0
    %2047 = vmatpush1.msra.mxu0 0.0
    %2048 = vmatprep.subr.mxu0 0.0
    %2049 = vmatpush1.msra.mxu0 0.0
    %2050 = vmatprep.subr.mxu0 0.0
    %2051 = vmatpush1.msra.mxu0 0.0
    %2052 = vmatprep.subr.mxu0 0.0
    %2053 = vmatpush1.msra.mxu0 0.0
    %2054 = vmatprep.subr.mxu0 0.0
    %2055 = vmatpush1.msra.mxu0 0.0
    %2056 = vmatprep.subr.mxu0 0.0
    %2057 = vmatpush1.msra.mxu0 0.0
    %2058 = vmatprep.subr.mxu0 0.0
    %2059 = vmatpush1.msra.mxu0 0.0
    %2060 = vmatprep.subr.mxu0 0.0
    %2061 = vmatpush1.msra.mxu0 0.0
    %2062 = vmatprep.subr.mxu0 0.0
    %2063 = vmatpush1.msra.mxu0 0.0
    %2064 = vmatprep.subr.mxu0 0.0
    %2065 = vmatpush1.msra.mxu0 0.0
    %2066 = vmatprep.subr.mxu0 0.0
    %2067 = vmatpush1.msra.mxu0 0.0
    %2068 = vmatprep.subr.mxu0 0.0
    %2069 = vmatpush1.msra.mxu0 0.0
    %2070 = vmatprep.subr.mxu0 0.0
    %2071 = vmatpush1.msra.mxu0 0.0
    %2072 = vmatprep.subr.mxu0 0.0
    %2073 = vmatpush1.msra.mxu0 0.0
    %2074 = vmatprep.subr.mxu0 0.0
    %2075 = vmatpush1.msra.mxu0 0.0
    %2076 = vmatprep.subr.mxu0 0.0
    %2077 = vmatpush1.msra.mxu0 0.0
    %2078 = vmatprep.mubr.f32.mxu0 0.0
    %2079 = vmatmul.mubr.f32.gmra.mrb[0].mxu0 %v2009
    %v2080 = vpop.f32.mrb[0].mxu0
    %v2081 = vadd.f32 %v2007, %v2080
    %v2082 = vpop.f32.mrb[0].mxu0
    %2083 = vmatprep.mubr.f32.mxu0 0.0
    %2084 = vmatmul.mubr.f32.gmra.mrb[0].mxu0 %v2012
    %v2085 = vpop.f32.mrb[0].mxu0
    %v2086 = vadd.f32 %v2007, %v2085
    %v2087 = vpop.f32.mrb[0].mxu0
    %2088 = vdwg.mxu0
    %2090 = vrot.lane.b32.xlu0 %v2081, 96
    %v2091 = vpop.permute.xlu0 %2090
    %v2092 = vsel %vm281, %v2081, 0
    %v2094 = vsel %vm281, %v2091, 0
    %2096 = vmatprep.subr.mxu0 0.0
    %2097 = vmatpush1.xpose.msra.mxu0 %v2094
    %2098 = vmatprep.subr.mxu0 0.0
    %2099 = vmatpush1.xpose.msra.mxu0 0.0
    %2100 = vmatprep.subr.mxu0 0.0
    %2101 = vmatpush1.xpose.msra.mxu0 0.0
    %2102 = vmatprep.subr.mxu0 0.0
    %2103 = vmatpush1.xpose.msra.mxu0 0.0
    %2104 = vmatprep.subr.mxu0 0.0
    %2105 = vmatpush1.xpose.msra.mxu0 0.0
    %2106 = vmatprep.subr.mxu0 0.0
    %2107 = vmatpush1.xpose.msra.mxu0 0.0
    %2108 = vmatprep.subr.mxu0 0.0
    %2109 = vmatpush1.xpose.msra.mxu0 0.0
    %2110 = vmatprep.subr.mxu0 0.0
    %2111 = vmatpush1.xpose.msra.mxu0 0.0
    %2112 = vmatprep.subr.mxu0 0.0
    %2113 = vmatpush1.xpose.msra.mxu0 0.0
    %2114 = vmatprep.subr.mxu0 0.0
    %2115 = vmatpush1.xpose.msra.mxu0 0.0
    %2116 = vmatprep.subr.mxu0 0.0
    %2117 = vmatpush1.xpose.msra.mxu0 0.0
    %2118 = vmatprep.subr.mxu0 0.0
    %2119 = vmatpush1.xpose.msra.mxu0 0.0
    %2120 = vmatprep.subr.mxu0 0.0
    %2121 = vmatpush1.xpose.msra.mxu0 0.0
    %2122 = vmatprep.subr.mxu0 0.0
    %2123 = vmatpush1.xpose.msra.mxu0 0.0
    %2124 = vmatprep.subr.mxu0 0.0
    %2125 = vmatpush1.xpose.msra.mxu0 0.0
    %2126 = vmatprep.subr.mxu0 0.0
    %2127 = vmatpush1.xpose.msra.mxu0 0.0
    %2128 = vmatprep.subr.mxu0 0.0
    %2129 = vmatpush1.xpose.msra.mxu0 0.0
    %2130 = vmatprep.subr.mxu0 0.0
    %2131 = vmatpush1.xpose.msra.mxu0 0.0
    %2132 = vmatprep.subr.mxu0 0.0
    %2133 = vmatpush1.xpose.msra.mxu0 0.0
    %2134 = vmatprep.subr.mxu0 0.0
    %2135 = vmatpush1.xpose.msra.mxu0 0.0
    %2136 = vmatprep.subr.mxu0 0.0
    %2137 = vmatpush1.xpose.msra.mxu0 0.0
    %2138 = vmatprep.subr.mxu0 0.0
    %2139 = vmatpush1.xpose.msra.mxu0 0.0
    %2140 = vmatprep.subr.mxu0 0.0
    %2141 = vmatpush1.xpose.msra.mxu0 0.0
    %2142 = vmatprep.subr.mxu0 0.0
    %2143 = vmatpush1.xpose.msra.mxu0 0.0
    %2144 = vmatprep.subr.mxu0 0.0
    %2145 = vmatpush1.xpose.msra.mxu0 0.0
    %2146 = vmatprep.subr.mxu0 0.0
    %2147 = vmatpush1.xpose.msra.mxu0 0.0
    %2148 = vmatprep.subr.mxu0 0.0
    %2149 = vmatpush1.xpose.msra.mxu0 0.0
    %2150 = vmatprep.subr.mxu0 0.0
    %2151 = vmatpush1.xpose.msra.mxu0 0.0
    %2152 = vmatprep.subr.mxu0 0.0
    %2153 = vmatpush1.xpose.msra.mxu0 0.0
    %2154 = vmatprep.subr.mxu0 0.0
    %2155 = vmatpush1.xpose.msra.mxu0 0.0
    %2156 = vmatprep.subr.mxu0 0.0
    %2157 = vmatpush1.xpose.msra.mxu0 0.0
    %2158 = vmatprep.subr.mxu0 0.0
    %2159 = vmatpush1.xpose.msra.mxu0 0.0
    %2160 = vmatprep.mubr.f32.mxu0 0.0
    %2161 = vmatmul.mubr.f32.gmra.mrb[0].mxu0 %v2092
    %v2162 = vpop.f32.mrb[0].mxu0
    %v2163 = vadd.f32 0.0, %v2162
    %v2164 = vpop.f32.mrb[0].mxu0
    %2165 = vdwg.mxu0
    %2167 = vrot.lane.b32.xlu0 %v2086, 96
    %v2168 = vpop.permute.xlu0 %2167
    %v2169 = vsel %vm281, %v2086, 0
    %v2171 = vsel %vm281, %v2168, 0
    %2173 = vmatprep.subr.mxu0 0.0
    %2174 = vmatpush1.xpose.msra.mxu0 %v2171
    %2175 = vmatprep.subr.mxu0 0.0
    %2176 = vmatpush1.xpose.msra.mxu0 0.0
    %2177 = vmatprep.subr.mxu0 0.0
    %2178 = vmatpush1.xpose.msra.mxu0 0.0
    %2179 = vmatprep.subr.mxu0 0.0
    %2180 = vmatpush1.xpose.msra.mxu0 0.0
    %2181 = vmatprep.subr.mxu0 0.0
    %2182 = vmatpush1.xpose.msra.mxu0 0.0
    %2183 = vmatprep.subr.mxu0 0.0
    %2184 = vmatpush1.xpose.msra.mxu0 0.0
    %2185 = vmatprep.subr.mxu0 0.0
    %2186 = vmatpush1.xpose.msra.mxu0 0.0
    %2187 = vmatprep.subr.mxu0 0.0
    %2188 = vmatpush1.xpose.msra.mxu0 0.0
    %2189 = vmatprep.subr.mxu0 0.0
    %2190 = vmatpush1.xpose.msra.mxu0 0.0
    %2191 = vmatprep.subr.mxu0 0.0
    %2192 = vmatpush1.xpose.msra.mxu0 0.0
    %2193 = vmatprep.subr.mxu0 0.0
    %2194 = vmatpush1.xpose.msra.mxu0 0.0
    %2195 = vmatprep.subr.mxu0 0.0
    %2196 = vmatpush1.xpose.msra.mxu0 0.0
    %2197 = vmatprep.subr.mxu0 0.0
    %2198 = vmatpush1.xpose.msra.mxu0 0.0
    %2199 = vmatprep.subr.mxu0 0.0
    %2200 = vmatpush1.xpose.msra.mxu0 0.0
    %2201 = vmatprep.subr.mxu0 0.0
    %2202 = vmatpush1.xpose.msra.mxu0 0.0
    %2203 = vmatprep.subr.mxu0 0.0
    %2204 = vmatpush1.xpose.msra.mxu0 0.0
    %2205 = vmatprep.subr.mxu0 0.0
    %2206 = vmatpush1.xpose.msra.mxu0 0.0
    %2207 = vmatprep.subr.mxu0 0.0
    %2208 = vmatpush1.xpose.msra.mxu0 0.0
    %2209 = vmatprep.subr.mxu0 0.0
    %2210 = vmatpush1.xpose.msra.mxu0 0.0
    %2211 = vmatprep.subr.mxu0 0.0
    %2212 = vmatpush1.xpose.msra.mxu0 0.0
    %2213 = vmatprep.subr.mxu0 0.0
    %2214 = vmatpush1.xpose.msra.mxu0 0.0
    %2215 = vmatprep.subr.mxu0 0.0
    %2216 = vmatpush1.xpose.msra.mxu0 0.0
    %2217 = vmatprep.subr.mxu0 0.0
    %2218 = vmatpush1.xpose.msra.mxu0 0.0
    %2219 = vmatprep.subr.mxu0 0.0
    %2220 = vmatpush1.xpose.msra.mxu0 0.0
    %2221 = vmatprep.subr.mxu0 0.0
    %2222 = vmatpush1.xpose.msra.mxu0 0.0
    %2223 = vmatprep.subr.mxu0 0.0
    %2224 = vmatpush1.xpose.msra.mxu0 0.0
    %2225 = vmatprep.subr.mxu0 0.0
    %2226 = vmatpush1.xpose.msra.mxu0 0.0
    %2227 = vmatprep.subr.mxu0 0.0
    %2228 = vmatpush1.xpose.msra.mxu0 0.0
    %2229 = vmatprep.subr.mxu0 0.0
    %2230 = vmatpush1.xpose.msra.mxu0 0.0
    %2231 = vmatprep.subr.mxu0 0.0
    %2232 = vmatpush1.xpose.msra.mxu0 0.0
    %2233 = vmatprep.subr.mxu0 0.0
    %2234 = vmatpush1.xpose.msra.mxu0 0.0
    %2235 = vmatprep.subr.mxu0 0.0
    %2236 = vmatpush1.xpose.msra.mxu0 0.0
    %2237 = vmatprep.mubr.f32.mxu0 0.0
    %2238 = vmatmul.mubr.f32.gmra.mrb[0].mxu0 %v2169
    %v2239 = vpop.f32.mrb[0].mxu0
    %v2240 = vadd.f32 0.0, %v2239
    %v2241 = vpop.f32.mrb[0].mxu0
    %2242 = vdwg.mxu0
    %v2243 = vmul.f32 %v2163, 0.35355338
    %v2244 = vmul.f32 %v2240, 0.35355338
    %v2245 = vsel %vm281, %v2243, -inf
    %2246 = vmax.xlane.f32.xlu0 %v2245
    %v2247 = vpop.xlane.xlu0 %2246
    %v2248 = vsel %vm281, %v2244, -inf
    %2249 = vmax.xlane.f32.xlu0 %v2248
    %v2250 = vpop.xlane.xlu0 %2249
    %v2251 = vsub.f32 %v2243, %v2247
    %v2252 = vsub.f32 %v2244, %v2250
    %v2253 = vmul.f32 %v2251, 1.442695
    %v2254 = vpow.pop %v2253
    %v2255 = vmul.f32 %v2252, 1.442695
    %v2256 = vpow.pop %v2255
    %v2257 = vsel %vm281, %v2254, 0.0
    %2258 = vadd.xlane.f32.xlu0 %v2257
    %v2259 = vpop.xlane.xlu0 %2258
    %v2260 = vsel %vm281, %v2256, 0.0
    %2261 = vadd.xlane.f32.xlu0 %v2260
    %v2262 = vpop.xlane.xlu0 %2261
    %v2263 = vrcp.pop %v2259
    %v2264 = vrcp.pop %v2262
    %v2265 = vmul.f32 %v2254, %v2263
    %v2266 = vmul.f32 %v2256, %v2264
    %2267 = vrot.lane.b32.xlu0 %v2081, 64
    %v2268 = vpop.permute.xlu0 %2267
    %v2271 = vsel %vm281, %v2265, 0
    %2273 = vmatprep.subr.mxu0 0.0
    %2274 = vmatpush1.msra.mxu0 %v2268
    %2275 = vmatprep.subr.mxu0 0.0
    %2276 = vmatpush1.msra.mxu0 0.0
    %2277 = vmatprep.subr.mxu0 0.0
    %2278 = vmatpush1.msra.mxu0 0.0
    %2279 = vmatprep.subr.mxu0 0.0
    %2280 = vmatpush1.msra.mxu0 0.0
    %2281 = vmatprep.subr.mxu0 0.0
    %2282 = vmatpush1.msra.mxu0 0.0
    %2283 = vmatprep.subr.mxu0 0.0
    %2284 = vmatpush1.msra.mxu0 0.0
    %2285 = vmatprep.subr.mxu0 0.0
    %2286 = vmatpush1.msra.mxu0 0.0
    %2287 = vmatprep.subr.mxu0 0.0
    %2288 = vmatpush1.msra.mxu0 0.0
    %2289 = vmatprep.subr.mxu0 0.0
    %2290 = vmatpush1.msra.mxu0 0.0
    %2291 = vmatprep.subr.mxu0 0.0
    %2292 = vmatpush1.msra.mxu0 0.0
    %2293 = vmatprep.subr.mxu0 0.0
    %2294 = vmatpush1.msra.mxu0 0.0
    %2295 = vmatprep.subr.mxu0 0.0
    %2296 = vmatpush1.msra.mxu0 0.0
    %2297 = vmatprep.subr.mxu0 0.0
    %2298 = vmatpush1.msra.mxu0 0.0
    %2299 = vmatprep.subr.mxu0 0.0
    %2300 = vmatpush1.msra.mxu0 0.0
    %2301 = vmatprep.subr.mxu0 0.0
    %2302 = vmatpush1.msra.mxu0 0.0
    %2303 = vmatprep.subr.mxu0 0.0
    %2304 = vmatpush1.msra.mxu0 0.0
    %2305 = vmatprep.subr.mxu0 0.0
    %2306 = vmatpush1.msra.mxu0 0.0
    %2307 = vmatprep.subr.mxu0 0.0
    %2308 = vmatpush1.msra.mxu0 0.0
    %2309 = vmatprep.subr.mxu0 0.0
    %2310 = vmatpush1.msra.mxu0 0.0
    %2311 = vmatprep.subr.mxu0 0.0
    %2312 = vmatpush1.msra.mxu0 0.0
    %2313 = vmatprep.subr.mxu0 0.0
    %2314 = vmatpush1.msra.mxu0 0.0
    %2315 = vmatprep.subr.mxu0 0.0
    %2316 = vmatpush1.msra.mxu0 0.0
    %2317 = vmatprep.subr.mxu0 0.0
    %2318 = vmatpush1.msra.mxu0 0.0
    %2319 = vmatprep.subr.mxu0 0.0
    %2320 = vmatpush1.msra.mxu0 0.0
    %2321 = vmatprep.subr.mxu0 0.0
    %2322 = vmatpush1.msra.mxu0 0.0
    %2323 = vmatprep.subr.mxu0 0.0
    %2324 = vmatpush1.msra.mxu0 0.0
    %2325 = vmatprep.subr.mxu0 0.0
    %2326 = vmatpush1.msra.mxu0 0.0
    %2327 = vmatprep.subr.mxu0 0.0
    %2328 = vmatpush1.msra.mxu0 0.0
    %2329 = vmatprep.subr.mxu0 0.0
    %2330 = vmatpush1.msra.mxu0 0.0
    %2331 = vmatprep.subr.mxu0 0.0
    %2332 = vmatpush1.msra.mxu0 0.0
    %2333 = vmatprep.subr.mxu0 0.0
    %2334 = vmatpush1.msra.mxu0 0.0
    %2335 = vmatprep.subr.mxu0 0.0
    %2336 = vmatpush1.msra.mxu0 0.0
    %2337 = vmatprep.mubr.f32.mxu0 0.0
    %2338 = vmatmul.mubr.f32.gmra.mrb[0].mxu0 %v2271
    %v2339 = vpop.f32.mrb[0].mxu0
    %v2340 = vadd.f32 0.0, %v2339
    %v2341 = vpop.f32.mrb[0].mxu0
    %2342 = vdwg.mxu0
    %2343 = vrot.lane.b32.xlu0 %v2086, 64
    %v2344 = vpop.permute.xlu0 %2343
    %v2347 = vsel %vm281, %v2266, 0
    %2349 = vmatprep.subr.mxu0 0.0
    %2350 = vmatpush1.msra.mxu0 %v2344
    %2351 = vmatprep.subr.mxu0 0.0
    %2352 = vmatpush1.msra.mxu0 0.0
    %2353 = vmatprep.subr.mxu0 0.0
    %2354 = vmatpush1.msra.mxu0 0.0
    %2355 = vmatprep.subr.mxu0 0.0
    %2356 = vmatpush1.msra.mxu0 0.0
    %2357 = vmatprep.subr.mxu0 0.0
    %2358 = vmatpush1.msra.mxu0 0.0
    %2359 = vmatprep.subr.mxu0 0.0
    %2360 = vmatpush1.msra.mxu0 0.0
    %2361 = vmatprep.subr.mxu0 0.0
    %2362 = vmatpush1.msra.mxu0 0.0
    %2363 = vmatprep.subr.mxu0 0.0
    %2364 = vmatpush1.msra.mxu0 0.0
    %2365 = vmatprep.subr.mxu0 0.0
    %2366 = vmatpush1.msra.mxu0 0.0
    %2367 = vmatprep.subr.mxu0 0.0
    %2368 = vmatpush1.msra.mxu0 0.0
    %2369 = vmatprep.subr.mxu0 0.0
    %2370 = vmatpush1.msra.mxu0 0.0
    %2371 = vmatprep.subr.mxu0 0.0
    %2372 = vmatpush1.msra.mxu0 0.0
    %2373 = vmatprep.subr.mxu0 0.0
    %2374 = vmatpush1.msra.mxu0 0.0
    %2375 = vmatprep.subr.mxu0 0.0
    %2376 = vmatpush1.msra.mxu0 0.0
    %2377 = vmatprep.subr.mxu0 0.0
    %2378 = vmatpush1.msra.mxu0 0.0
    %2379 = vmatprep.subr.mxu0 0.0
    %2380 = vmatpush1.msra.mxu0 0.0
    %2381 = vmatprep.subr.mxu0 0.0
    %2382 = vmatpush1.msra.mxu0 0.0
    %2383 = vmatprep.subr.mxu0 0.0
    %2384 = vmatpush1.msra.mxu0 0.0
    %2385 = vmatprep.subr.mxu0 0.0
    %2386 = vmatpush1.msra.mxu0 0.0
    %2387 = vmatprep.subr.mxu0 0.0
    %2388 = vmatpush1.msra.mxu0 0.0
    %2389 = vmatprep.subr.mxu0 0.0
    %2390 = vmatpush1.msra.mxu0 0.0
    %2391 = vmatprep.subr.mxu0 0.0
    %2392 = vmatpush1.msra.mxu0 0.0
    %2393 = vmatprep.subr.mxu0 0.0
    %2394 = vmatpush1.msra.mxu0 0.0
    %2395 = vmatprep.subr.mxu0 0.0
    %2396 = vmatpush1.msra.mxu0 0.0
    %2397 = vmatprep.subr.mxu0 0.0
    %2398 = vmatpush1.msra.mxu0 0.0
    %2399 = vmatprep.subr.mxu0 0.0
    %2400 = vmatpush1.msra.mxu0 0.0
    %2401 = vmatprep.subr.mxu0 0.0
    %2402 = vmatpush1.msra.mxu0 0.0
    %2403 = vmatprep.subr.mxu0 0.0
    %2404 = vmatpush1.msra.mxu0 0.0
    %2405 = vmatprep.subr.mxu0 0.0
    %2406 = vmatpush1.msra.mxu0 0.0
    %2407 = vmatprep.subr.mxu0 0.0
    %2408 = vmatpush1.msra.mxu0 0.0
    %2409 = vmatprep.subr.mxu0 0.0
    %2410 = vmatpush1.msra.mxu0 0.0
    %2411 = vmatprep.subr.mxu0 0.0
    %2412 = vmatpush1.msra.mxu0 0.0
    %2413 = vmatprep.mubr.f32.mxu0 0.0
    %2414 = vmatmul.mubr.f32.gmra.mrb[0].mxu0 %v2347
    %v2415 = vpop.f32.mrb[0].mxu0
    %v2416 = vadd.f32 0.0, %v2415
    %v2417 = vpop.f32.mrb[0].mxu0
    %2418 = vdwg.mxu0
    %2419 = vrot.lane.b32.xlu0 %v2081, 120
    %v2420 = vpop.permute.xlu0 %2419
    %2421 = vrot.lane.b32.xlu0 %v2081, 88
    %v2422 = vpop.permute.xlu0 %2421
    %v2423 = vsel %vm281, %v2420, 0
    %v2425 = vsel %vm281, %v2422, 0
    %2427 = vmatprep.subr.mxu0 0.0
    %2428 = vmatpush1.xpose.msra.mxu0 %v2425
    %2429 = vmatprep.subr.mxu0 0.0
    %2430 = vmatpush1.xpose.msra.mxu0 0.0
    %2431 = vmatprep.subr.mxu0 0.0
    %2432 = vmatpush1.xpose.msra.mxu0 0.0
    %2433 = vmatprep.subr.mxu0 0.0
    %2434 = vmatpush1.xpose.msra.mxu0 0.0
    %2435 = vmatprep.subr.mxu0 0.0
    %2436 = vmatpush1.xpose.msra.mxu0 0.0
    %2437 = vmatprep.subr.mxu0 0.0
    %2438 = vmatpush1.xpose.msra.mxu0 0.0
    %2439 = vmatprep.subr.mxu0 0.0
    %2440 = vmatpush1.xpose.msra.mxu0 0.0
    %2441 = vmatprep.subr.mxu0 0.0
    %2442 = vmatpush1.xpose.msra.mxu0 0.0
    %2443 = vmatprep.subr.mxu0 0.0
    %2444 = vmatpush1.xpose.msra.mxu0 0.0
    %2445 = vmatprep.subr.mxu0 0.0
    %2446 = vmatpush1.xpose.msra.mxu0 0.0
    %2447 = vmatprep.subr.mxu0 0.0
    %2448 = vmatpush1.xpose.msra.mxu0 0.0
    %2449 = vmatprep.subr.mxu0 0.0
    %2450 = vmatpush1.xpose.msra.mxu0 0.0
    %2451 = vmatprep.subr.mxu0 0.0
    %2452 = vmatpush1.xpose.msra.mxu0 0.0
    %2453 = vmatprep.subr.mxu0 0.0
    %2454 = vmatpush1.xpose.msra.mxu0 0.0
    %2455 = vmatprep.subr.mxu0 0.0
    %2456 = vmatpush1.xpose.msra.mxu0 0.0
    %2457 = vmatprep.subr.mxu0 0.0
    %2458 = vmatpush1.xpose.msra.mxu0 0.0
    %2459 = vmatprep.subr.mxu0 0.0
    %2460 = vmatpush1.xpose.msra.mxu0 0.0
    %2461 = vmatprep.subr.mxu0 0.0
    %2462 = vmatpush1.xpose.msra.mxu0 0.0
    %2463 = vmatprep.subr.mxu0 0.0
    %2464 = vmatpush1.xpose.msra.mxu0 0.0
    %2465 = vmatprep.subr.mxu0 0.0
    %2466 = vmatpush1.xpose.msra.mxu0 0.0
    %2467 = vmatprep.subr.mxu0 0.0
    %2468 = vmatpush1.xpose.msra.mxu0 0.0
    %2469 = vmatprep.subr.mxu0 0.0
    %2470 = vmatpush1.xpose.msra.mxu0 0.0
    %2471 = vmatprep.subr.mxu0 0.0
    %2472 = vmatpush1.xpose.msra.mxu0 0.0
    %2473 = vmatprep.subr.mxu0 0.0
    %2474 = vmatpush1.xpose.msra.mxu0 0.0
    %2475 = vmatprep.subr.mxu0 0.0
    %2476 = vmatpush1.xpose.msra.mxu0 0.0
    %2477 = vmatprep.subr.mxu0 0.0
    %2478 = vmatpush1.xpose.msra.mxu0 0.0
    %2479 = vmatprep.subr.mxu0 0.0
    %2480 = vmatpush1.xpose.msra.mxu0 0.0
    %2481 = vmatprep.subr.mxu0 0.0
    %2482 = vmatpush1.xpose.msra.mxu0 0.0
    %2483 = vmatprep.subr.mxu0 0.0
    %2484 = vmatpush1.xpose.msra.mxu0 0.0
    %2485 = vmatprep.subr.mxu0 0.0
    %2486 = vmatpush1.xpose.msra.mxu0 0.0
    %2487 = vmatprep.subr.mxu0 0.0
    %2488 = vmatpush1.xpose.msra.mxu0 0.0
    %2489 = vmatprep.subr.mxu0 0.0
    %2490 = vmatpush1.xpose.msra.mxu0 0.0
    %2491 = vmatprep.mubr.f32.mxu0 0.0
    %2492 = vmatmul.mubr.f32.gmra.mrb[0].mxu0 %v2423
    %v2493 = vpop.f32.mrb[0].mxu0
    %v2494 = vadd.f32 0.0, %v2493
    %v2495 = vpop.f32.mrb[0].mxu0
    %2496 = vdwg.mxu0
    %2497 = vrot.lane.b32.xlu0 %v2086, 120
    %v2498 = vpop.permute.xlu0 %2497
    %2499 = vrot.lane.b32.xlu0 %v2086, 88
    %v2500 = vpop.permute.xlu0 %2499
    %v2501 = vsel %vm281, %v2498, 0
    %v2503 = vsel %vm281, %v2500, 0
    %2505 = vmatprep.subr.mxu0 0.0
    %2506 = vmatpush1.xpose.msra.mxu0 %v2503
    %2507 = vmatprep.subr.mxu0 0.0
    %2508 = vmatpush1.xpose.msra.mxu0 0.0
    %2509 = vmatprep.subr.mxu0 0.0
    %2510 = vmatpush1.xpose.msra.mxu0 0.0
    %2511 = vmatprep.subr.mxu0 0.0
    %2512 = vmatpush1.xpose.msra.mxu0 0.0
    %2513 = vmatprep.subr.mxu0 0.0
    %2514 = vmatpush1.xpose.msra.mxu0 0.0
    %2515 = vmatprep.subr.mxu0 0.0
    %2516 = vmatpush1.xpose.msra.mxu0 0.0
    %2517 = vmatprep.subr.mxu0 0.0
    %2518 = vmatpush1.xpose.msra.mxu0 0.0
    %2519 = vmatprep.subr.mxu0 0.0
    %2520 = vmatpush1.xpose.msra.mxu0 0.0
    %2521 = vmatprep.subr.mxu0 0.0
    %2522 = vmatpush1.xpose.msra.mxu0 0.0
    %2523 = vmatprep.subr.mxu0 0.0
    %2524 = vmatpush1.xpose.msra.mxu0 0.0
    %2525 = vmatprep.subr.mxu0 0.0
    %2526 = vmatpush1.xpose.msra.mxu0 0.0
    %2527 = vmatprep.subr.mxu0 0.0
    %2528 = vmatpush1.xpose.msra.mxu0 0.0
    %2529 = vmatprep.subr.mxu0 0.0
    %2530 = vmatpush1.xpose.msra.mxu0 0.0
    %2531 = vmatprep.subr.mxu0 0.0
    %2532 = vmatpush1.xpose.msra.mxu0 0.0
    %2533 = vmatprep.subr.mxu0 0.0
    %2534 = vmatpush1.xpose.msra.mxu0 0.0
    %2535 = vmatprep.subr.mxu0 0.0
    %2536 = vmatpush1.xpose.msra.mxu0 0.0
    %2537 = vmatprep.subr.mxu0 0.0
    %2538 = vmatpush1.xpose.msra.mxu0 0.0
    %2539 = vmatprep.subr.mxu0 0.0
    %2540 = vmatpush1.xpose.msra.mxu0 0.0
    %2541 = vmatprep.subr.mxu0 0.0
    %2542 = vmatpush1.xpose.msra.mxu0 0.0
    %2543 = vmatprep.subr.mxu0 0.0
    %2544 = vmatpush1.xpose.msra.mxu0 0.0
    %2545 = vmatprep.subr.mxu0 0.0
    %2546 = vmatpush1.xpose.msra.mxu0 0.0
    %2547 = vmatprep.subr.mxu0 0.0
    %2548 = vmatpush1.xpose.msra.mxu0 0.0
    %2549 = vmatprep.subr.mxu0 0.0
    %2550 = vmatpush1.xpose.msra.mxu0 0.0
    %2551 = vmatprep.subr.mxu0 0.0
    %2552 = vmatpush1.xpose.msra.mxu0 0.0
    %2553 = vmatprep.subr.mxu0 0.0
    %2554 = vmatpush1.xpose.msra.mxu0 0.0
    %2555 = vmatprep.subr.mxu0 0.0
    %2556 = vmatpush1.xpose.msra.mxu0 0.0
    %2557 = vmatprep.subr.mxu0 0.0
    %2558 = vmatpush1.xpose.msra.mxu0 0.0
    %2559 = vmatprep.subr.mxu0 0.0
    %2560 = vmatpush1.xpose.msra.mxu0 0.0
    %2561 = vmatprep.subr.mxu0 0.0
    %2562 = vmatpush1.xpose.msra.mxu0 0.0
    %2563 = vmatprep.subr.mxu0 0.0
    %2564 = vmatpush1.xpose.msra.mxu0 0.0
    %2565 = vmatprep.subr.mxu0 0.0
    %2566 = vmatpush1.xpose.msra.mxu0 0.0
    %2567 = vmatprep.subr.mxu0 0.0
    %2568 = vmatpush1.xpose.msra.mxu0 0.0
    %2569 = vmatprep.mubr.f32.mxu0 0.0
    %2570 = vmatmul.mubr.f32.gmra.mrb[0].mxu0 %v2501
    %v2571 = vpop.f32.mrb[0].mxu0
    %v2572 = vadd.f32 0.0, %v2571
    %v2573 = vpop.f32.mrb[0].mxu0
    %2574 = vdwg.mxu0
    %v2575 = vmul.f32 %v2494, 0.35355338
    %v2576 = vmul.f32 %v2572, 0.35355338
    %v2577 = vsel %vm281, %v2575, -inf
    %2578 = vmax.xlane.f32.xlu0 %v2577
    %v2579 = vpop.xlane.xlu0 %2578
    %v2580 = vsel %vm281, %v2576, -inf
    %2581 = vmax.xlane.f32.xlu0 %v2580
    %v2582 = vpop.xlane.xlu0 %2581
    %v2583 = vsub.f32 %v2575, %v2579
    %v2584 = vsub.f32 %v2576, %v2582
    %v2585 = vmul.f32 %v2583, 1.442695
    %v2586 = vpow.pop %v2585
    %v2587 = vmul.f32 %v2584, 1.442695
    %v2588 = vpow.pop %v2587
    %v2589 = vsel %vm281, %v2586, 0.0
    %2590 = vadd.xlane.f32.xlu0 %v2589
    %v2591 = vpop.xlane.xlu0 %2590
    %v2592 = vsel %vm281, %v2588, 0.0
    %2593 = vadd.xlane.f32.xlu0 %v2592
    %v2594 = vpop.xlane.xlu0 %2593
    %v2595 = vrcp.pop %v2591
    %v2596 = vrcp.pop %v2594
    %v2597 = vmul.f32 %v2586, %v2595
    %v2598 = vmul.f32 %v2588, %v2596
    %2599 = vrot.lane.b32.xlu0 %v2081, 56
    %v2600 = vpop.permute.xlu0 %2599
    %v2603 = vsel %vm281, %v2597, 0
    %2605 = vmatprep.subr.mxu0 0.0
    %2606 = vmatpush1.msra.mxu0 %v2600
    %2607 = vmatprep.subr.mxu0 0.0
    %2608 = vmatpush1.msra.mxu0 0.0
    %2609 = vmatprep.subr.mxu0 0.0
    %2610 = vmatpush1.msra.mxu0 0.0
    %2611 = vmatprep.subr.mxu0 0.0
    %2612 = vmatpush1.msra.mxu0 0.0
    %2613 = vmatprep.subr.mxu0 0.0
    %2614 = vmatpush1.msra.mxu0 0.0
    %2615 = vmatprep.subr.mxu0 0.0
    %2616 = vmatpush1.msra.mxu0 0.0
    %2617 = vmatprep.subr.mxu0 0.0
    %2618 = vmatpush1.msra.mxu0 0.0
    %2619 = vmatprep.subr.mxu0 0.0
    %2620 = vmatpush1.msra.mxu0 0.0
    %2621 = vmatprep.subr.mxu0 0.0
    %2622 = vmatpush1.msra.mxu0 0.0
    %2623 = vmatprep.subr.mxu0 0.0
    %2624 = vmatpush1.msra.mxu0 0.0
    %2625 = vmatprep.subr.mxu0 0.0
    %2626 = vmatpush1.msra.mxu0 0.0
    %2627 = vmatprep.subr.mxu0 0.0
    %2628 = vmatpush1.msra.mxu0 0.0
    %2629 = vmatprep.subr.mxu0 0.0
    %2630 = vmatpush1.msra.mxu0 0.0
    %2631 = vmatprep.subr.mxu0 0.0
    %2632 = vmatpush1.msra.mxu0 0.0
    %2633 = vmatprep.subr.mxu0 0.0
    %2634 = vmatpush1.msra.mxu0 0.0
    %2635 = vmatprep.subr.mxu0 0.0
    %2636 = vmatpush1.msra.mxu0 0.0
    %2637 = vmatprep.subr.mxu0 0.0
    %2638 = vmatpush1.msra.mxu0 0.0
    %2639 = vmatprep.subr.mxu0 0.0
    %2640 = vmatpush1.msra.mxu0 0.0
    %2641 = vmatprep.subr.mxu0 0.0
    %2642 = vmatpush1.msra.mxu0 0.0
    %2643 = vmatprep.subr.mxu0 0.0
    %2644 = vmatpush1.msra.mxu0 0.0
    %2645 = vmatprep.subr.mxu0 0.0
    %2646 = vmatpush1.msra.mxu0 0.0
    %2647 = vmatprep.subr.mxu0 0.0
    %2648 = vmatpush1.msra.mxu0 0.0
    %2649 = vmatprep.subr.mxu0 0.0
    %2650 = vmatpush1.msra.mxu0 0.0
    %2651 = vmatprep.subr.mxu0 0.0
    %2652 = vmatpush1.msra.mxu0 0.0
    %2653 = vmatprep.subr.mxu0 0.0
    %2654 = vmatpush1.msra.mxu0 0.0
    %2655 = vmatprep.subr.mxu0 0.0
    %2656 = vmatpush1.msra.mxu0 0.0
    %2657 = vmatprep.subr.mxu0 0.0
    %2658 = vmatpush1.msra.mxu0 0.0
    %2659 = vmatprep.subr.mxu0 0.0
    %2660 = vmatpush1.msra.mxu0 0.0
    %2661 = vmatprep.subr.mxu0 0.0
    %2662 = vmatpush1.msra.mxu0 0.0
    %2663 = vmatprep.subr.mxu0 0.0
    %2664 = vmatpush1.msra.mxu0 0.0
    %2665 = vmatprep.subr.mxu0 0.0
    %2666 = vmatpush1.msra.mxu0 0.0
    %2667 = vmatprep.subr.mxu0 0.0
    %2668 = vmatpush1.msra.mxu0 0.0
    %2669 = vmatprep.mubr.f32.mxu0 0.0
    %2670 = vmatmul.mubr.f32.gmra.mrb[0].mxu0 %v2603
    %v2671 = vpop.f32.mrb[0].mxu0
    %v2672 = vadd.f32 0.0, %v2671
    %v2673 = vpop.f32.mrb[0].mxu0
    %2674 = vdwg.mxu0
    %2675 = vrot.lane.b32.xlu0 %v2086, 56
    %v2676 = vpop.permute.xlu0 %2675
    %v2679 = vsel %vm281, %v2598, 0
    %2681 = vmatprep.subr.mxu0 0.0
    %2682 = vmatpush1.msra.mxu0 %v2676
    %2683 = vmatprep.subr.mxu0 0.0
    %2684 = vmatpush1.msra.mxu0 0.0
    %2685 = vmatprep.subr.mxu0 0.0
    %2686 = vmatpush1.msra.mxu0 0.0
    %2687 = vmatprep.subr.mxu0 0.0
    %2688 = vmatpush1.msra.mxu0 0.0
    %2689 = vmatprep.subr.mxu0 0.0
    %2690 = vmatpush1.msra.mxu0 0.0
    %2691 = vmatprep.subr.mxu0 0.0
    %2692 = vmatpush1.msra.mxu0 0.0
    %2693 = vmatprep.subr.mxu0 0.0
    %2694 = vmatpush1.msra.mxu0 0.0
    %2695 = vmatprep.subr.mxu0 0.0
    %2696 = vmatpush1.msra.mxu0 0.0
    %2697 = vmatprep.subr.mxu0 0.0
    %2698 = vmatpush1.msra.mxu0 0.0
    %2699 = vmatprep.subr.mxu0 0.0
    %2700 = vmatpush1.msra.mxu0 0.0
    %2701 = vmatprep.subr.mxu0 0.0
    %2702 = vmatpush1.msra.mxu0 0.0
    %2703 = vmatprep.subr.mxu0 0.0
    %2704 = vmatpush1.msra.mxu0 0.0
    %2705 = vmatprep.subr.mxu0 0.0
    %2706 = vmatpush1.msra.mxu0 0.0
    %2707 = vmatprep.subr.mxu0 0.0
    %2708 = vmatpush1.msra.mxu0 0.0
    %2709 = vmatprep.subr.mxu0 0.0
    %2710 = vmatpush1.msra.mxu0 0.0
    %2711 = vmatprep.subr.mxu0 0.0
    %2712 = vmatpush1.msra.mxu0 0.0
    %2713 = vmatprep.subr.mxu0 0.0
    %2714 = vmatpush1.msra.mxu0 0.0
    %2715 = vmatprep.subr.mxu0 0.0
    %2716 = vmatpush1.msra.mxu0 0.0
    %2717 = vmatprep.subr.mxu0 0.0
    %2718 = vmatpush1.msra.mxu0 0.0
    %2719 = vmatprep.subr.mxu0 0.0
    %2720 = vmatpush1.msra.mxu0 0.0
    %2721 = vmatprep.subr.mxu0 0.0
    %2722 = vmatpush1.msra.mxu0 0.0
    %2723 = vmatprep.subr.mxu0 0.0
    %2724 = vmatpush1.msra.mxu0 0.0
    %2725 = vmatprep.subr.mxu0 0.0
    %2726 = vmatpush1.msra.mxu0 0.0
    %2727 = vmatprep.subr.mxu0 0.0
    %2728 = vmatpush1.msra.mxu0 0.0
    %2729 = vmatprep.subr.mxu0 0.0
    %2730 = vmatpush1.msra.mxu0 0.0
    %2731 = vmatprep.subr.mxu0 0.0
    %2732 = vmatpush1.msra.mxu0 0.0
    %2733 = vmatprep.subr.mxu0 0.0
    %2734 = vmatpush1.msra.mxu0 0.0
    %2735 = vmatprep.subr.mxu0 0.0
    %2736 = vmatpush1.msra.mxu0 0.0
    %2737 = vmatprep.subr.mxu0 0.0
    %2738 = vmatpush1.msra.mxu0 0.0
    %2739 = vmatprep.subr.mxu0 0.0
    %2740 = vmatpush1.msra.mxu0 0.0
    %2741 = vmatprep.subr.mxu0 0.0
    %2742 = vmatpush1.msra.mxu0 0.0
    %2743 = vmatprep.subr.mxu0 0.0
    %2744 = vmatpush1.msra.mxu0 0.0
    %2745 = vmatprep.mubr.f32.mxu0 0.0
    %2746 = vmatmul.mubr.f32.gmra.mrb[0].mxu0 %v2679
    %v2747 = vpop.f32.mrb[0].mxu0
    %v2748 = vadd.f32 0.0, %v2747
    %v2749 = vpop.f32.mrb[0].mxu0
    %2750 = vdwg.mxu0
    %2751 = vrot.lane.b32.xlu0 %v2081, 112
    %v2752 = vpop.permute.xlu0 %2751
    %2753 = vrot.lane.b32.xlu0 %v2081, 80
    %v2754 = vpop.permute.xlu0 %2753
    %v2755 = vsel %vm281, %v2752, 0
    %v2757 = vsel %vm281, %v2754, 0
    %2759 = vmatprep.subr.mxu0 0.0
    %2760 = vmatpush1.xpose.msra.mxu0 %v2757
    %2761 = vmatprep.subr.mxu0 0.0
    %2762 = vmatpush1.xpose.msra.mxu0 0.0
    %2763 = vmatprep.subr.mxu0 0.0
    %2764 = vmatpush1.xpose.msra.mxu0 0.0
    %2765 = vmatprep.subr.mxu0 0.0
    %2766 = vmatpush1.xpose.msra.mxu0 0.0
    %2767 = vmatprep.subr.mxu0 0.0
    %2768 = vmatpush1.xpose.msra.mxu0 0.0
    %2769 = vmatprep.subr.mxu0 0.0
    %2770 = vmatpush1.xpose.msra.mxu0 0.0
    %2771 = vmatprep.subr.mxu0 0.0
    %2772 = vmatpush1.xpose.msra.mxu0 0.0
    %2773 = vmatprep.subr.mxu0 0.0
    %2774 = vmatpush1.xpose.msra.mxu0 0.0
    %2775 = vmatprep.subr.mxu0 0.0
    %2776 = vmatpush1.xpose.msra.mxu0 0.0
    %2777 = vmatprep.subr.mxu0 0.0
    %2778 = vmatpush1.xpose.msra.mxu0 0.0
    %2779 = vmatprep.subr.mxu0 0.0
    %2780 = vmatpush1.xpose.msra.mxu0 0.0
    %2781 = vmatprep.subr.mxu0 0.0
    %2782 = vmatpush1.xpose.msra.mxu0 0.0
    %2783 = vmatprep.subr.mxu0 0.0
    %2784 = vmatpush1.xpose.msra.mxu0 0.0
    %2785 = vmatprep.subr.mxu0 0.0
    %2786 = vmatpush1.xpose.msra.mxu0 0.0
    %2787 = vmatprep.subr.mxu0 0.0
    %2788 = vmatpush1.xpose.msra.mxu0 0.0
    %2789 = vmatprep.subr.mxu0 0.0
    %2790 = vmatpush1.xpose.msra.mxu0 0.0
    %2791 = vmatprep.subr.mxu0 0.0
    %2792 = vmatpush1.xpose.msra.mxu0 0.0
    %2793 = vmatprep.subr.mxu0 0.0
    %2794 = vmatpush1.xpose.msra.mxu0 0.0
    %2795 = vmatprep.subr.mxu0 0.0
    %2796 = vmatpush1.xpose.msra.mxu0 0.0
    %2797 = vmatprep.subr.mxu0 0.0
    %2798 = vmatpush1.xpose.msra.mxu0 0.0
    %2799 = vmatprep.subr.mxu0 0.0
    %2800 = vmatpush1.xpose.msra.mxu0 0.0
    %2801 = vmatprep.subr.mxu0 0.0
    %2802 = vmatpush1.xpose.msra.mxu0 0.0
    %2803 = vmatprep.subr.mxu0 0.0
    %2804 = vmatpush1.xpose.msra.mxu0 0.0
    %2805 = vmatprep.subr.mxu0 0.0
    %2806 = vmatpush1.xpose.msra.mxu0 0.0
    %2807 = vmatprep.subr.mxu0 0.0
    %2808 = vmatpush1.xpose.msra.mxu0 0.0
    %2809 = vmatprep.subr.mxu0 0.0
    %2810 = vmatpush1.xpose.msra.mxu0 0.0
    %2811 = vmatprep.subr.mxu0 0.0
    %2812 = vmatpush1.xpose.msra.mxu0 0.0
    %2813 = vmatprep.subr.mxu0 0.0
    %2814 = vmatpush1.xpose.msra.mxu0 0.0
    %2815 = vmatprep.subr.mxu0 0.0
    %2816 = vmatpush1.xpose.msra.mxu0 0.0
    %2817 = vmatprep.subr.mxu0 0.0
    %2818 = vmatpush1.xpose.msra.mxu0 0.0
    %2819 = vmatprep.subr.mxu0 0.0
    %2820 = vmatpush1.xpose.msra.mxu0 0.0
    %2821 = vmatprep.subr.mxu0 0.0
    %2822 = vmatpush1.xpose.msra.mxu0 0.0
    %2823 = vmatprep.mubr.f32.mxu0 0.0
    %2824 = vmatmul.mubr.f32.gmra.mrb[0].mxu0 %v2755
    %v2825 = vpop.f32.mrb[0].mxu0
    %v2826 = vadd.f32 0.0, %v2825
    %v2827 = vpop.f32.mrb[0].mxu0
    %2828 = vdwg.mxu0
    %2829 = vrot.lane.b32.xlu0 %v2086, 112
    %v2830 = vpop.permute.xlu0 %2829
    %2831 = vrot.lane.b32.xlu0 %v2086, 80
    %v2832 = vpop.permute.xlu0 %2831
    %v2833 = vsel %vm281, %v2830, 0
    %v2835 = vsel %vm281, %v2832, 0
    %2837 = vmatprep.subr.mxu0 0.0
    %2838 = vmatpush1.xpose.msra.mxu0 %v2835
    %2839 = vmatprep.subr.mxu0 0.0
    %2840 = vmatpush1.xpose.msra.mxu0 0.0
    %2841 = vmatprep.subr.mxu0 0.0
    %2842 = vmatpush1.xpose.msra.mxu0 0.0
    %2843 = vmatprep.subr.mxu0 0.0
    %2844 = vmatpush1.xpose.msra.mxu0 0.0
    %2845 = vmatprep.subr.mxu0 0.0
    %2846 = vmatpush1.xpose.msra.mxu0 0.0
    %2847 = vmatprep.subr.mxu0 0.0
    %2848 = vmatpush1.xpose.msra.mxu0 0.0
    %2849 = vmatprep.subr.mxu0 0.0
    %2850 = vmatpush1.xpose.msra.mxu0 0.0
    %2851 = vmatprep.subr.mxu0 0.0
    %2852 = vmatpush1.xpose.msra.mxu0 0.0
    %2853 = vmatprep.subr.mxu0 0.0
    %2854 = vmatpush1.xpose.msra.mxu0 0.0
    %2855 = vmatprep.subr.mxu0 0.0
    %2856 = vmatpush1.xpose.msra.mxu0 0.0
    %2857 = vmatprep.subr.mxu0 0.0
    %2858 = vmatpush1.xpose.msra.mxu0 0.0
    %2859 = vmatprep.subr.mxu0 0.0
    %2860 = vmatpush1.xpose.msra.mxu0 0.0
    %2861 = vmatprep.subr.mxu0 0.0
    %2862 = vmatpush1.xpose.msra.mxu0 0.0
    %2863 = vmatprep.subr.mxu0 0.0
    %2864 = vmatpush1.xpose.msra.mxu0 0.0
    %2865 = vmatprep.subr.mxu0 0.0
    %2866 = vmatpush1.xpose.msra.mxu0 0.0
    %2867 = vmatprep.subr.mxu0 0.0
    %2868 = vmatpush1.xpose.msra.mxu0 0.0
    %2869 = vmatprep.subr.mxu0 0.0
    %2870 = vmatpush1.xpose.msra.mxu0 0.0
    %2871 = vmatprep.subr.mxu0 0.0
    %2872 = vmatpush1.xpose.msra.mxu0 0.0
    %2873 = vmatprep.subr.mxu0 0.0
    %2874 = vmatpush1.xpose.msra.mxu0 0.0
    %2875 = vmatprep.subr.mxu0 0.0
    %2876 = vmatpush1.xpose.msra.mxu0 0.0
    %2877 = vmatprep.subr.mxu0 0.0
    %2878 = vmatpush1.xpose.msra.mxu0 0.0
    %2879 = vmatprep.subr.mxu0 0.0
    %2880 = vmatpush1.xpose.msra.mxu0 0.0
    %2881 = vmatprep.subr.mxu0 0.0
    %2882 = vmatpush1.xpose.msra.mxu0 0.0
    %2883 = vmatprep.subr.mxu0 0.0
    %2884 = vmatpush1.xpose.msra.mxu0 0.0
    %2885 = vmatprep.subr.mxu0 0.0
    %2886 = vmatpush1.xpose.msra.mxu0 0.0
    %2887 = vmatprep.subr.mxu0 0.0
    %2888 = vmatpush1.xpose.msra.mxu0 0.0
    %2889 = vmatprep.subr.mxu0 0.0
    %2890 = vmatpush1.xpose.msra.mxu0 0.0
    %2891 = vmatprep.subr.mxu0 0.0
    %2892 = vmatpush1.xpose.msra.mxu0 0.0
    %2893 = vmatprep.subr.mxu0 0.0
    %2894 = vmatpush1.xpose.msra.mxu0 0.0
    %2895 = vmatprep.subr.mxu0 0.0
    %2896 = vmatpush1.xpose.msra.mxu0 0.0
    %2897 = vmatprep.subr.mxu0 0.0
    %2898 = vmatpush1.xpose.msra.mxu0 0.0
    %2899 = vmatprep.subr.mxu0 0.0
    %2900 = vmatpush1.xpose.msra.mxu0 0.0
    %2901 = vmatprep.mubr.f32.mxu0 0.0
    %2902 = vmatmul.mubr.f32.gmra.mrb[0].mxu0 %v2833
    %v2903 = vpop.f32.mrb[0].mxu0
    %v2904 = vadd.f32 0.0, %v2903
    %v2905 = vpop.f32.mrb[0].mxu0
    %2906 = vdwg.mxu0
    %v2907 = vmul.f32 %v2826, 0.35355338
    %v2908 = vmul.f32 %v2904, 0.35355338
    %v2909 = vsel %vm281, %v2907, -inf
    %2910 = vmax.xlane.f32.xlu0 %v2909
    %v2911 = vpop.xlane.xlu0 %2910
    %v2912 = vsel %vm281, %v2908, -inf
    %2913 = vmax.xlane.f32.xlu0 %v2912
    %v2914 = vpop.xlane.xlu0 %2913
    %v2915 = vsub.f32 %v2907, %v2911
    %v2916 = vsub.f32 %v2908, %v2914
    %v2917 = vmul.f32 %v2915, 1.442695
    %v2918 = vpow.pop %v2917
    %v2919 = vmul.f32 %v2916, 1.442695
    %v2920 = vpow.pop %v2919
    %v2921 = vsel %vm281, %v2918, 0.0
    %2922 = vadd.xlane.f32.xlu0 %v2921
    %v2923 = vpop.xlane.xlu0 %2922
    %v2924 = vsel %vm281, %v2920, 0.0
    %2925 = vadd.xlane.f32.xlu0 %v2924
    %v2926 = vpop.xlane.xlu0 %2925
    %v2927 = vrcp.pop %v2923
    %v2928 = vrcp.pop %v2926
    %v2929 = vmul.f32 %v2918, %v2927
    %v2930 = vmul.f32 %v2920, %v2928
    %2931 = vrot.lane.b32.xlu0 %v2081, 48
    %v2932 = vpop.permute.xlu0 %2931
    %v2935 = vsel %vm281, %v2929, 0
    %2937 = vmatprep.subr.mxu0 0.0
    %2938 = vmatpush1.msra.mxu0 %v2932
    %2939 = vmatprep.subr.mxu0 0.0
    %2940 = vmatpush1.msra.mxu0 0.0
    %2941 = vmatprep.subr.mxu0 0.0
    %2942 = vmatpush1.msra.mxu0 0.0
    %2943 = vmatprep.subr.mxu0 0.0
    %2944 = vmatpush1.msra.mxu0 0.0
    %2945 = vmatprep.subr.mxu0 0.0
    %2946 = vmatpush1.msra.mxu0 0.0
    %2947 = vmatprep.subr.mxu0 0.0
    %2948 = vmatpush1.msra.mxu0 0.0
    %2949 = vmatprep.subr.mxu0 0.0
    %2950 = vmatpush1.msra.mxu0 0.0
    %2951 = vmatprep.subr.mxu0 0.0
    %2952 = vmatpush1.msra.mxu0 0.0
    %2953 = vmatprep.subr.mxu0 0.0
    %2954 = vmatpush1.msra.mxu0 0.0
    %2955 = vmatprep.subr.mxu0 0.0
    %2956 = vmatpush1.msra.mxu0 0.0
    %2957 = vmatprep.subr.mxu0 0.0
    %2958 = vmatpush1.msra.mxu0 0.0
    %2959 = vmatprep.subr.mxu0 0.0
    %2960 = vmatpush1.msra.mxu0 0.0
    %2961 = vmatprep.subr.mxu0 0.0
    %2962 = vmatpush1.msra.mxu0 0.0
    %2963 = vmatprep.subr.mxu0 0.0
    %2964 = vmatpush1.msra.mxu0 0.0
    %2965 = vmatprep.subr.mxu0 0.0
    %2966 = vmatpush1.msra.mxu0 0.0
    %2967 = vmatprep.subr.mxu0 0.0
    %2968 = vmatpush1.msra.mxu0 0.0
    %2969 = vmatprep.subr.mxu0 0.0
    %2970 = vmatpush1.msra.mxu0 0.0
    %2971 = vmatprep.subr.mxu0 0.0
    %2972 = vmatpush1.msra.mxu0 0.0
    %2973 = vmatprep.subr.mxu0 0.0
    %2974 = vmatpush1.msra.mxu0 0.0
    %2975 = vmatprep.subr.mxu0 0.0
    %2976 = vmatpush1.msra.mxu0 0.0
    %2977 = vmatprep.subr.mxu0 0.0
    %2978 = vmatpush1.msra.mxu0 0.0
    %2979 = vmatprep.subr.mxu0 0.0
    %2980 = vmatpush1.msra.mxu0 0.0
    %2981 = vmatprep.subr.mxu0 0.0
    %2982 = vmatpush1.msra.mxu0 0.0
    %2983 = vmatprep.subr.mxu0 0.0
    %2984 = vmatpush1.msra.mxu0 0.0
    %2985 = vmatprep.subr.mxu0 0.0
    %2986 = vmatpush1.msra.mxu0 0.0
    %2987 = vmatprep.subr.mxu0 0.0
    %2988 = vmatpush1.msra.mxu0 0.0
    %2989 = vmatprep.subr.mxu0 0.0
    %2990 = vmatpush1.msra.mxu0 0.0
    %2991 = vmatprep.subr.mxu0 0.0
    %2992 = vmatpush1.msra.mxu0 0.0
    %2993 = vmatprep.subr.mxu0 0.0
    %2994 = vmatpush1.msra.mxu0 0.0
    %2995 = vmatprep.subr.mxu0 0.0
    %2996 = vmatpush1.msra.mxu0 0.0
    %2997 = vmatprep.subr.mxu0 0.0
    %2998 = vmatpush1.msra.mxu0 0.0
    %2999 = vmatprep.subr.mxu0 0.0
    %3000 = vmatpush1.msra.mxu0 0.0
    %3001 = vmatprep.mubr.f32.mxu0 0.0
    %3002 = vmatmul.mubr.f32.gmra.mrb[0].mxu0 %v2935
    %v3003 = vpop.f32.mrb[0].mxu0
    %v3004 = vadd.f32 0.0, %v3003
    %v3005 = vpop.f32.mrb[0].mxu0
    %3006 = vdwg.mxu0
    %3007 = vrot.lane.b32.xlu0 %v2086, 48
    %v3008 = vpop.permute.xlu0 %3007
    %v3011 = vsel %vm281, %v2930, 0
    %3013 = vmatprep.subr.mxu0 0.0
    %3014 = vmatpush1.msra.mxu0 %v3008
    %3015 = vmatprep.subr.mxu0 0.0
    %3016 = vmatpush1.msra.mxu0 0.0
    %3017 = vmatprep.subr.mxu0 0.0
    %3018 = vmatpush1.msra.mxu0 0.0
    %3019 = vmatprep.subr.mxu0 0.0
    %3020 = vmatpush1.msra.mxu0 0.0
    %3021 = vmatprep.subr.mxu0 0.0
    %3022 = vmatpush1.msra.mxu0 0.0
    %3023 = vmatprep.subr.mxu0 0.0
    %3024 = vmatpush1.msra.mxu0 0.0
    %3025 = vmatprep.subr.mxu0 0.0
    %3026 = vmatpush1.msra.mxu0 0.0
    %3027 = vmatprep.subr.mxu0 0.0
    %3028 = vmatpush1.msra.mxu0 0.0
    %3029 = vmatprep.subr.mxu0 0.0
    %3030 = vmatpush1.msra.mxu0 0.0
    %3031 = vmatprep.subr.mxu0 0.0
    %3032 = vmatpush1.msra.mxu0 0.0
    %3033 = vmatprep.subr.mxu0 0.0
    %3034 = vmatpush1.msra.mxu0 0.0
    %3035 = vmatprep.subr.mxu0 0.0
    %3036 = vmatpush1.msra.mxu0 0.0
    %3037 = vmatprep.subr.mxu0 0.0
    %3038 = vmatpush1.msra.mxu0 0.0
    %3039 = vmatprep.subr.mxu0 0.0
    %3040 = vmatpush1.msra.mxu0 0.0
    %3041 = vmatprep.subr.mxu0 0.0
    %3042 = vmatpush1.msra.mxu0 0.0
    %3043 = vmatprep.subr.mxu0 0.0
    %3044 = vmatpush1.msra.mxu0 0.0
    %3045 = vmatprep.subr.mxu0 0.0
    %3046 = vmatpush1.msra.mxu0 0.0
    %3047 = vmatprep.subr.mxu0 0.0
    %3048 = vmatpush1.msra.mxu0 0.0
    %3049 = vmatprep.subr.mxu0 0.0
    %3050 = vmatpush1.msra.mxu0 0.0
    %3051 = vmatprep.subr.mxu0 0.0
    %3052 = vmatpush1.msra.mxu0 0.0
    %3053 = vmatprep.subr.mxu0 0.0
    %3054 = vmatpush1.msra.mxu0 0.0
    %3055 = vmatprep.subr.mxu0 0.0
    %3056 = vmatpush1.msra.mxu0 0.0
    %3057 = vmatprep.subr.mxu0 0.0
    %3058 = vmatpush1.msra.mxu0 0.0
    %3059 = vmatprep.subr.mxu0 0.0
    %3060 = vmatpush1.msra.mxu0 0.0
    %3061 = vmatprep.subr.mxu0 0.0
    %3062 = vmatpush1.msra.mxu0 0.0
    %3063 = vmatprep.subr.mxu0 0.0
    %3064 = vmatpush1.msra.mxu0 0.0
    %3065 = vmatprep.subr.mxu0 0.0
    %3066 = vmatpush1.msra.mxu0 0.0
    %3067 = vmatprep.subr.mxu0 0.0
    %3068 = vmatpush1.msra.mxu0 0.0
    %3069 = vmatprep.subr.mxu0 0.0
    %3070 = vmatpush1.msra.mxu0 0.0
    %3071 = vmatprep.subr.mxu0 0.0
    %3072 = vmatpush1.msra.mxu0 0.0
    %3073 = vmatprep.subr.mxu0 0.0
    %3074 = vmatpush1.msra.mxu0 0.0
    %3075 = vmatprep.subr.mxu0 0.0
    %3076 = vmatpush1.msra.mxu0 0.0
    %3077 = vmatprep.mubr.f32.mxu0 0.0
    %3078 = vmatmul.mubr.f32.gmra.mrb[0].mxu0 %v3011
    %v3079 = vpop.f32.mrb[0].mxu0
    %v3080 = vadd.f32 0.0, %v3079
    %v3081 = vpop.f32.mrb[0].mxu0
    %3082 = vdwg.mxu0
    %3083 = vrot.lane.b32.xlu0 %v2081, 104
    %v3084 = vpop.permute.xlu0 %3083
    %3085 = vrot.lane.b32.xlu0 %v2081, 72
    %v3086 = vpop.permute.xlu0 %3085
    %v3087 = vsel %vm281, %v3084, 0
    %v3089 = vsel %vm281, %v3086, 0
    %3091 = vmatprep.subr.mxu0 0.0
    %3092 = vmatpush1.xpose.msra.mxu0 %v3089
    %3093 = vmatprep.subr.mxu0 0.0
    %3094 = vmatpush1.xpose.msra.mxu0 0.0
    %3095 = vmatprep.subr.mxu0 0.0
    %3096 = vmatpush1.xpose.msra.mxu0 0.0
    %3097 = vmatprep.subr.mxu0 0.0
    %3098 = vmatpush1.xpose.msra.mxu0 0.0
    %3099 = vmatprep.subr.mxu0 0.0
    %3100 = vmatpush1.xpose.msra.mxu0 0.0
    %3101 = vmatprep.subr.mxu0 0.0
    %3102 = vmatpush1.xpose.msra.mxu0 0.0
    %3103 = vmatprep.subr.mxu0 0.0
    %3104 = vmatpush1.xpose.msra.mxu0 0.0
    %3105 = vmatprep.subr.mxu0 0.0
    %3106 = vmatpush1.xpose.msra.mxu0 0.0
    %3107 = vmatprep.subr.mxu0 0.0
    %3108 = vmatpush1.xpose.msra.mxu0 0.0
    %3109 = vmatprep.subr.mxu0 0.0
    %3110 = vmatpush1.xpose.msra.mxu0 0.0
    %3111 = vmatprep.subr.mxu0 0.0
    %3112 = vmatpush1.xpose.msra.mxu0 0.0
    %3113 = vmatprep.subr.mxu0 0.0
    %3114 = vmatpush1.xpose.msra.mxu0 0.0
    %3115 = vmatprep.subr.mxu0 0.0
    %3116 = vmatpush1.xpose.msra.mxu0 0.0
    %3117 = vmatprep.subr.mxu0 0.0
    %3118 = vmatpush1.xpose.msra.mxu0 0.0
    %3119 = vmatprep.subr.mxu0 0.0
    %3120 = vmatpush1.xpose.msra.mxu0 0.0
    %3121 = vmatprep.subr.mxu0 0.0
    %3122 = vmatpush1.xpose.msra.mxu0 0.0
    %3123 = vmatprep.subr.mxu0 0.0
    %3124 = vmatpush1.xpose.msra.mxu0 0.0
    %3125 = vmatprep.subr.mxu0 0.0
    %3126 = vmatpush1.xpose.msra.mxu0 0.0
    %3127 = vmatprep.subr.mxu0 0.0
    %3128 = vmatpush1.xpose.msra.mxu0 0.0
    %3129 = vmatprep.subr.mxu0 0.0
    %3130 = vmatpush1.xpose.msra.mxu0 0.0
    %3131 = vmatprep.subr.mxu0 0.0
    %3132 = vmatpush1.xpose.msra.mxu0 0.0
    %3133 = vmatprep.subr.mxu0 0.0
    %3134 = vmatpush1.xpose.msra.mxu0 0.0
    %3135 = vmatprep.subr.mxu0 0.0
    %3136 = vmatpush1.xpose.msra.mxu0 0.0
    %3137 = vmatprep.subr.mxu0 0.0
    %3138 = vmatpush1.xpose.msra.mxu0 0.0
    %3139 = vmatprep.subr.mxu0 0.0
    %3140 = vmatpush1.xpose.msra.mxu0 0.0
    %3141 = vmatprep.subr.mxu0 0.0
    %3142 = vmatpush1.xpose.msra.mxu0 0.0
    %3143 = vmatprep.subr.mxu0 0.0
    %3144 = vmatpush1.xpose.msra.mxu0 0.0
    %3145 = vmatprep.subr.mxu0 0.0
    %3146 = vmatpush1.xpose.msra.mxu0 0.0
    %3147 = vmatprep.subr.mxu0 0.0
    %3148 = vmatpush1.xpose.msra.mxu0 0.0
    %3149 = vmatprep.subr.mxu0 0.0
    %3150 = vmatpush1.xpose.msra.mxu0 0.0
    %3151 = vmatprep.subr.mxu0 0.0
    %3152 = vmatpush1.xpose.msra.mxu0 0.0
    %3153 = vmatprep.subr.mxu0 0.0
    %3154 = vmatpush1.xpose.msra.mxu0 0.0
    %3155 = vmatprep.mubr.f32.mxu0 0.0
    %3156 = vmatmul.mubr.f32.gmra.mrb[0].mxu0 %v3087
    %v3157 = vpop.f32.mrb[0].mxu0
    %v3158 = vadd.f32 0.0, %v3157
    %v3159 = vpop.f32.mrb[0].mxu0
    %3160 = vdwg.mxu0
    %3161 = vrot.lane.b32.xlu0 %v2086, 104
    %v3162 = vpop.permute.xlu0 %3161
    %3163 = vrot.lane.b32.xlu0 %v2086, 72
    %v3164 = vpop.permute.xlu0 %3163
    %v3165 = vsel %vm281, %v3162, 0
    %v3167 = vsel %vm281, %v3164, 0
    %3169 = vmatprep.subr.mxu0 0.0
    %3170 = vmatpush1.xpose.msra.mxu0 %v3167
    %3171 = vmatprep.subr.mxu0 0.0
    %3172 = vmatpush1.xpose.msra.mxu0 0.0
    %3173 = vmatprep.subr.mxu0 0.0
    %3174 = vmatpush1.xpose.msra.mxu0 0.0
    %3175 = vmatprep.subr.mxu0 0.0
    %3176 = vmatpush1.xpose.msra.mxu0 0.0
    %3177 = vmatprep.subr.mxu0 0.0
    %3178 = vmatpush1.xpose.msra.mxu0 0.0
    %3179 = vmatprep.subr.mxu0 0.0
    %3180 = vmatpush1.xpose.msra.mxu0 0.0
    %3181 = vmatprep.subr.mxu0 0.0
    %3182 = vmatpush1.xpose.msra.mxu0 0.0
    %3183 = vmatprep.subr.mxu0 0.0
    %3184 = vmatpush1.xpose.msra.mxu0 0.0
    %3185 = vmatprep.subr.mxu0 0.0
    %3186 = vmatpush1.xpose.msra.mxu0 0.0
    %3187 = vmatprep.subr.mxu0 0.0
    %3188 = vmatpush1.xpose.msra.mxu0 0.0
    %3189 = vmatprep.subr.mxu0 0.0
    %3190 = vmatpush1.xpose.msra.mxu0 0.0
    %3191 = vmatprep.subr.mxu0 0.0
    %3192 = vmatpush1.xpose.msra.mxu0 0.0
    %3193 = vmatprep.subr.mxu0 0.0
    %3194 = vmatpush1.xpose.msra.mxu0 0.0
    %3195 = vmatprep.subr.mxu0 0.0
    %3196 = vmatpush1.xpose.msra.mxu0 0.0
    %3197 = vmatprep.subr.mxu0 0.0
    %3198 = vmatpush1.xpose.msra.mxu0 0.0
    %3199 = vmatprep.subr.mxu0 0.0
    %3200 = vmatpush1.xpose.msra.mxu0 0.0
    %3201 = vmatprep.subr.mxu0 0.0
    %3202 = vmatpush1.xpose.msra.mxu0 0.0
    %3203 = vmatprep.subr.mxu0 0.0
    %3204 = vmatpush1.xpose.msra.mxu0 0.0
    %3205 = vmatprep.subr.mxu0 0.0
    %3206 = vmatpush1.xpose.msra.mxu0 0.0
    %3207 = vmatprep.subr.mxu0 0.0
    %3208 = vmatpush1.xpose.msra.mxu0 0.0
    %3209 = vmatprep.subr.mxu0 0.0
    %3210 = vmatpush1.xpose.msra.mxu0 0.0
    %3211 = vmatprep.subr.mxu0 0.0
    %3212 = vmatpush1.xpose.msra.mxu0 0.0
    %3213 = vmatprep.subr.mxu0 0.0
    %3214 = vmatpush1.xpose.msra.mxu0 0.0
    %3215 = vmatprep.subr.mxu0 0.0
    %3216 = vmatpush1.xpose.msra.mxu0 0.0
    %3217 = vmatprep.subr.mxu0 0.0
    %3218 = vmatpush1.xpose.msra.mxu0 0.0
    %3219 = vmatprep.subr.mxu0 0.0
    %3220 = vmatpush1.xpose.msra.mxu0 0.0
    %3221 = vmatprep.subr.mxu0 0.0
    %3222 = vmatpush1.xpose.msra.mxu0 0.0
    %3223 = vmatprep.subr.mxu0 0.0
    %3224 = vmatpush1.xpose.msra.mxu0 0.0
    %3225 = vmatprep.subr.mxu0 0.0
    %3226 = vmatpush1.xpose.msra.mxu0 0.0
    %3227 = vmatprep.subr.mxu0 0.0
    %3228 = vmatpush1.xpose.msra.mxu0 0.0
    %3229 = vmatprep.subr.mxu0 0.0
    %3230 = vmatpush1.xpose.msra.mxu0 0.0
    %3231 = vmatprep.subr.mxu0 0.0
    %3232 = vmatpush1.xpose.msra.mxu0 0.0
    %3233 = vmatprep.mubr.f32.mxu0 0.0
    %3234 = vmatmul.mubr.f32.gmra.mrb[0].mxu0 %v3165
    %v3235 = vpop.f32.mrb[0].mxu0
    %v3236 = vadd.f32 0.0, %v3235
    %v3237 = vpop.f32.mrb[0].mxu0
    %3238 = vdwg.mxu0
    %v3239 = vmul.f32 %v3158, 0.35355338
    %v3240 = vmul.f32 %v3236, 0.35355338
    %v3241 = vsel %vm281, %v3239, -inf
    %3242 = vmax.xlane.f32.xlu0 %v3241
    %v3243 = vpop.xlane.xlu0 %3242
    %v3244 = vsel %vm281, %v3240, -inf
    %3245 = vmax.xlane.f32.xlu0 %v3244
    %v3246 = vpop.xlane.xlu0 %3245
    %v3247 = vsub.f32 %v3239, %v3243
    %v3248 = vsub.f32 %v3240, %v3246
    %v3249 = vmul.f32 %v3247, 1.442695
    %v3250 = vpow.pop %v3249
    %v3251 = vmul.f32 %v3248, 1.442695
    %v3252 = vpow.pop %v3251
    %v3253 = vsel %vm281, %v3250, 0.0
    %3254 = vadd.xlane.f32.xlu0 %v3253
    %v3255 = vpop.xlane.xlu0 %3254
    %v3256 = vsel %vm281, %v3252, 0.0
    %3257 = vadd.xlane.f32.xlu0 %v3256
    %v3258 = vpop.xlane.xlu0 %3257
    %v3259 = vrcp.pop %v3255
    %v3260 = vrcp.pop %v3258
    %v3261 = vmul.f32 %v3250, %v3259
    %v3262 = vmul.f32 %v3252, %v3260
    %3263 = vrot.lane.b32.xlu0 %v2081, 40
    %v3264 = vpop.permute.xlu0 %3263
    %v3267 = vsel %vm281, %v3261, 0
    %3269 = vmatprep.subr.mxu0 0.0
    %3270 = vmatpush1.msra.mxu0 %v3264
    %3271 = vmatprep.subr.mxu0 0.0
    %3272 = vmatpush1.msra.mxu0 0.0
    %3273 = vmatprep.subr.mxu0 0.0
    %3274 = vmatpush1.msra.mxu0 0.0
    %3275 = vmatprep.subr.mxu0 0.0
    %3276 = vmatpush1.msra.mxu0 0.0
    %3277 = vmatprep.subr.mxu0 0.0
    %3278 = vmatpush1.msra.mxu0 0.0
    %3279 = vmatprep.subr.mxu0 0.0
    %3280 = vmatpush1.msra.mxu0 0.0
    %3281 = vmatprep.subr.mxu0 0.0
    %3282 = vmatpush1.msra.mxu0 0.0
    %3283 = vmatprep.subr.mxu0 0.0
    %3284 = vmatpush1.msra.mxu0 0.0
    %3285 = vmatprep.subr.mxu0 0.0
    %3286 = vmatpush1.msra.mxu0 0.0
    %3287 = vmatprep.subr.mxu0 0.0
    %3288 = vmatpush1.msra.mxu0 0.0
    %3289 = vmatprep.subr.mxu0 0.0
    %3290 = vmatpush1.msra.mxu0 0.0
    %3291 = vmatprep.subr.mxu0 0.0
    %3292 = vmatpush1.msra.mxu0 0.0
    %3293 = vmatprep.subr.mxu0 0.0
    %3294 = vmatpush1.msra.mxu0 0.0
    %3295 = vmatprep.subr.mxu0 0.0
    %3296 = vmatpush1.msra.mxu0 0.0
    %3297 = vmatprep.subr.mxu0 0.0
    %3298 = vmatpush1.msra.mxu0 0.0
    %3299 = vmatprep.subr.mxu0 0.0
    %3300 = vmatpush1.msra.mxu0 0.0
    %3301 = vmatprep.subr.mxu0 0.0
    %3302 = vmatpush1.msra.mxu0 0.0
    %3303 = vmatprep.subr.mxu0 0.0
    %3304 = vmatpush1.msra.mxu0 0.0
    %3305 = vmatprep.subr.mxu0 0.0
    %3306 = vmatpush1.msra.mxu0 0.0
    %3307 = vmatprep.subr.mxu0 0.0
    %3308 = vmatpush1.msra.mxu0 0.0
    %3309 = vmatprep.subr.mxu0 0.0
    %3310 = vmatpush1.msra.mxu0 0.0
    %3311 = vmatprep.subr.mxu0 0.0
    %3312 = vmatpush1.msra.mxu0 0.0
    %3313 = vmatprep.subr.mxu0 0.0
    %3314 = vmatpush1.msra.mxu0 0.0
    %3315 = vmatprep.subr.mxu0 0.0
    %3316 = vmatpush1.msra.mxu0 0.0
    %3317 = vmatprep.subr.mxu0 0.0
    %3318 = vmatpush1.msra.mxu0 0.0
    %3319 = vmatprep.subr.mxu0 0.0
    %3320 = vmatpush1.msra.mxu0 0.0
    %3321 = vmatprep.subr.mxu0 0.0
    %3322 = vmatpush1.msra.mxu0 0.0
    %3323 = vmatprep.subr.mxu0 0.0
    %3324 = vmatpush1.msra.mxu0 0.0
    %3325 = vmatprep.subr.mxu0 0.0
    %3326 = vmatpush1.msra.mxu0 0.0
    %3327 = vmatprep.subr.mxu0 0.0
    %3328 = vmatpush1.msra.mxu0 0.0
    %3329 = vmatprep.subr.mxu0 0.0
    %3330 = vmatpush1.msra.mxu0 0.0
    %3331 = vmatprep.subr.mxu0 0.0
    %3332 = vmatpush1.msra.mxu0 0.0
    %3333 = vmatprep.mubr.f32.mxu0 0.0
    %3334 = vmatmul.mubr.f32.gmra.mrb[0].mxu0 %v3267
    %v3335 = vpop.f32.mrb[0].mxu0
    %v3336 = vadd.f32 0.0, %v3335
    %v3337 = vpop.f32.mrb[0].mxu0
    %3338 = vdwg.mxu0
    %3339 = vrot.lane.b32.xlu0 %v2086, 40
    %v3340 = vpop.permute.xlu0 %3339
    %v3343 = vsel %vm281, %v3262, 0
    %3345 = vmatprep.subr.mxu0 0.0
    %3346 = vmatpush1.msra.mxu0 %v3340
    %3347 = vmatprep.subr.mxu0 0.0
    %3348 = vmatpush1.msra.mxu0 0.0
    %3349 = vmatprep.subr.mxu0 0.0
    %3350 = vmatpush1.msra.mxu0 0.0
    %3351 = vmatprep.subr.mxu0 0.0
    %3352 = vmatpush1.msra.mxu0 0.0
    %3353 = vmatprep.subr.mxu0 0.0
    %3354 = vmatpush1.msra.mxu0 0.0
    %3355 = vmatprep.subr.mxu0 0.0
    %3356 = vmatpush1.msra.mxu0 0.0
    %3357 = vmatprep.subr.mxu0 0.0
    %3358 = vmatpush1.msra.mxu0 0.0
    %3359 = vmatprep.subr.mxu0 0.0
    %3360 = vmatpush1.msra.mxu0 0.0
    %3361 = vmatprep.subr.mxu0 0.0
    %3362 = vmatpush1.msra.mxu0 0.0
    %3363 = vmatprep.subr.mxu0 0.0
    %3364 = vmatpush1.msra.mxu0 0.0
    %3365 = vmatprep.subr.mxu0 0.0
    %3366 = vmatpush1.msra.mxu0 0.0
    %3367 = vmatprep.subr.mxu0 0.0
    %3368 = vmatpush1.msra.mxu0 0.0
    %3369 = vmatprep.subr.mxu0 0.0
    %3370 = vmatpush1.msra.mxu0 0.0
    %3371 = vmatprep.subr.mxu0 0.0
    %3372 = vmatpush1.msra.mxu0 0.0
    %3373 = vmatprep.subr.mxu0 0.0
    %3374 = vmatpush1.msra.mxu0 0.0
    %3375 = vmatprep.subr.mxu0 0.0
    %3376 = vmatpush1.msra.mxu0 0.0
    %3377 = vmatprep.subr.mxu0 0.0
    %3378 = vmatpush1.msra.mxu0 0.0
    %3379 = vmatprep.subr.mxu0 0.0
    %3380 = vmatpush1.msra.mxu0 0.0
    %3381 = vmatprep.subr.mxu0 0.0
    %3382 = vmatpush1.msra.mxu0 0.0
    %3383 = vmatprep.subr.mxu0 0.0
    %3384 = vmatpush1.msra.mxu0 0.0
    %3385 = vmatprep.subr.mxu0 0.0
    %3386 = vmatpush1.msra.mxu0 0.0
    %3387 = vmatprep.subr.mxu0 0.0
    %3388 = vmatpush1.msra.mxu0 0.0
    %3389 = vmatprep.subr.mxu0 0.0
    %3390 = vmatpush1.msra.mxu0 0.0
    %3391 = vmatprep.subr.mxu0 0.0
    %3392 = vmatpush1.msra.mxu0 0.0
    %3393 = vmatprep.subr.mxu0 0.0
    %3394 = vmatpush1.msra.mxu0 0.0
    %3395 = vmatprep.subr.mxu0 0.0
    %3396 = vmatpush1.msra.mxu0 0.0
    %3397 = vmatprep.subr.mxu0 0.0
    %3398 = vmatpush1.msra.mxu0 0.0
    %3399 = vmatprep.subr.mxu0 0.0
    %3400 = vmatpush1.msra.mxu0 0.0
    %3401 = vmatprep.subr.mxu0 0.0
    %3402 = vmatpush1.msra.mxu0 0.0
    %3403 = vmatprep.subr.mxu0 0.0
    %3404 = vmatpush1.msra.mxu0 0.0
    %3405 = vmatprep.subr.mxu0 0.0
    %3406 = vmatpush1.msra.mxu0 0.0
    %3407 = vmatprep.subr.mxu0 0.0
    %3408 = vmatpush1.msra.mxu0 0.0
    %3409 = vmatprep.mubr.f32.mxu0 0.0
    %3410 = vmatmul.mubr.f32.gmra.mrb[0].mxu0 %v3343
    %v3411 = vpop.f32.mrb[0].mxu0
    %v3412 = vadd.f32 0.0, %v3411
    %v3413 = vpop.f32.mrb[0].mxu0
    %3414 = vdwg.mxu0
    %3417 = vrot.lane.b32.xlu0 %v2672, 8
    %v3418 = vpop.permute.xlu0 %3417
    %3419 = vrot.lane.b32.xlu0 %v2748, 8
    %v3420 = vpop.permute.xlu0 %3419
    %3425 = vrot.lane.b32.xlu0 %v3004, 16
    %v3426 = vpop.permute.xlu0 %3425
    %3427 = vrot.lane.b32.xlu0 %v3080, 16
    %v3428 = vpop.permute.xlu0 %3427
    %3433 = vrot.lane.b32.xlu0 %v3336, 24
    %v3434 = vpop.permute.xlu0 %3433
    %3435 = vrot.lane.b32.xlu0 %v3412, 24
    %v3436 = vpop.permute.xlu0 %3435
    %v3439 = vsel %vm281, %v2340, %v3418
    %v3440 = vsel %vm281, %v2416, %v3420
    %v3441 = vsel %vm1631, %v3439, %v3426
    %v3442 = vsel %vm1631, %v3440, %v3428
    %v3443 = vsel %vm1634, %v3441, %v3434
    %v3444 = vsel %vm1634, %v3442, %v3436
    %v3445 = vlaneseq
    %v3446 = vshrl.u32 %v3445, 7
    %v3447 = vsub.s32 0, %v3446
    %v3448 = vrot.slane %v1985, %v3447
    %v3450 = vsel %vm196, %v3443, 0
    %v3453 = vsel %vm196, %v3444, 0
    %3455 = vmatprep.subr.mxu0 0.0
    %3456 = vmatpush1.msra.mxu0 %v1981
    %3457 = vmatprep.subr.mxu0 0.0
    %3458 = vmatpush1.msra.mxu0 %v1982
    %3459 = vmatprep.subr.mxu0 0.0
    %3460 = vmatpush1.msra.mxu0 %v1983
    %3461 = vmatprep.subr.mxu0 0.0
    %3462 = vmatpush1.msra.mxu0 %v1984
    %3463 = vmatprep.subr.mxu0 0.0
    %3464 = vmatpush1.msra.mxu0 0.0
    %3465 = vmatprep.subr.mxu0 0.0
    %3466 = vmatpush1.msra.mxu0 0.0
    %3467 = vmatprep.subr.mxu0 0.0
    %3468 = vmatpush1.msra.mxu0 0.0
    %3469 = vmatprep.subr.mxu0 0.0
    %3470 = vmatpush1.msra.mxu0 0.0
    %3471 = vmatprep.subr.mxu0 0.0
    %3472 = vmatpush1.msra.mxu0 0.0
    %3473 = vmatprep.subr.mxu0 0.0
    %3474 = vmatpush1.msra.mxu0 0.0
    %3475 = vmatprep.subr.mxu0 0.0
    %3476 = vmatpush1.msra.mxu0 0.0
    %3477 = vmatprep.subr.mxu0 0.0
    %3478 = vmatpush1.msra.mxu0 0.0
    %3479 = vmatprep.subr.mxu0 0.0
    %3480 = vmatpush1.msra.mxu0 0.0
    %3481 = vmatprep.subr.mxu0 0.0
    %3482 = vmatpush1.msra.mxu0 0.0
    %3483 = vmatprep.subr.mxu0 0.0
    %3484 = vmatpush1.msra.mxu0 0.0
    %3485 = vmatprep.subr.mxu0 0.0
    %3486 = vmatpush1.msra.mxu0 0.0
    %3487 = vmatprep.subr.mxu0 0.0
    %3488 = vmatpush1.msra.mxu0 0.0
    %3489 = vmatprep.subr.mxu0 0.0
    %3490 = vmatpush1.msra.mxu0 0.0
    %3491 = vmatprep.subr.mxu0 0.0
    %3492 = vmatpush1.msra.mxu0 0.0
    %3493 = vmatprep.subr.mxu0 0.0
    %3494 = vmatpush1.msra.mxu0 0.0
    %3495 = vmatprep.subr.mxu0 0.0
    %3496 = vmatpush1.msra.mxu0 0.0
    %3497 = vmatprep.subr.mxu0 0.0
    %3498 = vmatpush1.msra.mxu0 0.0
    %3499 = vmatprep.subr.mxu0 0.0
    %3500 = vmatpush1.msra.mxu0 0.0
    %3501 = vmatprep.subr.mxu0 0.0
    %3502 = vmatpush1.msra.mxu0 0.0
    %3503 = vmatprep.subr.mxu0 0.0
    %3504 = vmatpush1.msra.mxu0 0.0
    %3505 = vmatprep.subr.mxu0 0.0
    %3506 = vmatpush1.msra.mxu0 0.0
    %3507 = vmatprep.subr.mxu0 0.0
    %3508 = vmatpush1.msra.mxu0 0.0
    %3509 = vmatprep.subr.mxu0 0.0
    %3510 = vmatpush1.msra.mxu0 0.0
    %3511 = vmatprep.subr.mxu0 0.0
    %3512 = vmatpush1.msra.mxu0 0.0
    %3513 = vmatprep.subr.mxu0 0.0
    %3514 = vmatpush1.msra.mxu0 0.0
    %3515 = vmatprep.subr.mxu0 0.0
    %3516 = vmatpush1.msra.mxu0 0.0
    %3517 = vmatprep.subr.mxu0 0.0
    %3518 = vmatpush1.msra.mxu0 0.0
    %3519 = vmatprep.mubr.f32.mxu0 0.0
    %3520 = vmatmul.mubr.f32.gmra.mrb[0].mxu0 %v3450
    %v3521 = vpop.f32.mrb[0].mxu0
    %v3522 = vadd.f32 %v3448, %v3521
    %v3523 = vpop.f32.mrb[0].mxu0
    %3524 = vmatprep.mubr.f32.mxu0 0.0
    %3525 = vmatmul.mubr.f32.gmra.mrb[0].mxu0 %v3453
    %v3526 = vpop.f32.mrb[0].mxu0
    %v3527 = vadd.f32 %v3448, %v3526
    %v3528 = vpop.f32.mrb[0].mxu0
    %3529 = vdwg.mxu0
    %v3530 = vadd.f32 %v1974, %v3522
    %v3531 = vadd.f32 %v1975, %v3527
    %v3532 = vsel %vm196, %v3530, 0.0
    %3533 = vadd.xlane.f32.xlu0 %v3532
    %v3534 = vpop.xlane.xlu0 %3533
    %v3535 = vsel %vm196, %v3531, 0.0
    %3536 = vadd.xlane.f32.xlu0 %v3535
    %v3537 = vpop.xlane.xlu0 %3536
    %v3538 = vmul.f32 %v3534, %v1730
    %v3539 = vmul.f32 %v3537, %v1730
    %v3540 = vsub.f32 %v3530, %v3538
    %v3541 = vsub.f32 %v3531, %v3539
    %v3542 = vmul.f32 %v3540, %v3540
    %v3543 = vmul.f32 %v3541, %v3541
    %v3544 = vsel %vm196, %v3542, 0.0
    %3545 = vadd.xlane.f32.xlu0 %v3544
    %v3546 = vpop.xlane.xlu0 %3545
    %v3547 = vsel %vm196, %v3543, 0.0
    %3548 = vadd.xlane.f32.xlu0 %v3547
    %v3549 = vpop.xlane.xlu0 %3548
    %v3550 = vmul.f32 %v3546, %v1730
    %v3551 = vmul.f32 %v3549, %v1730
    %v3552 = vadd.f32 %v3550, 1e-05
    %v3553 = vadd.f32 %v3551, 1e-05
    %v3554 = vrsqrt.pop %v3552
    %v3555 = vrsqrt.pop %v3553
    %v3556 = vmul.f32 %v3540, %v3554
    %v3557 = vmul.f32 %v3541, %v3555
    %v3558 = vlaneseq
    %v3559 = vshrl.u32 %v3558, 7
    %v3560 = vsub.s32 0, %v3559
    %v3561 = vrot.slane %v2000, %v3560
    %v3562 = vmul.f32 %v3556, %v3561
    %v3563 = vmul.f32 %v3557, %v3561
    %v3564 = vlaneseq
    %v3565 = vshrl.u32 %v3564, 7
    %v3566 = vsub.s32 0, %v3565
    %v3567 = vrot.slane %v2001, %v3566
    %v3568 = vadd.f32 %v3562, %v3567
    %v3569 = vadd.f32 %v3563, %v3567
    %v3570 = vlaneseq
    %v3571 = vshrl.u32 %v3570, 7
    %v3572 = vsub.s32 0, %v3571
    %v3573 = vrot.slane %v1990, %v3572
    %v3575 = vsel %vm196, %v3568, 0
    %v3578 = vsel %vm196, %v3569, 0
    %3580 = vmatprep.subr.mxu0 0.0
    %3581 = vmatpush1.msra.mxu0 %v1986
    %3582 = vmatprep.subr.mxu0 0.0
    %3583 = vmatpush1.msra.mxu0 %v1987
    %3584 = vmatprep.subr.mxu0 0.0
    %3585 = vmatpush1.msra.mxu0 %v1988
    %3586 = vmatprep.subr.mxu0 0.0
    %3587 = vmatpush1.msra.mxu0 %v1989
    %3588 = vmatprep.subr.mxu0 0.0
    %3589 = vmatpush1.msra.mxu0 0.0
    %3590 = vmatprep.subr.mxu0 0.0
    %3591 = vmatpush1.msra.mxu0 0.0
    %3592 = vmatprep.subr.mxu0 0.0
    %3593 = vmatpush1.msra.mxu0 0.0
    %3594 = vmatprep.subr.mxu0 0.0
    %3595 = vmatpush1.msra.mxu0 0.0
    %3596 = vmatprep.subr.mxu0 0.0
    %3597 = vmatpush1.msra.mxu0 0.0
    %3598 = vmatprep.subr.mxu0 0.0
    %3599 = vmatpush1.msra.mxu0 0.0
    %3600 = vmatprep.subr.mxu0 0.0
    %3601 = vmatpush1.msra.mxu0 0.0
    %3602 = vmatprep.subr.mxu0 0.0
    %3603 = vmatpush1.msra.mxu0 0.0
    %3604 = vmatprep.subr.mxu0 0.0
    %3605 = vmatpush1.msra.mxu0 0.0
    %3606 = vmatprep.subr.mxu0 0.0
    %3607 = vmatpush1.msra.mxu0 0.0
    %3608 = vmatprep.subr.mxu0 0.0
    %3609 = vmatpush1.msra.mxu0 0.0
    %3610 = vmatprep.subr.mxu0 0.0
    %3611 = vmatpush1.msra.mxu0 0.0
    %3612 = vmatprep.subr.mxu0 0.0
    %3613 = vmatpush1.msra.mxu0 0.0
    %3614 = vmatprep.subr.mxu0 0.0
    %3615 = vmatpush1.msra.mxu0 0.0
    %3616 = vmatprep.subr.mxu0 0.0
    %3617 = vmatpush1.msra.mxu0 0.0
    %3618 = vmatprep.subr.mxu0 0.0
    %3619 = vmatpush1.msra.mxu0 0.0
    %3620 = vmatprep.subr.mxu0 0.0
    %3621 = vmatpush1.msra.mxu0 0.0
    %3622 = vmatprep.subr.mxu0 0.0
    %3623 = vmatpush1.msra.mxu0 0.0
    %3624 = vmatprep.subr.mxu0 0.0
    %3625 = vmatpush1.msra.mxu0 0.0
    %3626 = vmatprep.subr.mxu0 0.0
    %3627 = vmatpush1.msra.mxu0 0.0
    %3628 = vmatprep.subr.mxu0 0.0
    %3629 = vmatpush1.msra.mxu0 0.0
    %3630 = vmatprep.subr.mxu0 0.0
    %3631 = vmatpush1.msra.mxu0 0.0
    %3632 = vmatprep.subr.mxu0 0.0
    %3633 = vmatpush1.msra.mxu0 0.0
    %3634 = vmatprep.subr.mxu0 0.0
    %3635 = vmatpush1.msra.mxu0 0.0
    %3636 = vmatprep.subr.mxu0 0.0
    %3637 = vmatpush1.msra.mxu0 0.0
    %3638 = vmatprep.subr.mxu0 0.0
    %3639 = vmatpush1.msra.mxu0 0.0
    %3640 = vmatprep.subr.mxu0 0.0
    %3641 = vmatpush1.msra.mxu0 0.0
    %3642 = vmatprep.subr.mxu0 0.0
    %3643 = vmatpush1.msra.mxu0 0.0
    %3644 = vmatprep.mubr.f32.mxu0 0.0
    %3645 = vmatmul.mubr.f32.gmra.mrb[0].mxu0 %v3575
    %v3646 = vpop.f32.mrb[0].mxu0
    %v3647 = vadd.f32 %v3573, %v3646
    %v3648 = vpop.f32.mrb[0].mxu0
    %3649 = vmatprep.mubr.f32.mxu0 0.0
    %3650 = vmatmul.mubr.f32.gmra.mrb[0].mxu0 %v3578
    %v3651 = vpop.f32.mrb[0].mxu0
    %v3652 = vadd.f32 %v3573, %v3651
    %v3653 = vpop.f32.mrb[0].mxu0
    %3654 = vdwg.mxu0
    %v3655 = vmax.f32 %v3647, 0.0
    %v3656 = vmax.f32 %v3652, 0.0
    %v3657 = vlaneseq
    %v3658 = vshrl.u32 %v3657, 7
    %v3659 = vsub.s32 0, %v3658
    %v3660 = vrot.slane %v1999, %v3659
    %v3662 = vsel %vm1854, %v3655, 0
    %v3665 = vsel %vm1854, %v3656, 0
    %3667 = vmatprep.subr.mxu0 0.0
    %3668 = vmatpush1.msra.mxu0 %v1991
    %3669 = vmatprep.subr.mxu0 0.0
    %3670 = vmatpush1.msra.mxu0 %v1992
    %3671 = vmatprep.subr.mxu0 0.0
    %3672 = vmatpush1.msra.mxu0 %v1993
    %3673 = vmatprep.subr.mxu0 0.0
    %3674 = vmatpush1.msra.mxu0 %v1994
    %3675 = vmatprep.subr.mxu0 0.0
    %3676 = vmatpush1.msra.mxu0 %v1995
    %3677 = vmatprep.subr.mxu0 0.0
    %3678 = vmatpush1.msra.mxu0 %v1996
    %3679 = vmatprep.subr.mxu0 0.0
    %3680 = vmatpush1.msra.mxu0 %v1997
    %3681 = vmatprep.subr.mxu0 0.0
    %3682 = vmatpush1.msra.mxu0 %v1998
    %3683 = vmatprep.subr.mxu0 0.0
    %3684 = vmatpush1.msra.mxu0 0.0
    %3685 = vmatprep.subr.mxu0 0.0
    %3686 = vmatpush1.msra.mxu0 0.0
    %3687 = vmatprep.subr.mxu0 0.0
    %3688 = vmatpush1.msra.mxu0 0.0
    %3689 = vmatprep.subr.mxu0 0.0
    %3690 = vmatpush1.msra.mxu0 0.0
    %3691 = vmatprep.subr.mxu0 0.0
    %3692 = vmatpush1.msra.mxu0 0.0
    %3693 = vmatprep.subr.mxu0 0.0
    %3694 = vmatpush1.msra.mxu0 0.0
    %3695 = vmatprep.subr.mxu0 0.0
    %3696 = vmatpush1.msra.mxu0 0.0
    %3697 = vmatprep.subr.mxu0 0.0
    %3698 = vmatpush1.msra.mxu0 0.0
    %3699 = vmatprep.subr.mxu0 0.0
    %3700 = vmatpush1.msra.mxu0 0.0
    %3701 = vmatprep.subr.mxu0 0.0
    %3702 = vmatpush1.msra.mxu0 0.0
    %3703 = vmatprep.subr.mxu0 0.0
    %3704 = vmatpush1.msra.mxu0 0.0
    %3705 = vmatprep.subr.mxu0 0.0
    %3706 = vmatpush1.msra.mxu0 0.0
    %3707 = vmatprep.subr.mxu0 0.0
    %3708 = vmatpush1.msra.mxu0 0.0
    %3709 = vmatprep.subr.mxu0 0.0
    %3710 = vmatpush1.msra.mxu0 0.0
    %3711 = vmatprep.subr.mxu0 0.0
    %3712 = vmatpush1.msra.mxu0 0.0
    %3713 = vmatprep.subr.mxu0 0.0
    %3714 = vmatpush1.msra.mxu0 0.0
    %3715 = vmatprep.subr.mxu0 0.0
    %3716 = vmatpush1.msra.mxu0 0.0
    %3717 = vmatprep.subr.mxu0 0.0
    %3718 = vmatpush1.msra.mxu0 0.0
    %3719 = vmatprep.subr.mxu0 0.0
    %3720 = vmatpush1.msra.mxu0 0.0
    %3721 = vmatprep.subr.mxu0 0.0
    %3722 = vmatpush1.msra.mxu0 0.0
    %3723 = vmatprep.subr.mxu0 0.0
    %3724 = vmatpush1.msra.mxu0 0.0
    %3725 = vmatprep.subr.mxu0 0.0
    %3726 = vmatpush1.msra.mxu0 0.0
    %3727 = vmatprep.subr.mxu0 0.0
    %3728 = vmatpush1.msra.mxu0 0.0
    %3729 = vmatprep.subr.mxu0 0.0
    %3730 = vmatpush1.msra.mxu0 0.0
    %3731 = vmatprep.mubr.f32.mxu0 0.0
    %3732 = vmatmul.mubr.f32.gmra.mrb[0].mxu0 %v3662
    %v3733 = vpop.f32.mrb[0].mxu0
    %v3734 = vadd.f32 %v3660, %v3733
    %v3735 = vpop.f32.mrb[0].mxu0
    %3736 = vmatprep.mubr.f32.mxu0 0.0
    %3737 = vmatmul.mubr.f32.gmra.mrb[0].mxu0 %v3665
    %v3738 = vpop.f32.mrb[0].mxu0
    %v3739 = vadd.f32 %v3660, %v3738
    %v3740 = vpop.f32.mrb[0].mxu0
    %3741 = vdwg.mxu0
    %v3742 = vadd.f32 %v3568, %v3734
    %v3743 = vadd.f32 %v3569, %v3739
    %v3744 = vsel %vm196, %v3742, 0.0
    %3745 = vadd.xlane.f32.xlu0 %v3744
    %v3746 = vpop.xlane.xlu0 %3745
    %v3747 = vsel %vm196, %v3743, 0.0
    %3748 = vadd.xlane.f32.xlu0 %v3747
    %v3749 = vpop.xlane.xlu0 %3748
    %v3750 = vmul.f32 %v3746, %v1730
    %v3751 = vmul.f32 %v3749, %v1730
    %v3752 = vsub.f32 %v3742, %v3750
    %v3753 = vsub.f32 %v3743, %v3751
    %v3754 = vmul.f32 %v3752, %v3752
    %v3755 = vmul.f32 %v3753, %v3753
    %v3756 = vsel %vm196, %v3754, 0.0
    %3757 = vadd.xlane.f32.xlu0 %v3756
    %v3758 = vpop.xlane.xlu0 %3757
    %v3759 = vsel %vm196, %v3755, 0.0
    %3760 = vadd.xlane.f32.xlu0 %v3759
    %v3761 = vpop.xlane.xlu0 %3760
    %v3762 = vmul.f32 %v3758, %v1730
    %v3763 = vmul.f32 %v3761, %v1730
    %v3764 = vadd.f32 %v3762, 1e-05
    %v3765 = vadd.f32 %v3763, 1e-05
    %v3766 = vrsqrt.pop %v3764
    %v3767 = vrsqrt.pop %v3765
    %v3768 = vmul.f32 %v3752, %v3766
    %v3769 = vmul.f32 %v3753, %v3767
    %v3770 = vlaneseq
    %v3771 = vshrl.u32 %v3770, 7
    %v3772 = vsub.s32 0, %v3771
    %v3773 = vrot.slane %v2002, %v3772
    %v3774 = vmul.f32 %v3768, %v3773
    %v3775 = vmul.f32 %v3769, %v3773
    %v3776 = vlaneseq
    %v3777 = vshrl.u32 %v3776, 7
    %v3778 = vsub.s32 0, %v3777
    %v3779 = vrot.slane %v2003, %v3778
    %v3780 = vadd.f32 %v3774, %v3779
    %v3781 = vadd.f32 %v3775, %v3779
    %v3782 = vld [vmem:[#allocation2 + $0x1e0] sm:$0xff]
    %v3783 = vld [vmem:[#allocation2 + $0x1e8] sm:$0xff]
    %v3784 = vld [vmem:[#allocation2 + $0x1f0] sm:$0xff]
    %v3785 = vld [vmem:[#allocation2 + $0x1f8] sm:$0xff]
    %v3786 = vld [vmem:[#allocation2 + $0x200] sm:$0x1]
    %v3787 = vlaneseq
    %v3788 = vshrl.u32 %v3787, 7
    %v3789 = vsub.s32 0, %v3788
    %v3790 = vrot.slane %v3786, %v3789
    %v3792 = vsel %vm196, %v3780, 0
    %v3795 = vsel %vm196, %v3781, 0
    %3797 = vmatprep.subr.mxu0 0.0
    %3798 = vmatpush1.msra.mxu0 %v3782
    %3799 = vmatprep.subr.mxu0 0.0
    %3800 = vmatpush1.msra.mxu0 %v3783
    %3801 = vmatprep.subr.mxu0 0.0
    %3802 = vmatpush1.msra.mxu0 %v3784
    %3803 = vmatprep.subr.mxu0 0.0
    %3804 = vmatpush1.msra.mxu0 %v3785
    %3805 = vmatprep.subr.mxu0 0.0
    %3806 = vmatpush1.msra.mxu0 0.0
    %3807 = vmatprep.subr.mxu0 0.0
    %3808 = vmatpush1.msra.mxu0 0.0
    %3809 = vmatprep.subr.mxu0 0.0
    %3810 = vmatpush1.msra.mxu0 0.0
    %3811 = vmatprep.subr.mxu0 0.0
    %3812 = vmatpush1.msra.mxu0 0.0
    %3813 = vmatprep.subr.mxu0 0.0
    %3814 = vmatpush1.msra.mxu0 0.0
    %3815 = vmatprep.subr.mxu0 0.0
    %3816 = vmatpush1.msra.mxu0 0.0
    %3817 = vmatprep.subr.mxu0 0.0
    %3818 = vmatpush1.msra.mxu0 0.0
    %3819 = vmatprep.subr.mxu0 0.0
    %3820 = vmatpush1.msra.mxu0 0.0
    %3821 = vmatprep.subr.mxu0 0.0
    %3822 = vmatpush1.msra.mxu0 0.0
    %3823 = vmatprep.subr.mxu0 0.0
    %3824 = vmatpush1.msra.mxu0 0.0
    %3825 = vmatprep.subr.mxu0 0.0
    %3826 = vmatpush1.msra.mxu0 0.0
    %3827 = vmatprep.subr.mxu0 0.0
    %3828 = vmatpush1.msra.mxu0 0.0
    %3829 = vmatprep.subr.mxu0 0.0
    %3830 = vmatpush1.msra.mxu0 0.0
    %3831 = vmatprep.subr.mxu0 0.0
    %3832 = vmatpush1.msra.mxu0 0.0
    %3833 = vmatprep.subr.mxu0 0.0
    %3834 = vmatpush1.msra.mxu0 0.0
    %3835 = vmatprep.subr.mxu0 0.0
    %3836 = vmatpush1.msra.mxu0 0.0
    %3837 = vmatprep.subr.mxu0 0.0
    %3838 = vmatpush1.msra.mxu0 0.0
    %3839 = vmatprep.subr.mxu0 0.0
    %3840 = vmatpush1.msra.mxu0 0.0
    %3841 = vmatprep.subr.mxu0 0.0
    %3842 = vmatpush1.msra.mxu0 0.0
    %3843 = vmatprep.subr.mxu0 0.0
    %3844 = vmatpush1.msra.mxu0 0.0
    %3845 = vmatprep.subr.mxu0 0.0
    %3846 = vmatpush1.msra.mxu0 0.0
    %3847 = vmatprep.subr.mxu0 0.0
    %3848 = vmatpush1.msra.mxu0 0.0
    %3849 = vmatprep.subr.mxu0 0.0
    %3850 = vmatpush1.msra.mxu0 0.0
    %3851 = vmatprep.subr.mxu0 0.0
    %3852 = vmatpush1.msra.mxu0 0.0
    %3853 = vmatprep.subr.mxu0 0.0
    %3854 = vmatpush1.msra.mxu0 0.0
    %3855 = vmatprep.subr.mxu0 0.0
    %3856 = vmatpush1.msra.mxu0 0.0
    %3857 = vmatprep.subr.mxu0 0.0
    %3858 = vmatpush1.msra.mxu0 0.0
    %3859 = vmatprep.subr.mxu0 0.0
    %3860 = vmatpush1.msra.mxu0 0.0
    %3861 = vmatprep.mubr.f32.mxu0 0.0
    %3862 = vmatmul.mubr.f32.gmra.mrb[0].mxu0 %v3792
    %v3863 = vpop.f32.mrb[0].mxu0
    %v3864 = vadd.f32 %v3790, %v3863
    %v3865 = vpop.f32.mrb[0].mxu0
    %3866 = vmatprep.mubr.f32.mxu0 0.0
    %3867 = vmatmul.mubr.f32.gmra.mrb[0].mxu0 %v3795
    %v3868 = vpop.f32.mrb[0].mxu0
    %v3869 = vadd.f32 %v3790, %v3868
    %v3870 = vpop.f32.mrb[0].mxu0
    %3871 = vdwg.mxu0
    %3872 = vst [vmem:[%s2] sm:$0xff] %v3864
    %3873 = vst [vmem:[%s2 + $0x8] sm:$0xff] %v3869
    // Predicated region
    $region14: #{forward.1} parent=1 // pred_check
      _
    $region15: #{forward.1} parent=1 // pred_check_branch
      %3875 = sbr.rel (0) target = $region17
    $region16: #{forward.1} parent=1 // pred_region
      _
    $region17: #{forward.1} parent=1 // pred_fallthru
      _
    // Predicated region
    $region18: #{forward.1} parent=1 // pred_check
      _
    $region19: #{forward.1} parent=1 // pred_check_branch
      %3877 = sbr.rel (0) target = $region21
    $region20: #{forward.1} parent=1 // pred_region
      _
    $region21: #{forward.1} parent=1 // pred_fallthru
      _
    %3878 = vsyncpa [#allocation3], 1

</llo_original>
